<compile_context>
chip_gen: v6e
topology: v6e:2x2x1
jax: 0.10.0
libtpu: 0.0.40
codegen_flags: <defaults>
</compile_context>

<pallas_src>
import functools

import jax
import jax.numpy as jnp
from jax.experimental import pallas as pl
from jax.experimental.pallas import tpu as pltpu

LEAK = 0.2


def _round_up(x, m):
    return ((x + m - 1) // m) * m


def _leaky(x):
    return jnp.where(x >= 0, x, x * LEAK)


# ----------------------------------------------------------------------------
# Generic conv-block kernel: bf16 patches @ bf16 (BN-folded) weights -> f32 acc
# -> + per-channel bias -> bf16 store (lane-dense, Cout padded to 128)
# ----------------------------------------------------------------------------
def _conv_matmul_kernel(p_ref, w_ref, b_ref, o_ref):
    acc = jnp.dot(p_ref[...], w_ref[...], preferred_element_type=jnp.float32)
    o_ref[...] = (acc + b_ref[...]).astype(o_ref.dtype)


def fused_patch_matmul_bias(P, Wm, bias):
    """P: (M, K) patch matrix; Wm: (K, Cout) scale-folded weights. Returns (M, Cout) bf16."""
    M, K = P.shape
    Cout = Wm.shape[1]

    Cp = _round_up(Cout, 128)                      # lane-dense output / full MXU width
    # Two grid steps where possible (v7x megacore), 16-row multiples (bf16 packing).
    TM = max(16, min(1024, _round_up(pl.cdiv(M, 2), 16)))
    Mp = _round_up(M, TM)

    P = P.astype(jnp.bfloat16)                     # no-op when the chain is already bf16
    if Mp != M:
        P = jnp.pad(P, ((0, Mp - M), (0, 0)))
    Wp = jnp.pad(Wm.astype(jnp.bfloat16), ((0, 0), (0, Cp - Cout)))
    bp = jnp.pad(bias.reshape(1, Cout).astype(jnp.float32), ((0, 0), (0, Cp - Cout)))

    out = pl.pallas_call(
        _conv_matmul_kernel,
        out_shape=jax.ShapeDtypeStruct((Mp, Cp), jnp.bfloat16),
        grid_spec=pltpu.PrefetchScalarGridSpec(
            num_scalar_prefetch=0,
            grid=(Mp // TM,),
            in_specs=[
                pl.BlockSpec((TM, K), lambda i: (i, 0)),   # patch tiles (pipelined)
                pl.BlockSpec((K, Cp), lambda i: (0, 0)),   # weights (resident)
                pl.BlockSpec((1, Cp), lambda i: (0, 0)),   # bias (resident)
            ],
            out_specs=pl.BlockSpec((TM, Cp), lambda i: (i, 0)),
        ),
        compiler_params=pltpu.CompilerParams(
            dimension_semantics=("parallel",),
            vmem_limit_bytes=8 * 1024 * 1024,      # real footprint ~1.5 MiB; leave headroom
        ),
    )(P, Wp, bp)
    return out[:M, :Cout]


def _extract_patches(x_nhwc, k, s, pad):
    """Strided im2col glue (XLA-fused). Returns (N, Hout, Wout, k*k, Cin)."""
    N, H, W, Cin = x_nhwc.shape
    Hout = (H + 2 * pad - k) // s + 1
    Wout = (W + 2 * pad - k) // s + 1
    xp = jnp.pad(x_nhwc, ((0, 0), (pad, pad), (pad, pad), (0, 0)))
    taps = []
    for ky in range(k):
        for kx in range(k):
            taps.append(xp[:, ky:ky + s * (Hout - 1) + 1:s,
                           kx:kx + s * (Wout - 1) + 1:s, :])
    return jnp.stack(taps, axis=3), Hout, Wout


def conv_block(x_nhwc, wm, bias, k, stride, pad, apply_leaky):
    """[LeakyReLU] -> Conv2d -> [BN folded].  x_nhwc: (N,H,W,Cin); wm: (k*k*Cin, Cout)."""
    N, H, W, Cin = x_nhwc.shape
    Cout = wm.shape[1]
    if apply_leaky:
        # Once per element on the compact input (not on the im2col-expanded matrix).
        x_nhwc = _leaky(x_nhwc)
    P5, Hout, Wout = _extract_patches(x_nhwc, k, stride, pad)
    P = P5.reshape(N * Hout * Wout, k * k * Cin)
    out_flat = fused_patch_matmul_bias(P, wm, bias)
    return out_flat.reshape(N, Hout, Wout, Cout)


# ----------------------------------------------------------------------------
# Fused tail kernel: conv4 -> conv5 -> conv6 -> conv7 in one pallas_call.
# Input P4 is the im2col matrix of leaky(e3) with rows ordered (h, w, n) so each
# conv5 weight tap reads a contiguous row group.  conv6/conv7 act on 1x1 spatial
# maps, so only the centre 3x3 tap contributes (w6c / w7c).
# ----------------------------------------------------------------------------
def _tail_kernel(p4_ref, w4_ref, b4_ref, w5_ref, b5_ref, w6_ref, b6_ref,
                 w7_ref, b7_ref, o4_ref, o5_ref, o6_ref, o7_ref):
    n = o5_ref.shape[0]                      # batch size
    c5in = w5_ref.shape[0] // 4              # = conv4 output channels
    c5out = w5_ref.shape[1]

    # conv4 (BN folded):  (4N, K4) @ (K4, C4) + b4
    a4 = jnp.dot(p4_ref[...], w4_ref[...],
                 preferred_element_type=jnp.float32) + b4_ref[...]
    o4_ref[...] = a4
    x4 = jnp.where(a4 >= 0, a4, a4 * LEAK)

    # conv5: 2x2 -> 1x1; taps (h+1, w+1) for input position (h, w); rows of x4
    # for tap j = h*2 + w are the contiguous block [n*j, n*(j+1)).
    acc = jnp.zeros((n, c5out), jnp.float32)
    for j in range(4):
        acc = acc + jnp.dot(x4[n * j:n * (j + 1), :],
                            w5_ref[c5in * j:c5in * (j + 1), :],
                            preferred_element_type=jnp.float32)
    a5 = acc + b5_ref[...]
    o5_ref[...] = a5
    x5 = jnp.where(a5 >= 0, a5, a5 * LEAK)

    # conv6: 1x1 -> 1x1; only the centre tap of the 3x3 kernel sees data.
    a6 = jnp.dot(x5, w6_ref[...], preferred_element_type=jnp.float32) + b6_ref[...]
    o6_ref[...] = a6
    x6 = jnp.where(a6 >= 0, a6, a6 * LEAK)

    # conv7: same structure as conv6.
    a7 = jnp.dot(x6, w7_ref[...], preferred_element_type=jnp.float32) + b7_ref[...]
    o7_ref[...] = a7


def fused_tail(e3_nhwc, wm4, b4, w5sub, b5, w6c, b6, w7c, b7):
    """Runs conv4..conv7 (pre-act LeakyReLU + conv + folded BN each) in one kernel."""
    N, H3, W3, C3 = e3_nhwc.shape
    x = _leaky(e3_nhwc)                                    # conv4's pre-activation
    P5d, Hout, Wout = _extract_patches(x, 3, 2, 1)         # (N, 2, 2, 9, C3)
    K4 = 9 * C3
    # Rows ordered (h, w, n): each conv5 tap's inputs form a contiguous block.
    P4 = jnp.transpose(P5d.reshape(N, Hout, Wout, K4), (1, 2, 0, 3))
    P4 = P4.reshape(Hout * Wout * N, K4).astype(jnp.float32)
    cout = wm4.shape[1]

    f32 = jnp.float32
    o4, o5, o6, o7 = pl.pallas_call(
        _tail_kernel,
        out_shape=(
            jax.ShapeDtypeStruct((Hout * Wout * N, cout), f32),
            jax.ShapeDtypeStruct((N, cout), f32),
            jax.ShapeDtypeStruct((N, cout), f32),
            jax.ShapeDtypeStruct((N, cout), f32),
        ),
        compiler_params=pltpu.CompilerParams(vmem_limit_bytes=8 * 1024 * 1024),
    )(P4,
      wm4.astype(f32), b4.reshape(1, cout).astype(f32),
      w5sub.astype(f32), b5.reshape(1, cout).astype(f32),
      w6c.astype(f32), b6.reshape(1, cout).astype(f32),
      w7c.astype(f32), b7.reshape(1, cout).astype(f32))

    e4 = jnp.transpose(o4.reshape(Hout, Wout, N, cout), (2, 0, 1, 3))  # (N,2,2,C)
    e5 = o5.reshape(N, 1, 1, cout)
    e6 = o6.reshape(N, 1, 1, cout)
    e7 = o7.reshape(N, 1, 1, cout)
    return e4, e5, e6, e7


# ----------------------------------------------------------------------------
# SimpleEncoder parameters and forward
# ----------------------------------------------------------------------------
def make_layer_cfg(input_dim, conv_dim):
    cd = conv_dim
    # (cin, cout, k, stride, pad, bn, lrelu)
    return [
        (input_dim, cd,     5, 2, 2, False, False),  # conv1 (no lrelu, no BN)
        (cd,        cd * 2, 5, 4, 2, True,  True),   # conv2
        (cd * 2,    cd * 4, 3, 2, 1, True,  True),   # conv3
        (cd * 4,    cd * 8, 3, 2, 1, True,  True),   # conv4
        (cd * 8,    cd * 8, 3, 2, 1, True,  True),   # conv5
        (cd * 8,    cd * 8, 3, 2, 1, True,  True),   # conv6
        (cd * 8,    cd * 8, 3, 2, 1, True,  True),   # conv7
    ]


def init_params(key, layer_cfg):
    params = []
    eps = 1e-5
    for (cin, cout, k, _s, _p, bn, _lr) in layer_cfg:
        key, kw, kb, kg, kbt, km = jax.random.split(key, 6)
        w = 0.05 * jax.random.normal(kw, (cout, cin, k, k), jnp.float32)  # PyTorch OIHW
        b_conv = 0.01 * jax.random.normal(kb, (cout,), jnp.float32)
        if bn:
            gamma = 1.0 + 0.1 * jax.random.normal(kg, (cout,), jnp.float32)
            beta = 0.1 * jax.random.normal(kbt, (cout,), jnp.float32)
            run_mean = 0.05 * jax.random.normal(km, (cout,), jnp.float32)
            run_var = jnp.ones((cout,), jnp.float32)
            scale = gamma / jnp.sqrt(run_var + eps)
            bias = beta + scale * (b_conv - run_mean)
        else:
            scale = jnp.ones((cout,), jnp.float32)
            bias = b_conv
        # OIHW -> (ky, kx, cin, cout) -> (K, Cout), BN scale folded into the columns.
        wm = jnp.transpose(w, (2, 3, 1, 0)).reshape(k * k * cin, cout) * scale[None, :]
        params.append({"wm": wm, "bias": bias, "scale": scale, "w_torch": w})
    return params


def simple_encoder_forward(params, layer_cfg, x_nchw):
    names = ["e1", "e2", "e3", "e4", "e5", "e6", "e7"]
    enc = {}
    # NCHW -> NHWC once at the boundary; the whole internal chain stays bf16 NHWC.
    x = jnp.transpose(x_nchw, (0, 2, 3, 1)).astype(jnp.bfloat16)

    # conv1..conv3: one Pallas call each.
    for i in range(3):
        _cin, _cout, k, s, p, _bn, lrelu = layer_cfg[i]
        x = conv_block(x, params[i]["wm"], params[i]["bias"], k, s, p, lrelu)
        enc[names[i]] = x

    e3 = x
    tail_ok = (
        e3.shape[1] == 4 and e3.shape[2] == 4
        and all(layer_cfg[i][2:5] == (3, 2, 1) and layer_cfg[i][6] for i in range(3, 7))
    )
    if tail_ok:
        # conv4..conv7: single fused Pallas call with all weights resident.
        wm5 = params[4]["wm"].reshape(3, 3, layer_cfg[4][0], layer_cfg[4][1])
        w5sub = jnp.concatenate([wm5[1, 1], wm5[1, 2], wm5[2, 1], wm5[2, 2]], axis=0)
        w6c = params[5]["wm"].reshape(3, 3, layer_cfg[5][0], layer_cfg[5][1])[1, 1]
        w7c = params[6]["wm"].reshape(3, 3, layer_cfg[6][0], layer_cfg[6][1])[1, 1]
        e4, e5, e6, e7 = fused_tail(
            e3, params[3]["wm"], params[3]["bias"], w5sub, params[4]["bias"],
            w6c, params[5]["bias"], w7c, params[6]["bias"])
        enc["e4"], enc["e5"], enc["e6"], enc["e7"] = e4, e5, e6, e7
    else:
        # TODO(synk): non-default tail shapes fall back to per-layer Pallas calls.
        for i in range(3, 7):
            _cin, _cout, k, s, p, _bn, lrelu = layer_cfg[i]
            x = conv_block(x, params[i]["wm"], params[i]["bias"], k, s, p, lrelu)
            enc[names[i]] = x

    to_nchw = lambda a: jnp.transpose(a, (0, 3, 1, 2)).astype(jnp.float32)
    encode_dicts = {n: to_nchw(v) for n, v in enc.items()}
    encoded_source = encode_dicts["e7"]
    return encoded_source, encode_dicts


# ----------------------------------------------------------------------------
# Main
# ----------------------------------------------------------------------------
if __name__ == "__main__":
    INPUT_DIM, CONV_DIM = 1, 8
    N, H, W = 2, 64, 64
    layer_cfg = make_layer_cfg(INPUT_DIM, CONV_DIM)

    key = jax.random.PRNGKey(0)
    key, kp, kx = jax.random.split(key, 3)
    params = init_params(kp, layer_cfg)
    x = jax.random.normal(kx, (N, INPUT_DIM, H, W), jnp.float32)

    fwd = jax.jit(functools.partial(simple_encoder_forward, params, layer_cfg))
    encoded_source, encode_dicts = fwd(x)
    encoded_source = jax.block_until_ready(encoded_source)

    expected = {
        "e1": (N, CONV_DIM, 32, 32),
        "e2": (N, CONV_DIM * 2, 8, 8),
        "e3": (N, CONV_DIM * 4, 4, 4),
        "e4": (N, CONV_DIM * 8, 2, 2),
        "e5": (N, CONV_DIM * 8, 1, 1),
        "e6": (N, CONV_DIM * 8, 1, 1),
        "e7": (N, CONV_DIM * 8, 1, 1),
    }
    assert encoded_source.shape == expected["e7"], encoded_source.shape
    for n, shp in expected.items():
        assert encode_dicts[n].shape == shp, (n, encode_dicts[n].shape)
        assert bool(jnp.all(jnp.isfinite(encode_dicts[n]))), n

    # Pure-JAX f32 reference (pre-act LeakyReLU -> conv -> folded BN per layer).
    # bf16 operands/outputs in the Pallas path -> relative tolerances.
    def ref_forward(xin):
        feats = {}
        h = xin
        for i, (_ci, _co, k, s, p, _bn, lrelu) in enumerate(layer_cfg):
            if lrelu:
                h = jnp.where(h >= 0, h, LEAK * h)
            h = jax.lax.conv_general_dilated(
                h, params[i]["w_torch"], window_strides=(s, s),
                padding=((p, p), (p, p)), dimension_numbers=("NCHW", "OIHW", "NCHW"))
            h = (h * params[i]["scale"].reshape(1, -1, 1, 1)
                 + params[i]["bias"].reshape(1, -1, 1, 1))
            feats[f"e{i + 1}"] = h
        return feats

    ref = ref_forward(x)
    for name, rtol, atol in [("e1", 0.05, 5e-3), ("e3", 0.08, 5e-3), ("e7", 0.15, 1e-2)]:
        scale = float(jnp.max(jnp.abs(ref[name]))) + 1e-6
        err = float(jnp.max(jnp.abs(encode_dicts[name] - ref[name])))
        assert err <= rtol * scale + atol, (name, err, scale)

    print("KERNEL_OK")
</pallas_src>

<mosaic_0001>
module attributes {stable_mosaic.version = 11 : i64} {
  func.func @_conv_matmul_kernel(%arg0: i32, %arg1: memref<1024x25xbf16, #tpu.memory_space<vmem>>, %arg2: memref<25x128xbf16, #tpu.memory_space<vmem>>, %arg3: memref<1x128xf32, #tpu.memory_space<vmem>>, %arg4: memref<1024x128xbf16, #tpu.memory_space<vmem>>) attributes {dimension_semantics = [#tpu.dimension_semantics<parallel>], iteration_bounds = array<i64: 2>, scalar_prefetch = 0 : i64, scratch_operands = 0 : i64, tpu.core_type = #tpu.core_type<tc>, window_params = [{transform_indices = @transform_0, window_bounds = array<i64: 1024, 25>}, {pipeline_mode = #tpu.pipeline_mode<synchronous>, transform_indices = @transform_1, window_bounds = array<i64: 25, 128>}, {pipeline_mode = #tpu.pipeline_mode<synchronous>, transform_indices = @transform_2, window_bounds = array<i64: 1, 128>}, {transform_indices = @transform_3, window_bounds = array<i64: 1024, 128>}]} {
    %c0 = arith.constant 0 : index
    %c0_0 = arith.constant 0 : index
    %0 = vector.load %arg1[%c0, %c0_0] : memref<1024x25xbf16, #tpu.memory_space<vmem>>, vector<1024x25xbf16>
    %c0_1 = arith.constant 0 : index
    %c0_2 = arith.constant 0 : index
    %1 = vector.load %arg2[%c0_1, %c0_2] : memref<25x128xbf16, #tpu.memory_space<vmem>>, vector<25x128xbf16>
    %cst = arith.constant dense<0.000000e+00> : vector<1024x128xf32>
    %2 = tpu.matmul %0, %1, %cst {dimension_numbers = #tpu.dot_dimension_numbers<[1], [0], [0], [1], [0, 0, 1, 1], [], []>} : vector<1024x25xbf16>, vector<25x128xbf16>, vector<1024x128xf32> -> vector<1024x128xf32>
    %c0_3 = arith.constant 0 : index
    %c0_4 = arith.constant 0 : index
    %3 = vector.load %arg3[%c0_3, %c0_4] : memref<1x128xf32, #tpu.memory_space<vmem>>, vector<1x128xf32>
    %4 = vector.broadcast %3 : vector<1x128xf32> to vector<1024x128xf32>
    %5 = arith.addf %2, %4 : vector<1024x128xf32>
    %6 = arith.truncf %5 : vector<1024x128xf32> to vector<1024x128xbf16>
    %c0_5 = arith.constant 0 : index
    %c0_6 = arith.constant 0 : index
    %7 = vector.load %arg4[%c0_5, %c0_6] : memref<1024x128xbf16, #tpu.memory_space<vmem>>, vector<1024x128xbf16>
    tpu.vector_store %arg4[%c0_5, %c0_6], %6 {strides = array<i32>} : memref<1024x128xbf16, #tpu.memory_space<vmem>>, vector<1024x128xbf16>,
    return
  }
  func.func @transform_0(%arg0: i32) -> (i32, i32) {
    %c0_i32 = arith.constant 0 : i32
    %c0_i32_0 = arith.constant 0 : i32
    return %arg0, %c0_i32 : i32, i32
  }
  func.func @transform_1(%arg0: i32) -> (i32, i32) {
    %c0_i32 = arith.constant 0 : i32
    %c0_i32_0 = arith.constant 0 : i32
    %c0_i32_1 = arith.constant 0 : i32
    return %c0_i32, %c0_i32_0 : i32, i32
  }
  func.func @transform_2(%arg0: i32) -> (i32, i32) {
    %c0_i32 = arith.constant 0 : i32
    %c0_i32_0 = arith.constant 0 : i32
    %c0_i32_1 = arith.constant 0 : i32
    return %c0_i32, %c0_i32_0 : i32, i32
  }
  func.func @transform_3(%arg0: i32) -> (i32, i32) {
    %c0_i32 = arith.constant 0 : i32
    %c0_i32_0 = arith.constant 0 : i32
    return %arg0, %c0_i32 : i32, i32
  }
}

module attributes {stable_mosaic.version = 11 : i64} {
  func.func @_conv_matmul_kernel(%arg0: i32, %arg1: memref<64x200xbf16, #tpu.memory_space<vmem>>, %arg2: memref<200x128xbf16, #tpu.memory_space<vmem>>, %arg3: memref<1x128xf32, #tpu.memory_space<vmem>>, %arg4: memref<64x128xbf16, #tpu.memory_space<vmem>>) attributes {dimension_semantics = [#tpu.dimension_semantics<parallel>], iteration_bounds = array<i64: 2>, scalar_prefetch = 0 : i64, scratch_operands = 0 : i64, tpu.core_type = #tpu.core_type<tc>, window_params = [{transform_indices = @transform_0, window_bounds = array<i64: 64, 200>}, {pipeline_mode = #tpu.pipeline_mode<synchronous>, transform_indices = @transform_1, window_bounds = array<i64: 200, 128>}, {pipeline_mode = #tpu.pipeline_mode<synchronous>, transform_indices = @transform_2, window_bounds = array<i64: 1, 128>}, {transform_indices = @transform_3, window_bounds = array<i64: 64, 128>}]} {
    %c0 = arith.constant 0 : index
    %c0_0 = arith.constant 0 : index
    %0 = vector.load %arg1[%c0, %c0_0] : memref<64x200xbf16, #tpu.memory_space<vmem>>, vector<64x200xbf16>
    %c0_1 = arith.constant 0 : index
    %c0_2 = arith.constant 0 : index
    %1 = vector.load %arg2[%c0_1, %c0_2] : memref<200x128xbf16, #tpu.memory_space<vmem>>, vector<200x128xbf16>
    %cst = arith.constant dense<0.000000e+00> : vector<64x128xf32>
    %2 = tpu.matmul %0, %1, %cst {dimension_numbers = #tpu.dot_dimension_numbers<[1], [0], [0], [1], [0, 0, 1, 1], [], []>} : vector<64x200xbf16>, vector<200x128xbf16>, vector<64x128xf32> -> vector<64x128xf32>
    %c0_3 = arith.constant 0 : index
    %c0_4 = arith.constant 0 : index
    %3 = vector.load %arg3[%c0_3, %c0_4] : memref<1x128xf32, #tpu.memory_space<vmem>>, vector<1x128xf32>
    %4 = vector.broadcast %3 : vector<1x128xf32> to vector<64x128xf32>
    %5 = arith.addf %2, %4 : vector<64x128xf32>
    %6 = arith.truncf %5 : vector<64x128xf32> to vector<64x128xbf16>
    %c0_5 = arith.constant 0 : index
    %c0_6 = arith.constant 0 : index
    %7 = vector.load %arg4[%c0_5, %c0_6] : memref<64x128xbf16, #tpu.memory_space<vmem>>, vector<64x128xbf16>
    tpu.vector_store %arg4[%c0_5, %c0_6], %6 {strides = array<i32>} : memref<64x128xbf16, #tpu.memory_space<vmem>>, vector<64x128xbf16>,
    return
  }
  func.func @transform_0(%arg0: i32) -> (i32, i32) {
    %c0_i32 = arith.constant 0 : i32
    %c0_i32_0 = arith.constant 0 : i32
    return %arg0, %c0_i32 : i32, i32
  }
  func.func @transform_1(%arg0: i32) -> (i32, i32) {
    %c0_i32 = arith.constant 0 : i32
    %c0_i32_0 = arith.constant 0 : i32
    %c0_i32_1 = arith.constant 0 : i32
    return %c0_i32, %c0_i32_0 : i32, i32
  }
  func.func @transform_2(%arg0: i32) -> (i32, i32) {
    %c0_i32 = arith.constant 0 : i32
    %c0_i32_0 = arith.constant 0 : i32
    %c0_i32_1 = arith.constant 0 : i32
    return %c0_i32, %c0_i32_0 : i32, i32
  }
  func.func @transform_3(%arg0: i32) -> (i32, i32) {
    %c0_i32 = arith.constant 0 : i32
    %c0_i32_0 = arith.constant 0 : i32
    return %arg0, %c0_i32 : i32, i32
  }
}

module attributes {stable_mosaic.version = 11 : i64} {
  func.func @_conv_matmul_kernel(%arg0: i32, %arg1: memref<16x144xbf16, #tpu.memory_space<vmem>>, %arg2: memref<144x128xbf16, #tpu.memory_space<vmem>>, %arg3: memref<1x128xf32, #tpu.memory_space<vmem>>, %arg4: memref<16x128xbf16, #tpu.memory_space<vmem>>) attributes {dimension_semantics = [#tpu.dimension_semantics<parallel>], iteration_bounds = array<i64: 2>, scalar_prefetch = 0 : i64, scratch_operands = 0 : i64, tpu.core_type = #tpu.core_type<tc>, window_params = [{transform_indices = @transform_0, window_bounds = array<i64: 16, 144>}, {pipeline_mode = #tpu.pipeline_mode<synchronous>, transform_indices = @transform_1, window_bounds = array<i64: 144, 128>}, {pipeline_mode = #tpu.pipeline_mode<synchronous>, transform_indices = @transform_2, window_bounds = array<i64: 1, 128>}, {transform_indices = @transform_3, window_bounds = array<i64: 16, 128>}]} {
    %c0 = arith.constant 0 : index
    %c0_0 = arith.constant 0 : index
    %0 = vector.load %arg1[%c0, %c0_0] : memref<16x144xbf16, #tpu.memory_space<vmem>>, vector<16x144xbf16>
    %c0_1 = arith.constant 0 : index
    %c0_2 = arith.constant 0 : index
    %1 = vector.load %arg2[%c0_1, %c0_2] : memref<144x128xbf16, #tpu.memory_space<vmem>>, vector<144x128xbf16>
    %cst = arith.constant dense<0.000000e+00> : vector<16x128xf32>
    %2 = tpu.matmul %0, %1, %cst {dimension_numbers = #tpu.dot_dimension_numbers<[1], [0], [0], [1], [0, 0, 1, 1], [], []>} : vector<16x144xbf16>, vector<144x128xbf16>, vector<16x128xf32> -> vector<16x128xf32>
    %c0_3 = arith.constant 0 : index
    %c0_4 = arith.constant 0 : index
    %3 = vector.load %arg3[%c0_3, %c0_4] : memref<1x128xf32, #tpu.memory_space<vmem>>, vector<1x128xf32>
    %4 = vector.broadcast %3 : vector<1x128xf32> to vector<16x128xf32>
    %5 = arith.addf %2, %4 : vector<16x128xf32>
    %6 = arith.truncf %5 : vector<16x128xf32> to vector<16x128xbf16>
    %c0_5 = arith.constant 0 : index
    %c0_6 = arith.constant 0 : index
    %7 = vector.load %arg4[%c0_5, %c0_6] : memref<16x128xbf16, #tpu.memory_space<vmem>>, vector<16x128xbf16>
    tpu.vector_store %arg4[%c0_5, %c0_6], %6 {strides = array<i32>} : memref<16x128xbf16, #tpu.memory_space<vmem>>, vector<16x128xbf16>,
    return
  }
  func.func @transform_0(%arg0: i32) -> (i32, i32) {
    %c0_i32 = arith.constant 0 : i32
    %c0_i32_0 = arith.constant 0 : i32
    return %arg0, %c0_i32 : i32, i32
  }
  func.func @transform_1(%arg0: i32) -> (i32, i32) {
    %c0_i32 = arith.constant 0 : i32
    %c0_i32_0 = arith.constant 0 : i32
    %c0_i32_1 = arith.constant 0 : i32
    return %c0_i32, %c0_i32_0 : i32, i32
  }
  func.func @transform_2(%arg0: i32) -> (i32, i32) {
    %c0_i32 = arith.constant 0 : i32
    %c0_i32_0 = arith.constant 0 : i32
    %c0_i32_1 = arith.constant 0 : i32
    return %c0_i32, %c0_i32_0 : i32, i32
  }
  func.func @transform_3(%arg0: i32) -> (i32, i32) {
    %c0_i32 = arith.constant 0 : i32
    %c0_i32_0 = arith.constant 0 : i32
    return %arg0, %c0_i32 : i32, i32
  }
}

module attributes {stable_mosaic.version = 11 : i64} {
  func.func @_tail_kernel(%arg0: memref<8x288xf32, #tpu.memory_space<vmem>>, %arg1: memref<288x64xf32, #tpu.memory_space<vmem>>, %arg2: memref<1x64xf32, #tpu.memory_space<vmem>>, %arg3: memref<256x64xf32, #tpu.memory_space<vmem>>, %arg4: memref<1x64xf32, #tpu.memory_space<vmem>>, %arg5: memref<64x64xf32, #tpu.memory_space<vmem>>, %arg6: memref<1x64xf32, #tpu.memory_space<vmem>>, %arg7: memref<64x64xf32, #tpu.memory_space<vmem>>, %arg8: memref<1x64xf32, #tpu.memory_space<vmem>>, %arg9: memref<8x64xf32, #tpu.memory_space<vmem>>, %arg10: memref<2x64xf32, #tpu.memory_space<vmem>>, %arg11: memref<2x64xf32, #tpu.memory_space<vmem>>, %arg12: memref<2x64xf32, #tpu.memory_space<vmem>>) attributes {dimension_semantics = [], scalar_prefetch = 0 : i64, scratch_operands = 0 : i64, tpu.core_type = #tpu.core_type<tc>} {
    %c0 = arith.constant 0 : index
    %c0_0 = arith.constant 0 : index
    %0 = vector.load %arg0[%c0, %c0_0] : memref<8x288xf32, #tpu.memory_space<vmem>>, vector<8x288xf32>
    %c0_1 = arith.constant 0 : index
    %c0_2 = arith.constant 0 : index
    %1 = vector.load %arg1[%c0_1, %c0_2] : memref<288x64xf32, #tpu.memory_space<vmem>>, vector<288x64xf32>
    %cst = arith.constant dense<0.000000e+00> : vector<8x64xf32>
    %2 = tpu.matmul %0, %1, %cst {dimension_numbers = #tpu.dot_dimension_numbers<[1], [0], [0], [1], [0, 0, 1, 1], [], []>} : vector<8x288xf32>, vector<288x64xf32>, vector<8x64xf32> -> vector<8x64xf32>
    %c0_3 = arith.constant 0 : index
    %c0_4 = arith.constant 0 : index
    %3 = vector.load %arg2[%c0_3, %c0_4] : memref<1x64xf32, #tpu.memory_space<vmem>>, vector<1x64xf32>
    %4 = vector.broadcast %3 : vector<1x64xf32> to vector<8x64xf32>
    %5 = arith.addf %2, %4 : vector<8x64xf32>
    %c0_5 = arith.constant 0 : index
    %c0_6 = arith.constant 0 : index
    %6 = vector.load %arg9[%c0_5, %c0_6] : memref<8x64xf32, #tpu.memory_space<vmem>>, vector<8x64xf32>
    tpu.vector_store %arg9[%c0_5, %c0_6], %5 {strides = array<i32>} : memref<8x64xf32, #tpu.memory_space<vmem>>, vector<8x64xf32>,
    %cst_7 = arith.constant 0.000000e+00 : f32
    %7 = vector.broadcast %cst_7 : f32 to vector<8x64xf32>
    %8 = arith.cmpf oge, %5, %7 : vector<8x64xf32>
    %cst_8 = arith.constant 2.000000e-01 : f32
    %9 = vector.broadcast %cst_8 : f32 to vector<8x64xf32>
    %10 = arith.mulf %5, %9 : vector<8x64xf32>
    %11 = arith.select %8, %5, %10 : vector<8x64xi1>, vector<8x64xf32>
    %cst_9 = arith.constant 0.000000e+00 : f32
    %12 = vector.broadcast %cst_9 : f32 to vector<2x64xf32>
    %13 = vector.extract_strided_slice %11 {offsets = [0, 0], sizes = [2, 64], strides = [1, 1]} : vector<8x64xf32> to vector<2x64xf32>
    %c0_10 = arith.constant 0 : index
    %c0_11 = arith.constant 0 : index
    %14 = vector.load %arg3[%c0_10, %c0_11] : memref<256x64xf32, #tpu.memory_space<vmem>>, vector<64x64xf32>
    %cst_12 = arith.constant dense<0.000000e+00> : vector<2x64xf32>
    %15 = tpu.matmul %13, %14, %cst_12 {dimension_numbers = #tpu.dot_dimension_numbers<[1], [0], [0], [1], [0, 0, 1, 1], [], []>} : vector<2x64xf32>, vector<64x64xf32>, vector<2x64xf32> -> vector<2x64xf32>
    %16 = arith.addf %12, %15 : vector<2x64xf32>
    %17 = vector.extract_strided_slice %11 {offsets = [2, 0], sizes = [2, 64], strides = [1, 1]} : vector<8x64xf32> to vector<2x64xf32>
    %c64 = arith.constant 64 : index
    %c0_13 = arith.constant 0 : index
    %18 = vector.load %arg3[%c64, %c0_13] : memref<256x64xf32, #tpu.memory_space<vmem>>, vector<64x64xf32>
    %cst_14 = arith.constant dense<0.000000e+00> : vector<2x64xf32>
    %19 = tpu.matmul %17, %18, %cst_14 {dimension_numbers = #tpu.dot_dimension_numbers<[1], [0], [0], [1], [0, 0, 1, 1], [], []>} : vector<2x64xf32>, vector<64x64xf32>, vector<2x64xf32> -> vector<2x64xf32>
    %20 = arith.addf %16, %19 : vector<2x64xf32>
    %21 = vector.extract_strided_slice %11 {offsets = [4, 0], sizes = [2, 64], strides = [1, 1]} : vector<8x64xf32> to vector<2x64xf32>
    %c128 = arith.constant 128 : index
    %c0_15 = arith.constant 0 : index
    %22 = vector.load %arg3[%c128, %c0_15] : memref<256x64xf32, #tpu.memory_space<vmem>>, vector<64x64xf32>
    %cst_16 = arith.constant dense<0.000000e+00> : vector<2x64xf32>
    %23 = tpu.matmul %21, %22, %cst_16 {dimension_numbers = #tpu.dot_dimension_numbers<[1], [0], [0], [1], [0, 0, 1, 1], [], []>} : vector<2x64xf32>, vector<64x64xf32>, vector<2x64xf32> -> vector<2x64xf32>
    %24 = arith.addf %20, %23 : vector<2x64xf32>
    %25 = vector.extract_strided_slice %11 {offsets = [6, 0], sizes = [2, 64], strides = [1, 1]} : vector<8x64xf32> to vector<2x64xf32>
    %c192 = arith.constant 192 : index
    %c0_17 = arith.constant 0 : index
    %26 = vector.load %arg3[%c192, %c0_17] : memref<256x64xf32, #tpu.memory_space<vmem>>, vector<64x64xf32>
    %cst_18 = arith.constant dense<0.000000e+00> : vector<2x64xf32>
    %27 = tpu.matmul %25, %26, %cst_18 {dimension_numbers = #tpu.dot_dimension_numbers<[1], [0], [0], [1], [0, 0, 1, 1], [], []>} : vector<2x64xf32>, vector<64x64xf32>, vector<2x64xf32> -> vector<2x64xf32>
    %28 = arith.addf %24, %27 : vector<2x64xf32>
    %c0_19 = arith.constant 0 : index
    %c0_20 = arith.constant 0 : index
    %29 = vector.load %arg4[%c0_19, %c0_20] : memref<1x64xf32, #tpu.memory_space<vmem>>, vector<1x64xf32>
    %30 = vector.broadcast %29 : vector<1x64xf32> to vector<2x64xf32>
    %31 = arith.addf %28, %30 : vector<2x64xf32>
    %c0_21 = arith.constant 0 : index
    %c0_22 = arith.constant 0 : index
    %32 = vector.load %arg10[%c0_21, %c0_22] : memref<2x64xf32, #tpu.memory_space<vmem>>, vector<2x64xf32>
    tpu.vector_store %arg10[%c0_21, %c0_22], %31 {strides = array<i32>} : memref<2x64xf32, #tpu.memory_space<vmem>>, vector<2x64xf32>,
    %cst_23 = arith.constant 0.000000e+00 : f32
    %33 = vector.broadcast %cst_23 : f32 to vector<2x64xf32>
    %34 = arith.cmpf oge, %31, %33 : vector<2x64xf32>
    %cst_24 = arith.constant 2.000000e-01 : f32
    %35 = vector.broadcast %cst_24 : f32 to vector<2x64xf32>
    %36 = arith.mulf %31, %35 : vector<2x64xf32>
    %37 = arith.select %34, %31, %36 : vector<2x64xi1>, vector<2x64xf32>
    %c0_25 = arith.constant 0 : index
    %c0_26 = arith.constant 0 : index
    %38 = vector.load %arg5[%c0_25, %c0_26] : memref<64x64xf32, #tpu.memory_space<vmem>>, vector<64x64xf32>
    %cst_27 = arith.constant dense<0.000000e+00> : vector<2x64xf32>
    %39 = tpu.matmul %37, %38, %cst_27 {dimension_numbers = #tpu.dot_dimension_numbers<[1], [0], [0], [1], [0, 0, 1, 1], [], []>} : vector<2x64xf32>, vector<64x64xf32>, vector<2x64xf32> -> vector<2x64xf32>
    %c0_28 = arith.constant 0 : index
    %c0_29 = arith.constant 0 : index
    %40 = vector.load %arg6[%c0_28, %c0_29] : memref<1x64xf32, #tpu.memory_space<vmem>>, vector<1x64xf32>
    %41 = vector.broadcast %40 : vector<1x64xf32> to vector<2x64xf32>
    %42 = arith.addf %39, %41 : vector<2x64xf32>
    %c0_30 = arith.constant 0 : index
    %c0_31 = arith.constant 0 : index
    %43 = vector.load %arg11[%c0_30, %c0_31] : memref<2x64xf32, #tpu.memory_space<vmem>>, vector<2x64xf32>
    tpu.vector_store %arg11[%c0_30, %c0_31], %42 {strides = array<i32>} : memref<2x64xf32, #tpu.memory_space<vmem>>, vector<2x64xf32>,
    %cst_32 = arith.constant 0.000000e+00 : f32
    %44 = vector.broadcast %cst_32 : f32 to vector<2x64xf32>
    %45 = arith.cmpf oge, %42, %44 : vector<2x64xf32>
    %cst_33 = arith.constant 2.000000e-01 : f32
    %46 = vector.broadcast %cst_33 : f32 to vector<2x64xf32>
    %47 = arith.mulf %42, %46 : vector<2x64xf32>
    %48 = arith.select %45, %42, %47 : vector<2x64xi1>, vector<2x64xf32>
    %c0_34 = arith.constant 0 : index
    %c0_35 = arith.constant 0 : index
    %49 = vector.load %arg7[%c0_34, %c0_35] : memref<64x64xf32, #tpu.memory_space<vmem>>, vector<64x64xf32>
    %cst_36 = arith.constant dense<0.000000e+00> : vector<2x64xf32>
    %50 = tpu.matmul %48, %49, %cst_36 {dimension_numbers = #tpu.dot_dimension_numbers<[1], [0], [0], [1], [0, 0, 1, 1], [], []>} : vector<2x64xf32>, vector<64x64xf32>, vector<2x64xf32> -> vector<2x64xf32>
    %c0_37 = arith.constant 0 : index
    %c0_38 = arith.constant 0 : index
    %51 = vector.load %arg8[%c0_37, %c0_38] : memref<1x64xf32, #tpu.memory_space<vmem>>, vector<1x64xf32>
    %52 = vector.broadcast %51 : vector<1x64xf32> to vector<2x64xf32>
    %53 = arith.addf %50, %52 : vector<2x64xf32>
    %c0_39 = arith.constant 0 : index
    %c0_40 = arith.constant 0 : index
    %54 = vector.load %arg12[%c0_39, %c0_40] : memref<2x64xf32, #tpu.memory_space<vmem>>, vector<2x64xf32>
    tpu.vector_store %arg12[%c0_39, %c0_40], %53 {strides = array<i32>} : memref<2x64xf32, #tpu.memory_space<vmem>>, vector<2x64xf32>,
    return
  }
}

</mosaic_0001>

<llo_original>
// kernel: simple_encoder_forward.4
$region0: #{simple_encoder_forward.4}
  #allocation0 [shape = 'u32[]', space=smem, size = 0x4, offset = 0x4, fixed_abs, tag = 'smem constant byte address 0x4 - core index']
  #allocation1 [shape = 'u32[144,128]{1,0:T(1,128)}', space=vmem, size = 0x12000, scoped, tag = 'internal scratch']
  %s0 = inlined_call_operand.vmem [shape: bf16[2048,25], index: 0, kind: input, shape index: {}]
  %s1 = inlined_call_operand.vmem [shape: bf16[25,128], index: 1, kind: input, shape index: {}]
  %s2 = inlined_call_operand.vmem [shape: f32[1,128], index: 2, kind: input, shape index: {}]
  %s3 = inlined_call_operand.vmem [shape: bf16[2048,128], index: 3, kind: output, shape index: {}]
  %s4 = sld [smem:[#allocation0]]
  $region45: #{simple_encoder_forward.4} parent=0
    _
  %s6 = ssub.s32 1, %s4
  %s7 = scalar_select 0, %s6, %s4
  loop: start=0, step=1, limit=4
  $region2: #{simple_encoder_forward.4} parent=0 // loop_pre_header
    _
  $region3: #{simple_encoder_forward.4} parent=0 // loop_header
    %s9 = sphi 0, %s13
    %p10 = scmp.ge.s32.totalorder %s9, 4
    %s19 = sphi 0, %s21
    %s22 = sphi 0, %s19
    %s23 = sphi 0, %s22
    %s39 = sphi 0, %s23
    %s43 = sphi 0, %s43
    %s45 = sphi 0, %s43
    %s46 = sphi 0, %s45
    %s60 = sphi 0, %s46
    %s64 = sphi 0, %s64
    %s66 = sphi 0, %s64
    %s67 = sphi 0, %s66
    %s81 = sphi 0, %s67
    %s87 = sphi 0, %s89
    %s90 = sphi 0, %s87
    %s91 = sphi 0, %s90
    %s107 = sphi 0, %s91
  $region4: #{simple_encoder_forward.4} parent=0 // loop_header_branch
    %12 = sbr.rel (%p10) target = $region8
  $region5: #{simple_encoder_forward.4} parent=0 // loop_body
    %s14 = ssub.s32 %s9, 1
    %s15 = ssub.s32 %s9, 2
    %s16 = sadd.s32 %s9, 1
    %s17 = ssub.s32 %s9, %s16
    %p18 = scmp.eq.s32.totalorder %s17, 0
    %s20 = sadd.s32 %s19, 1
    %s21 = scalar_select %p18, %s19, %s20
    %p24 = pneg %p18
    %p25 = scmp.eq.s32.totalorder %s9, 1
    %p26 = por %p24, %p25
    %p27 = scmp.ne.s32.totalorder %s19, %s22
    %p28 = scmp.eq.s32.totalorder %s9, 0
    %p29 = por %p27, %p28
    %p30 = scmp.ne.s32.totalorder %s19, %s22
    %p31 = scmp.eq.s32.totalorder %s14, 1
    %p32 = por %p30, %p31
    %p33 = scmp.ne.s32.totalorder %s22, %s23
    %p34 = scmp.eq.s32.totalorder %s14, 0
    %p35 = por %p33, %p34
    %p36 = scmp.ne.s32.totalorder %s22, %s23
    %p37 = scmp.eq.s32.totalorder %s15, 1
    %p38 = por %p36, %p37
    %p40 = scmp.ne.s32.totalorder %s23, %s39
    %p41 = scmp.eq.s32.totalorder %s15, 0
    %p42 = por %p40, %p41
    %s44 = sadd.s32 %s43, 1
    %p47 = scmp.eq.s32.totalorder %s9, 1
    %p48 = scmp.ne.s32.totalorder %s43, %s45
    %p49 = scmp.eq.s32.totalorder %s9, 0
    %p50 = por %p48, %p49
    %p51 = scmp.ne.s32.totalorder %s43, %s45
    %p52 = scmp.eq.s32.totalorder %s14, 1
    %p53 = por %p51, %p52
    %p54 = scmp.ne.s32.totalorder %s45, %s46
    %p55 = scmp.eq.s32.totalorder %s14, 0
    %p56 = por %p54, %p55
    %p57 = scmp.ne.s32.totalorder %s45, %s46
    %p58 = scmp.eq.s32.totalorder %s15, 1
    %p59 = por %p57, %p58
    %p61 = scmp.ne.s32.totalorder %s46, %s60
    %p62 = scmp.eq.s32.totalorder %s15, 0
    %p63 = por %p61, %p62
    %s65 = sadd.s32 %s64, 1
    %p68 = scmp.eq.s32.totalorder %s9, 1
    %p69 = scmp.ne.s32.totalorder %s64, %s66
    %p70 = scmp.eq.s32.totalorder %s9, 0
    %p71 = por %p69, %p70
    %p72 = scmp.ne.s32.totalorder %s64, %s66
    %p73 = scmp.eq.s32.totalorder %s14, 1
    %p74 = por %p72, %p73
    %p75 = scmp.ne.s32.totalorder %s66, %s67
    %p76 = scmp.eq.s32.totalorder %s14, 0
    %p77 = por %p75, %p76
    %p78 = scmp.ne.s32.totalorder %s66, %s67
    %p79 = scmp.eq.s32.totalorder %s15, 1
    %p80 = por %p78, %p79
    %p82 = scmp.ne.s32.totalorder %s67, %s81
    %p83 = scmp.eq.s32.totalorder %s15, 0
    %p84 = por %p82, %p83
    %s85 = ssub.s32 %s9, %s16
    %p86 = scmp.eq.s32.totalorder %s85, 0
    %s88 = sadd.s32 %s87, 1
    %s89 = scalar_select %p86, %s87, %s88
    %p92 = pneg %p86
    %p93 = scmp.eq.s32.totalorder %s9, 1
    %p94 = por %p92, %p93
    %p95 = scmp.ne.s32.totalorder %s87, %s90
    %p96 = scmp.eq.s32.totalorder %s9, 0
    %p97 = por %p95, %p96
    %p98 = scmp.ne.s32.totalorder %s87, %s90
    %p99 = scmp.eq.s32.totalorder %s14, 1
    %p100 = por %p98, %p99
    %p101 = scmp.ne.s32.totalorder %s90, %s91
    %p102 = scmp.eq.s32.totalorder %s14, 0
    %p103 = por %p101, %p102
    %p104 = scmp.ne.s32.totalorder %s90, %s91
    %p105 = scmp.eq.s32.totalorder %s15, 1
    %p106 = por %p104, %p105
    %p108 = scmp.ne.s32.totalorder %s91, %s107
    %p109 = scmp.eq.s32.totalorder %s15, 0
    %p110 = por %p108, %p109
    %p111 = scmp.le.s32.totalorder 1, %s9
    %p112 = scmp.lt.s32.totalorder %s9, 3
    %p113 = pnand %p111, %p112
    %p114 = pneg %p113
    // Predicated region
    $region9: #{simple_encoder_forward.4} parent=5 // pred_check
      _
    $region10: #{simple_encoder_forward.4} parent=5 // pred_check_branch
      %116 = sbr.rel (%p113) target = $region12
    $region11: #{simple_encoder_forward.4} parent=5 // pred_region
      %s117 = ssub.s32 %s9, 1
      // Predicated region
      $region13: #{simple_encoder_forward.4} parent=11 // pred_check
        %p118 = pneg %p56
      $region14: #{simple_encoder_forward.4} parent=11 // pred_check_branch
        %120 = sbr.rel (%p118) target = $region16
      $region15: #{simple_encoder_forward.4} parent=11 // pred_region
        _
      $region16: #{simple_encoder_forward.4} parent=11 // pred_fallthru
        _
      // Predicated region
      $region17: #{simple_encoder_forward.4} parent=11 // pred_check
        %p121 = pneg %p77
      $region18: #{simple_encoder_forward.4} parent=11 // pred_check_branch
        %123 = sbr.rel (%p121) target = $region20
      $region19: #{simple_encoder_forward.4} parent=11 // pred_region
        _
      $region20: #{simple_encoder_forward.4} parent=11 // pred_fallthru
        _
    $region12: #{simple_encoder_forward.4} parent=5 // pred_fallthru
      _
    %p124 = scmp.lt.s32.totalorder %s9, 2
    // Predicated region
    $region21: #{simple_encoder_forward.4} parent=5 // pred_check
      %p125 = pneg %p124
    $region22: #{simple_encoder_forward.4} parent=5 // pred_check_branch
      %127 = sbr.rel (%p125) target = $region24
    $region23: #{simple_encoder_forward.4} parent=5 // pred_region
      // Predicated region
      $region25: #{simple_encoder_forward.4} parent=23 // pred_check
        %p128 = pneg %p29
      $region26: #{simple_encoder_forward.4} parent=23 // pred_check_branch
        %130 = sbr.rel (%p128) target = $region28
      $region27: #{simple_encoder_forward.4} parent=23 // pred_region
        %s131 = smul.u32 128, %s9
        %p132 = scmp.lt.s32.totalorder %s131, 255
        %s133 = scalar_select %p132, %s131, 255
        %s134 = smul.addr %s133, 4
        %s135 = scalar_lea.vmem %s0, %s134
        %s136 = smul.u32 128, %s9
      $region28: #{simple_encoder_forward.4} parent=23 // pred_fallthru
        _
    $region24: #{simple_encoder_forward.4} parent=5 // pred_fallthru
      _
    %p137 = scmp.le.s32.totalorder 1, %s9
    %p138 = scmp.lt.s32.totalorder %s9, 3
    %p139 = pnand %p137, %p138
    %p140 = pneg %p139
    // Predicated region
    $region29: #{simple_encoder_forward.4} parent=5 // pred_check
      _
    $region30: #{simple_encoder_forward.4} parent=5 // pred_check_branch
      %142 = sbr.rel (%p139) target = $region32
    $region31: #{simple_encoder_forward.4} parent=5 // pred_region
      %s143 = ssub.s32 %s9, 1
      %s144 = smul.u32 128, %s14
      %p145 = scmp.lt.s32.totalorder %s144, 255
      %s146 = scalar_select %p145, %s144, 255
      %s147 = smul.addr %s146, 4
      %s148 = scalar_lea.vmem %s0, %s147
      %p149 = pneg %p35
      %p150 = pneg %p32
      %p151 = pneg %p56
      %p152 = pneg %p53
      %p153 = pneg %p77
      %p154 = pneg %p74
      %p155 = pneg %p103
      %p156 = pneg %p100
      %s157 = smul.u32 128, %s14
      %p158 = scmp.lt.s32.totalorder %s157, 255
      %s159 = scalar_select %p158, %s157, 255
      %s160 = smul.addr %s159, 4
      %s161 = scalar_lea.vmem %s3, %s160
      %s162 = smul.u32 128, %s14
      %p163 = scmp.lt.s32.totalorder %s162, 255
      %s164 = scalar_select %p163, %s162, 255
      %s165 = smul.addr %s164, 4
      %s166 = scalar_lea.vmem %s0, %s165
      %s167 = smul.u32 128, %s14
      %s168 = smul.u32 128, %s14
      %p169 = scmp.lt.s32.totalorder %s168, 255
      %s170 = scalar_select %p169, %s168, 255
      %s171 = smul.addr %s170, 4
      %s172 = scalar_lea.vmem %s3, %s171
      %s173 = smul.u32 128, %s14
      %v175 = vld [vmem:[%s166] sm:$0xf]
      %v176 = vld [vmem:[%s166 + $0x4] sm:$0xf]
      %v177 = vld [vmem:[%s166 + $0x8] sm:$0xf]
      %v178 = vld [vmem:[%s166 + $0xc] sm:$0xf]
      %v179 = vld [vmem:[%s166 + $0x10] sm:$0xf]
      %v180 = vld [vmem:[%s166 + $0x14] sm:$0xf]
      %v181 = vld [vmem:[%s166 + $0x18] sm:$0xf]
      %v182 = vld [vmem:[%s166 + $0x1c] sm:$0xf]
      %v183 = vld [vmem:[%s166 + $0x20] sm:$0xf]
      %v184 = vld [vmem:[%s166 + $0x24] sm:$0xf]
      %v185 = vld [vmem:[%s166 + $0x28] sm:$0xf]
      %v186 = vld [vmem:[%s166 + $0x2c] sm:$0xf]
      %v187 = vld [vmem:[%s166 + $0x30] sm:$0xf]
      %v188 = vld [vmem:[%s166 + $0x34] sm:$0xf]
      %v189 = vld [vmem:[%s166 + $0x38] sm:$0xf]
      %v190 = vld [vmem:[%s166 + $0x3c] sm:$0xf]
      %v191 = vld [vmem:[%s166 + $0x40] sm:$0xf]
      %v192 = vld [vmem:[%s166 + $0x44] sm:$0xf]
      %v193 = vld [vmem:[%s166 + $0x48] sm:$0xf]
      %v194 = vld [vmem:[%s166 + $0x4c] sm:$0xf]
      %v195 = vld [vmem:[%s166 + $0x50] sm:$0xf]
      %v196 = vld [vmem:[%s166 + $0x54] sm:$0xf]
      %v197 = vld [vmem:[%s166 + $0x58] sm:$0xf]
      %v198 = vld [vmem:[%s166 + $0x5c] sm:$0xf]
      %v199 = vld [vmem:[%s166 + $0x60] sm:$0xf]
      %v200 = vld [vmem:[%s166 + $0x64] sm:$0xf]
      %v201 = vld [vmem:[%s166 + $0x68] sm:$0xf]
      %v202 = vld [vmem:[%s166 + $0x6c] sm:$0xf]
      %v203 = vld [vmem:[%s166 + $0x70] sm:$0xf]
      %v204 = vld [vmem:[%s166 + $0x74] sm:$0xf]
      %v205 = vld [vmem:[%s166 + $0x78] sm:$0xf]
      %v206 = vld [vmem:[%s166 + $0x7c] sm:$0xf]
      %v207 = vld [vmem:[%s166 + $0x80] sm:$0xf]
      %v208 = vld [vmem:[%s166 + $0x84] sm:$0xf]
      %v209 = vld [vmem:[%s166 + $0x88] sm:$0xf]
      %v210 = vld [vmem:[%s166 + $0x8c] sm:$0xf]
      %v211 = vld [vmem:[%s166 + $0x90] sm:$0xf]
      %v212 = vld [vmem:[%s166 + $0x94] sm:$0xf]
      %v213 = vld [vmem:[%s166 + $0x98] sm:$0xf]
      %v214 = vld [vmem:[%s166 + $0x9c] sm:$0xf]
      %v215 = vld [vmem:[%s166 + $0xa0] sm:$0xf]
      %v216 = vld [vmem:[%s166 + $0xa4] sm:$0xf]
      %v217 = vld [vmem:[%s166 + $0xa8] sm:$0xf]
      %v218 = vld [vmem:[%s166 + $0xac] sm:$0xf]
      %v219 = vld [vmem:[%s166 + $0xb0] sm:$0xf]
      %v220 = vld [vmem:[%s166 + $0xb4] sm:$0xf]
      %v221 = vld [vmem:[%s166 + $0xb8] sm:$0xf]
      %v222 = vld [vmem:[%s166 + $0xbc] sm:$0xf]
      %v223 = vld [vmem:[%s166 + $0xc0] sm:$0xf]
      %v224 = vld [vmem:[%s166 + $0xc4] sm:$0xf]
      %v225 = vld [vmem:[%s166 + $0xc8] sm:$0xf]
      %v226 = vld [vmem:[%s166 + $0xcc] sm:$0xf]
      %v227 = vld [vmem:[%s166 + $0xd0] sm:$0xf]
      %v228 = vld [vmem:[%s166 + $0xd4] sm:$0xf]
      %v229 = vld [vmem:[%s166 + $0xd8] sm:$0xf]
      %v230 = vld [vmem:[%s166 + $0xdc] sm:$0xf]
      %v231 = vld [vmem:[%s166 + $0xe0] sm:$0xf]
      %v232 = vld [vmem:[%s166 + $0xe4] sm:$0xf]
      %v233 = vld [vmem:[%s166 + $0xe8] sm:$0xf]
      %v234 = vld [vmem:[%s166 + $0xec] sm:$0xf]
      %v235 = vld [vmem:[%s166 + $0xf0] sm:$0xf]
      %v236 = vld [vmem:[%s166 + $0xf4] sm:$0xf]
      %v237 = vld [vmem:[%s166 + $0xf8] sm:$0xf]
      %v238 = vld [vmem:[%s166 + $0xfc] sm:$0xf]
      %v239 = vld [vmem:[%s166 + $0x100] sm:$0xf]
      %v240 = vld [vmem:[%s166 + $0x104] sm:$0xf]
      %v241 = vld [vmem:[%s166 + $0x108] sm:$0xf]
      %v242 = vld [vmem:[%s166 + $0x10c] sm:$0xf]
      %v243 = vld [vmem:[%s166 + $0x110] sm:$0xf]
      %v244 = vld [vmem:[%s166 + $0x114] sm:$0xf]
      %v245 = vld [vmem:[%s166 + $0x118] sm:$0xf]
      %v246 = vld [vmem:[%s166 + $0x11c] sm:$0xf]
      %v247 = vld [vmem:[%s166 + $0x120] sm:$0xf]
      %v248 = vld [vmem:[%s166 + $0x124] sm:$0xf]
      %v249 = vld [vmem:[%s166 + $0x128] sm:$0xf]
      %v250 = vld [vmem:[%s166 + $0x12c] sm:$0xf]
      %v251 = vld [vmem:[%s166 + $0x130] sm:$0xf]
      %v252 = vld [vmem:[%s166 + $0x134] sm:$0xf]
      %v253 = vld [vmem:[%s166 + $0x138] sm:$0xf]
      %v254 = vld [vmem:[%s166 + $0x13c] sm:$0xf]
      %v255 = vld [vmem:[%s166 + $0x140] sm:$0xf]
      %v256 = vld [vmem:[%s166 + $0x144] sm:$0xf]
      %v257 = vld [vmem:[%s166 + $0x148] sm:$0xf]
      %v258 = vld [vmem:[%s166 + $0x14c] sm:$0xf]
      %v259 = vld [vmem:[%s166 + $0x150] sm:$0xf]
      %v260 = vld [vmem:[%s166 + $0x154] sm:$0xf]
      %v261 = vld [vmem:[%s166 + $0x158] sm:$0xf]
      %v262 = vld [vmem:[%s166 + $0x15c] sm:$0xf]
      %v263 = vld [vmem:[%s166 + $0x160] sm:$0xf]
      %v264 = vld [vmem:[%s166 + $0x164] sm:$0xf]
      %v265 = vld [vmem:[%s166 + $0x168] sm:$0xf]
      %v266 = vld [vmem:[%s166 + $0x16c] sm:$0xf]
      %v267 = vld [vmem:[%s166 + $0x170] sm:$0xf]
      %v268 = vld [vmem:[%s166 + $0x174] sm:$0xf]
      %v269 = vld [vmem:[%s166 + $0x178] sm:$0xf]
      %v270 = vld [vmem:[%s166 + $0x17c] sm:$0xf]
      %v271 = vld [vmem:[%s166 + $0x180] sm:$0xf]
      %v272 = vld [vmem:[%s166 + $0x184] sm:$0xf]
      %v273 = vld [vmem:[%s166 + $0x188] sm:$0xf]
      %v274 = vld [vmem:[%s166 + $0x18c] sm:$0xf]
      %v275 = vld [vmem:[%s166 + $0x190] sm:$0xf]
      %v276 = vld [vmem:[%s166 + $0x194] sm:$0xf]
      %v277 = vld [vmem:[%s166 + $0x198] sm:$0xf]
      %v278 = vld [vmem:[%s166 + $0x19c] sm:$0xf]
      %v279 = vld [vmem:[%s166 + $0x1a0] sm:$0xf]
      %v280 = vld [vmem:[%s166 + $0x1a4] sm:$0xf]
      %v281 = vld [vmem:[%s166 + $0x1a8] sm:$0xf]
      %v282 = vld [vmem:[%s166 + $0x1ac] sm:$0xf]
      %v283 = vld [vmem:[%s166 + $0x1b0] sm:$0xf]
      %v284 = vld [vmem:[%s166 + $0x1b4] sm:$0xf]
      %v285 = vld [vmem:[%s166 + $0x1b8] sm:$0xf]
      %v286 = vld [vmem:[%s166 + $0x1bc] sm:$0xf]
      %v287 = vld [vmem:[%s166 + $0x1c0] sm:$0xf]
      %v288 = vld [vmem:[%s166 + $0x1c4] sm:$0xf]
      %v289 = vld [vmem:[%s166 + $0x1c8] sm:$0xf]
      %v290 = vld [vmem:[%s166 + $0x1cc] sm:$0xf]
      %v291 = vld [vmem:[%s166 + $0x1d0] sm:$0xf]
      %v292 = vld [vmem:[%s166 + $0x1d4] sm:$0xf]
      %v293 = vld [vmem:[%s166 + $0x1d8] sm:$0xf]
      %v294 = vld [vmem:[%s166 + $0x1dc] sm:$0xf]
      %v295 = vld [vmem:[%s166 + $0x1e0] sm:$0xf]
      %v296 = vld [vmem:[%s166 + $0x1e4] sm:$0xf]
      %v297 = vld [vmem:[%s166 + $0x1e8] sm:$0xf]
      %v298 = vld [vmem:[%s166 + $0x1ec] sm:$0xf]
      %v299 = vld [vmem:[%s166 + $0x1f0] sm:$0xf]
      %v300 = vld [vmem:[%s166 + $0x1f4] sm:$0xf]
      %v301 = vld [vmem:[%s166 + $0x1f8] sm:$0xf]
      %v302 = vld [vmem:[%s166 + $0x1fc] sm:$0xf]
      %v303 = vld [vmem:[%s1] sm:$0xf]
      %v304 = vld [vmem:[%s1 + $0x4] sm:$0xf]
      %v305 = vld [vmem:[%s1 + $0x8] sm:$0xf]
      %v306 = vld [vmem:[%s1 + $0xc] sm:$0x1]
      %v307 = vld [vmem:[%s2] sm:$0x1]
      %v309 = vlaneseq
      %v310 = vshrl.u32 %v309, 7
      %v311 = vsub.s32 0, %v310
      %v312 = vrot.slane %v307, %v311
      %v442 = vunpack.c.l.b16 %v175
      %v443 = vunpack.c.l.b16 %v176
      %v444 = vunpack.c.l.b16 %v177
      %v445 = vunpack.c.l.b16 %v178
      %v446 = vunpack.c.l.b16 %v179
      %v447 = vunpack.c.l.b16 %v180
      %v448 = vunpack.c.l.b16 %v181
      %v449 = vunpack.c.l.b16 %v182
      %v450 = vunpack.c.l.b16 %v183
      %v451 = vunpack.c.l.b16 %v184
      %v452 = vunpack.c.l.b16 %v185
      %v453 = vunpack.c.l.b16 %v186
      %v454 = vunpack.c.l.b16 %v187
      %v455 = vunpack.c.l.b16 %v188
      %v456 = vunpack.c.l.b16 %v189
      %v457 = vunpack.c.l.b16 %v190
      %v458 = vunpack.c.l.b16 %v191
      %v459 = vunpack.c.l.b16 %v192
      %v460 = vunpack.c.l.b16 %v193
      %v461 = vunpack.c.l.b16 %v194
      %v462 = vunpack.c.l.b16 %v195
      %v463 = vunpack.c.l.b16 %v196
      %v464 = vunpack.c.l.b16 %v197
      %v465 = vunpack.c.l.b16 %v198
      %v466 = vunpack.c.l.b16 %v199
      %v467 = vunpack.c.l.b16 %v200
      %v468 = vunpack.c.l.b16 %v201
      %v469 = vunpack.c.l.b16 %v202
      %v470 = vunpack.c.l.b16 %v203
      %v471 = vunpack.c.l.b16 %v204
      %v472 = vunpack.c.l.b16 %v205
      %v473 = vunpack.c.l.b16 %v206
      %v474 = vunpack.c.l.b16 %v207
      %v475 = vunpack.c.l.b16 %v208
      %v476 = vunpack.c.l.b16 %v209
      %v477 = vunpack.c.l.b16 %v210
      %v478 = vunpack.c.l.b16 %v211
      %v479 = vunpack.c.l.b16 %v212
      %v480 = vunpack.c.l.b16 %v213
      %v481 = vunpack.c.l.b16 %v214
      %v482 = vunpack.c.l.b16 %v215
      %v483 = vunpack.c.l.b16 %v216
      %v484 = vunpack.c.l.b16 %v217
      %v485 = vunpack.c.l.b16 %v218
      %v486 = vunpack.c.l.b16 %v219
      %v487 = vunpack.c.l.b16 %v220
      %v488 = vunpack.c.l.b16 %v221
      %v489 = vunpack.c.l.b16 %v222
      %v490 = vunpack.c.l.b16 %v223
      %v491 = vunpack.c.l.b16 %v224
      %v492 = vunpack.c.l.b16 %v225
      %v493 = vunpack.c.l.b16 %v226
      %v494 = vunpack.c.l.b16 %v227
      %v495 = vunpack.c.l.b16 %v228
      %v496 = vunpack.c.l.b16 %v229
      %v497 = vunpack.c.l.b16 %v230
      %v498 = vunpack.c.l.b16 %v231
      %v499 = vunpack.c.l.b16 %v232
      %v500 = vunpack.c.l.b16 %v233
      %v501 = vunpack.c.l.b16 %v234
      %v502 = vunpack.c.l.b16 %v235
      %v503 = vunpack.c.l.b16 %v236
      %v504 = vunpack.c.l.b16 %v237
      %v505 = vunpack.c.l.b16 %v238
      %v506 = vunpack.c.l.b16 %v239
      %v507 = vunpack.c.l.b16 %v240
      %v508 = vunpack.c.l.b16 %v241
      %v509 = vunpack.c.l.b16 %v242
      %v510 = vunpack.c.l.b16 %v243
      %v511 = vunpack.c.l.b16 %v244
      %v512 = vunpack.c.l.b16 %v245
      %v513 = vunpack.c.l.b16 %v246
      %v514 = vunpack.c.l.b16 %v247
      %v515 = vunpack.c.l.b16 %v248
      %v516 = vunpack.c.l.b16 %v249
      %v517 = vunpack.c.l.b16 %v250
      %v518 = vunpack.c.l.b16 %v251
      %v519 = vunpack.c.l.b16 %v252
      %v520 = vunpack.c.l.b16 %v253
      %v521 = vunpack.c.l.b16 %v254
      %v522 = vunpack.c.l.b16 %v255
      %v523 = vunpack.c.l.b16 %v256
      %v524 = vunpack.c.l.b16 %v257
      %v525 = vunpack.c.l.b16 %v258
      %v526 = vunpack.c.l.b16 %v259
      %v527 = vunpack.c.l.b16 %v260
      %v528 = vunpack.c.l.b16 %v261
      %v529 = vunpack.c.l.b16 %v262
      %v530 = vunpack.c.l.b16 %v263
      %v531 = vunpack.c.l.b16 %v264
      %v532 = vunpack.c.l.b16 %v265
      %v533 = vunpack.c.l.b16 %v266
      %v534 = vunpack.c.l.b16 %v267
      %v535 = vunpack.c.l.b16 %v268
      %v536 = vunpack.c.l.b16 %v269
      %v537 = vunpack.c.l.b16 %v270
      %v538 = vunpack.c.l.b16 %v271
      %v539 = vunpack.c.l.b16 %v272
      %v540 = vunpack.c.l.b16 %v273
      %v541 = vunpack.c.l.b16 %v274
      %v542 = vunpack.c.l.b16 %v275
      %v543 = vunpack.c.l.b16 %v276
      %v544 = vunpack.c.l.b16 %v277
      %v545 = vunpack.c.l.b16 %v278
      %v546 = vunpack.c.l.b16 %v279
      %v547 = vunpack.c.l.b16 %v280
      %v548 = vunpack.c.l.b16 %v281
      %v549 = vunpack.c.l.b16 %v282
      %v550 = vunpack.c.l.b16 %v283
      %v551 = vunpack.c.l.b16 %v284
      %v552 = vunpack.c.l.b16 %v285
      %v553 = vunpack.c.l.b16 %v286
      %v554 = vunpack.c.l.b16 %v287
      %v555 = vunpack.c.l.b16 %v288
      %v556 = vunpack.c.l.b16 %v289
      %v557 = vunpack.c.l.b16 %v290
      %v558 = vunpack.c.l.b16 %v291
      %v559 = vunpack.c.l.b16 %v292
      %v560 = vunpack.c.l.b16 %v293
      %v561 = vunpack.c.l.b16 %v294
      %v562 = vunpack.c.l.b16 %v295
      %v563 = vunpack.c.l.b16 %v296
      %v564 = vunpack.c.l.b16 %v297
      %v565 = vunpack.c.l.b16 %v298
      %v566 = vunpack.c.l.b16 %v299
      %v567 = vunpack.c.l.b16 %v300
      %v568 = vunpack.c.l.b16 %v301
      %v569 = vunpack.c.l.b16 %v302
      %v570 = vpack.c.b16 %v443, %v442
      %v571 = vpack.c.b16 %v445, %v444
      %v572 = vpack.c.b16 %v447, %v446
      %v573 = vpack.c.b16 %v449, %v448
      %v574 = vpack.c.b16 %v451, %v450
      %v575 = vpack.c.b16 %v453, %v452
      %v576 = vpack.c.b16 %v455, %v454
      %v577 = vpack.c.b16 %v457, %v456
      %v578 = vpack.c.b16 %v459, %v458
      %v579 = vpack.c.b16 %v461, %v460
      %v580 = vpack.c.b16 %v463, %v462
      %v581 = vpack.c.b16 %v465, %v464
      %v582 = vpack.c.b16 %v467, %v466
      %v583 = vpack.c.b16 %v469, %v468
      %v584 = vpack.c.b16 %v471, %v470
      %v585 = vpack.c.b16 %v473, %v472
      %v586 = vpack.c.b16 %v475, %v474
      %v587 = vpack.c.b16 %v477, %v476
      %v588 = vpack.c.b16 %v479, %v478
      %v589 = vpack.c.b16 %v481, %v480
      %v590 = vpack.c.b16 %v483, %v482
      %v591 = vpack.c.b16 %v485, %v484
      %v592 = vpack.c.b16 %v487, %v486
      %v593 = vpack.c.b16 %v489, %v488
      %v594 = vpack.c.b16 %v491, %v490
      %v595 = vpack.c.b16 %v493, %v492
      %v596 = vpack.c.b16 %v495, %v494
      %v597 = vpack.c.b16 %v497, %v496
      %v598 = vpack.c.b16 %v499, %v498
      %v599 = vpack.c.b16 %v501, %v500
      %v600 = vpack.c.b16 %v503, %v502
      %v601 = vpack.c.b16 %v505, %v504
      %v602 = vpack.c.b16 %v507, %v506
      %v603 = vpack.c.b16 %v509, %v508
      %v604 = vpack.c.b16 %v511, %v510
      %v605 = vpack.c.b16 %v513, %v512
      %v606 = vpack.c.b16 %v515, %v514
      %v607 = vpack.c.b16 %v517, %v516
      %v608 = vpack.c.b16 %v519, %v518
      %v609 = vpack.c.b16 %v521, %v520
      %v610 = vpack.c.b16 %v523, %v522
      %v611 = vpack.c.b16 %v525, %v524
      %v612 = vpack.c.b16 %v527, %v526
      %v613 = vpack.c.b16 %v529, %v528
      %v614 = vpack.c.b16 %v531, %v530
      %v615 = vpack.c.b16 %v533, %v532
      %v616 = vpack.c.b16 %v535, %v534
      %v617 = vpack.c.b16 %v537, %v536
      %v618 = vpack.c.b16 %v539, %v538
      %v619 = vpack.c.b16 %v541, %v540
      %v620 = vpack.c.b16 %v543, %v542
      %v621 = vpack.c.b16 %v545, %v544
      %v622 = vpack.c.b16 %v547, %v546
      %v623 = vpack.c.b16 %v549, %v548
      %v624 = vpack.c.b16 %v551, %v550
      %v625 = vpack.c.b16 %v553, %v552
      %v626 = vpack.c.b16 %v555, %v554
      %v627 = vpack.c.b16 %v557, %v556
      %v628 = vpack.c.b16 %v559, %v558
      %v629 = vpack.c.b16 %v561, %v560
      %v630 = vpack.c.b16 %v563, %v562
      %v631 = vpack.c.b16 %v565, %v564
      %v632 = vpack.c.b16 %v567, %v566
      %v633 = vpack.c.b16 %v569, %v568
      %v638 = vunpack.c.l.b16 %v303
      %v639 = vunpack.c.l.b16 %v304
      %v640 = vunpack.c.l.b16 %v305
      %v641 = vunpack.c.l.b16 %v306
      %v642 = vpack.c.b16 %v639, %v638
      %v643 = vpack.c.b16 %v641, %v640
      %vm645 = vcmask 203776
      %v647 = vsel %vm645, %v570, 0
      %v650 = vsel %vm645, %v571, 0
      %v653 = vsel %vm645, %v572, 0
      %v656 = vsel %vm645, %v573, 0
      %v659 = vsel %vm645, %v574, 0
      %v662 = vsel %vm645, %v575, 0
      %v665 = vsel %vm645, %v576, 0
      %v668 = vsel %vm645, %v577, 0
      %v671 = vsel %vm645, %v578, 0
      %v674 = vsel %vm645, %v579, 0
      %v677 = vsel %vm645, %v580, 0
      %v680 = vsel %vm645, %v581, 0
      %v683 = vsel %vm645, %v582, 0
      %v686 = vsel %vm645, %v583, 0
      %v689 = vsel %vm645, %v584, 0
      %v692 = vsel %vm645, %v585, 0
      %v695 = vsel %vm645, %v586, 0
      %v698 = vsel %vm645, %v587, 0
      %v701 = vsel %vm645, %v588, 0
      %v704 = vsel %vm645, %v589, 0
      %v707 = vsel %vm645, %v590, 0
      %v710 = vsel %vm645, %v591, 0
      %v713 = vsel %vm645, %v592, 0
      %v716 = vsel %vm645, %v593, 0
      %v719 = vsel %vm645, %v594, 0
      %v722 = vsel %vm645, %v595, 0
      %v725 = vsel %vm645, %v596, 0
      %v728 = vsel %vm645, %v597, 0
      %v731 = vsel %vm645, %v598, 0
      %v734 = vsel %vm645, %v599, 0
      %v737 = vsel %vm645, %v600, 0
      %v740 = vsel %vm645, %v601, 0
      %v743 = vsel %vm645, %v602, 0
      %v746 = vsel %vm645, %v603, 0
      %v749 = vsel %vm645, %v604, 0
      %v752 = vsel %vm645, %v605, 0
      %v755 = vsel %vm645, %v606, 0
      %v758 = vsel %vm645, %v607, 0
      %v761 = vsel %vm645, %v608, 0
      %v764 = vsel %vm645, %v609, 0
      %v767 = vsel %vm645, %v610, 0
      %v770 = vsel %vm645, %v611, 0
      %v773 = vsel %vm645, %v612, 0
      %v776 = vsel %vm645, %v613, 0
      %v779 = vsel %vm645, %v614, 0
      %v782 = vsel %vm645, %v615, 0
      %v785 = vsel %vm645, %v616, 0
      %v788 = vsel %vm645, %v617, 0
      %v791 = vsel %vm645, %v618, 0
      %v794 = vsel %vm645, %v619, 0
      %v797 = vsel %vm645, %v620, 0
      %v800 = vsel %vm645, %v621, 0
      %v803 = vsel %vm645, %v622, 0
      %v806 = vsel %vm645, %v623, 0
      %v809 = vsel %vm645, %v624, 0
      %v812 = vsel %vm645, %v625, 0
      %v815 = vsel %vm645, %v626, 0
      %v818 = vsel %vm645, %v627, 0
      %v821 = vsel %vm645, %v628, 0
      %v824 = vsel %vm645, %v629, 0
      %v827 = vsel %vm645, %v630, 0
      %v830 = vsel %vm645, %v631, 0
      %v833 = vsel %vm645, %v632, 0
      %v836 = vsel %vm645, %v633, 0
      %vm838 = vcmask 1043456
      %vm839 = vcmask 1044480
      %v840 = vsel %vm838, 4294967295, 65535
      %v841 = vsel %vm839, %v840, 0
      %v843 = vand.u32 %v643, %v841
      %845 = vmatprep.subr.bf16.mxu0 0
      %846 = vmatpush1.bf16.msra.mxu0 0
      %847 = vmatprep.subr.bf16.mxu0 0
      %848 = vmatpush1.bf16.msra.mxu0 0
      %849 = vmatprep.subr.bf16.mxu0 0
      %850 = vmatpush1.bf16.msra.mxu0 0
      %851 = vmatprep.subr.bf16.mxu0 0
      %852 = vmatpush1.bf16.msra.mxu0 0
      %853 = vmatprep.subr.bf16.mxu0 0
      %854 = vmatpush1.bf16.msra.mxu0 0
      %855 = vmatprep.subr.bf16.mxu0 0
      %856 = vmatpush1.bf16.msra.mxu0 0
      %857 = vmatprep.subr.bf16.mxu0 0
      %858 = vmatpush1.bf16.msra.mxu0 %v843
      %859 = vmatprep.subr.bf16.mxu0 0
      %860 = vmatpush1.bf16.msra.mxu0 %v642
      %861 = vmatprep.subr.bf16.mxu0 0
      %862 = vmatpush2.bf16.msra.mxu0 0
      %863 = vmatprep.subr.bf16.mxu0 0
      %864 = vmatpush2.bf16.msra.mxu0 0
      %865 = vmatprep.subr.bf16.mxu0 0
      %866 = vmatpush2.bf16.msra.mxu0 0
      %867 = vmatprep.subr.bf16.mxu0 0
      %868 = vmatpush2.bf16.msra.mxu0 0
      %869 = vmatprep.subr.bf16.mxu0 0
      %870 = vmatpush2.bf16.msra.mxu0 0
      %871 = vmatprep.subr.bf16.mxu0 0
      %872 = vmatpush2.bf16.msra.mxu0 0
      %873 = vmatprep.subr.bf16.mxu0 0
      %874 = vmatpush2.bf16.msra.mxu0 0
      %875 = vmatprep.subr.bf16.mxu0 0
      %876 = vmatpush2.bf16.msra.mxu0 0
      %877 = vmatprep.mubr.bf16.mxu0 0
      %878 = vmatmul.mubr.bf16.gmra.mxu0 %v647
      %v879 = vpop.f32.mrf.mxu0
      %v880 = vadd.f32 %v312, %v879
      %v881 = vpop.f32.mrf.mxu0
      %v882 = vpop.f32.mrf.mxu0
      %v883 = vadd.f32 %v312, %v882
      %v884 = vpop.f32.mrf.mxu0
      %885 = vmatprep.mubr.bf16.mxu0 0
      %886 = vmatmul.mubr.bf16.gmra.mxu0 %v650
      %v887 = vpop.f32.mrf.mxu0
      %v888 = vadd.f32 %v312, %v887
      %v889 = vpop.f32.mrf.mxu0
      %v890 = vpop.f32.mrf.mxu0
      %v891 = vadd.f32 %v312, %v890
      %v892 = vpop.f32.mrf.mxu0
      %893 = vmatprep.mubr.bf16.mxu0 0
      %894 = vmatmul.mubr.bf16.gmra.mxu0 %v653
      %v895 = vpop.f32.mrf.mxu0
      %v896 = vadd.f32 %v312, %v895
      %v897 = vpop.f32.mrf.mxu0
      %v898 = vpop.f32.mrf.mxu0
      %v899 = vadd.f32 %v312, %v898
      %v900 = vpop.f32.mrf.mxu0
      %901 = vmatprep.mubr.bf16.mxu0 0
      %902 = vmatmul.mubr.bf16.gmra.mxu0 %v656
      %v903 = vpop.f32.mrf.mxu0
      %v904 = vadd.f32 %v312, %v903
      %v905 = vpop.f32.mrf.mxu0
      %v906 = vpop.f32.mrf.mxu0
      %v907 = vadd.f32 %v312, %v906
      %v908 = vpop.f32.mrf.mxu0
      %909 = vmatprep.mubr.bf16.mxu0 0
      %910 = vmatmul.mubr.bf16.gmra.mxu0 %v659
      %v911 = vpop.f32.mrf.mxu0
      %v912 = vadd.f32 %v312, %v911
      %v913 = vpop.f32.mrf.mxu0
      %v914 = vpop.f32.mrf.mxu0
      %v915 = vadd.f32 %v312, %v914
      %v916 = vpop.f32.mrf.mxu0
      %917 = vmatprep.mubr.bf16.mxu0 0
      %918 = vmatmul.mubr.bf16.gmra.mxu0 %v662
      %v919 = vpop.f32.mrf.mxu0
      %v920 = vadd.f32 %v312, %v919
      %v921 = vpop.f32.mrf.mxu0
      %v922 = vpop.f32.mrf.mxu0
      %v923 = vadd.f32 %v312, %v922
      %v924 = vpop.f32.mrf.mxu0
      %925 = vmatprep.mubr.bf16.mxu0 0
      %926 = vmatmul.mubr.bf16.gmra.mxu0 %v665
      %v927 = vpop.f32.mrf.mxu0
      %v928 = vadd.f32 %v312, %v927
      %v929 = vpop.f32.mrf.mxu0
      %v930 = vpop.f32.mrf.mxu0
      %v931 = vadd.f32 %v312, %v930
      %v932 = vpop.f32.mrf.mxu0
      %933 = vmatprep.mubr.bf16.mxu0 0
      %934 = vmatmul.mubr.bf16.gmra.mxu0 %v668
      %v935 = vpop.f32.mrf.mxu0
      %v936 = vadd.f32 %v312, %v935
      %v937 = vpop.f32.mrf.mxu0
      %v938 = vpop.f32.mrf.mxu0
      %v939 = vadd.f32 %v312, %v938
      %v940 = vpop.f32.mrf.mxu0
      %941 = vmatprep.mubr.bf16.mxu0 0
      %942 = vmatmul.mubr.bf16.gmra.mxu0 %v671
      %v943 = vpop.f32.mrf.mxu0
      %v944 = vadd.f32 %v312, %v943
      %v945 = vpop.f32.mrf.mxu0
      %v946 = vpop.f32.mrf.mxu0
      %v947 = vadd.f32 %v312, %v946
      %v948 = vpop.f32.mrf.mxu0
      %949 = vmatprep.mubr.bf16.mxu0 0
      %950 = vmatmul.mubr.bf16.gmra.mxu0 %v674
      %v951 = vpop.f32.mrf.mxu0
      %v952 = vadd.f32 %v312, %v951
      %v953 = vpop.f32.mrf.mxu0
      %v954 = vpop.f32.mrf.mxu0
      %v955 = vadd.f32 %v312, %v954
      %v956 = vpop.f32.mrf.mxu0
      %957 = vmatprep.mubr.bf16.mxu0 0
      %958 = vmatmul.mubr.bf16.gmra.mxu0 %v677
      %v959 = vpop.f32.mrf.mxu0
      %v960 = vadd.f32 %v312, %v959
      %v961 = vpop.f32.mrf.mxu0
      %v962 = vpop.f32.mrf.mxu0
      %v963 = vadd.f32 %v312, %v962
      %v964 = vpop.f32.mrf.mxu0
      %965 = vmatprep.mubr.bf16.mxu0 0
      %966 = vmatmul.mubr.bf16.gmra.mxu0 %v680
      %v967 = vpop.f32.mrf.mxu0
      %v968 = vadd.f32 %v312, %v967
      %v969 = vpop.f32.mrf.mxu0
      %v970 = vpop.f32.mrf.mxu0
      %v971 = vadd.f32 %v312, %v970
      %v972 = vpop.f32.mrf.mxu0
      %973 = vmatprep.mubr.bf16.mxu0 0
      %974 = vmatmul.mubr.bf16.gmra.mxu0 %v683
      %v975 = vpop.f32.mrf.mxu0
      %v976 = vadd.f32 %v312, %v975
      %v977 = vpop.f32.mrf.mxu0
      %v978 = vpop.f32.mrf.mxu0
      %v979 = vadd.f32 %v312, %v978
      %v980 = vpop.f32.mrf.mxu0
      %981 = vmatprep.mubr.bf16.mxu0 0
      %982 = vmatmul.mubr.bf16.gmra.mxu0 %v686
      %v983 = vpop.f32.mrf.mxu0
      %v984 = vadd.f32 %v312, %v983
      %v985 = vpop.f32.mrf.mxu0
      %v986 = vpop.f32.mrf.mxu0
      %v987 = vadd.f32 %v312, %v986
      %v988 = vpop.f32.mrf.mxu0
      %989 = vmatprep.mubr.bf16.mxu0 0
      %990 = vmatmul.mubr.bf16.gmra.mxu0 %v689
      %v991 = vpop.f32.mrf.mxu0
      %v992 = vadd.f32 %v312, %v991
      %v993 = vpop.f32.mrf.mxu0
      %v994 = vpop.f32.mrf.mxu0
      %v995 = vadd.f32 %v312, %v994
      %v996 = vpop.f32.mrf.mxu0
      %997 = vmatprep.mubr.bf16.mxu0 0
      %998 = vmatmul.mubr.bf16.gmra.mxu0 %v692
      %v999 = vpop.f32.mrf.mxu0
      %v1000 = vadd.f32 %v312, %v999
      %v1001 = vpop.f32.mrf.mxu0
      %v1002 = vpop.f32.mrf.mxu0
      %v1003 = vadd.f32 %v312, %v1002
      %v1004 = vpop.f32.mrf.mxu0
      %1005 = vmatprep.mubr.bf16.mxu0 0
      %1006 = vmatmul.mubr.bf16.gmra.mxu0 %v695
      %v1007 = vpop.f32.mrf.mxu0
      %v1008 = vadd.f32 %v312, %v1007
      %v1009 = vpop.f32.mrf.mxu0
      %v1010 = vpop.f32.mrf.mxu0
      %v1011 = vadd.f32 %v312, %v1010
      %v1012 = vpop.f32.mrf.mxu0
      %1013 = vmatprep.mubr.bf16.mxu0 0
      %1014 = vmatmul.mubr.bf16.gmra.mxu0 %v698
      %v1015 = vpop.f32.mrf.mxu0
      %v1016 = vadd.f32 %v312, %v1015
      %v1017 = vpop.f32.mrf.mxu0
      %v1018 = vpop.f32.mrf.mxu0
      %v1019 = vadd.f32 %v312, %v1018
      %v1020 = vpop.f32.mrf.mxu0
      %1021 = vmatprep.mubr.bf16.mxu0 0
      %1022 = vmatmul.mubr.bf16.gmra.mxu0 %v701
      %v1023 = vpop.f32.mrf.mxu0
      %v1024 = vadd.f32 %v312, %v1023
      %v1025 = vpop.f32.mrf.mxu0
      %v1026 = vpop.f32.mrf.mxu0
      %v1027 = vadd.f32 %v312, %v1026
      %v1028 = vpop.f32.mrf.mxu0
      %1029 = vmatprep.mubr.bf16.mxu0 0
      %1030 = vmatmul.mubr.bf16.gmra.mxu0 %v704
      %v1031 = vpop.f32.mrf.mxu0
      %v1032 = vadd.f32 %v312, %v1031
      %v1033 = vpop.f32.mrf.mxu0
      %v1034 = vpop.f32.mrf.mxu0
      %v1035 = vadd.f32 %v312, %v1034
      %v1036 = vpop.f32.mrf.mxu0
      %1037 = vmatprep.mubr.bf16.mxu0 0
      %1038 = vmatmul.mubr.bf16.gmra.mxu0 %v707
      %v1039 = vpop.f32.mrf.mxu0
      %v1040 = vadd.f32 %v312, %v1039
      %v1041 = vpop.f32.mrf.mxu0
      %v1042 = vpop.f32.mrf.mxu0
      %v1043 = vadd.f32 %v312, %v1042
      %v1044 = vpop.f32.mrf.mxu0
      %1045 = vmatprep.mubr.bf16.mxu0 0
      %1046 = vmatmul.mubr.bf16.gmra.mxu0 %v710
      %v1047 = vpop.f32.mrf.mxu0
      %v1048 = vadd.f32 %v312, %v1047
      %v1049 = vpop.f32.mrf.mxu0
      %v1050 = vpop.f32.mrf.mxu0
      %v1051 = vadd.f32 %v312, %v1050
      %v1052 = vpop.f32.mrf.mxu0
      %1053 = vmatprep.mubr.bf16.mxu0 0
      %1054 = vmatmul.mubr.bf16.gmra.mxu0 %v713
      %v1055 = vpop.f32.mrf.mxu0
      %v1056 = vadd.f32 %v312, %v1055
      %v1057 = vpop.f32.mrf.mxu0
      %v1058 = vpop.f32.mrf.mxu0
      %v1059 = vadd.f32 %v312, %v1058
      %v1060 = vpop.f32.mrf.mxu0
      %1061 = vmatprep.mubr.bf16.mxu0 0
      %1062 = vmatmul.mubr.bf16.gmra.mxu0 %v716
      %v1063 = vpop.f32.mrf.mxu0
      %v1064 = vadd.f32 %v312, %v1063
      %v1065 = vpop.f32.mrf.mxu0
      %v1066 = vpop.f32.mrf.mxu0
      %v1067 = vadd.f32 %v312, %v1066
      %v1068 = vpop.f32.mrf.mxu0
      %1069 = vmatprep.mubr.bf16.mxu0 0
      %1070 = vmatmul.mubr.bf16.gmra.mxu0 %v719
      %v1071 = vpop.f32.mrf.mxu0
      %v1072 = vadd.f32 %v312, %v1071
      %v1073 = vpop.f32.mrf.mxu0
      %v1074 = vpop.f32.mrf.mxu0
      %v1075 = vadd.f32 %v312, %v1074
      %v1076 = vpop.f32.mrf.mxu0
      %1077 = vmatprep.mubr.bf16.mxu0 0
      %1078 = vmatmul.mubr.bf16.gmra.mxu0 %v722
      %v1079 = vpop.f32.mrf.mxu0
      %v1080 = vadd.f32 %v312, %v1079
      %v1081 = vpop.f32.mrf.mxu0
      %v1082 = vpop.f32.mrf.mxu0
      %v1083 = vadd.f32 %v312, %v1082
      %v1084 = vpop.f32.mrf.mxu0
      %1085 = vmatprep.mubr.bf16.mxu0 0
      %1086 = vmatmul.mubr.bf16.gmra.mxu0 %v725
      %v1087 = vpop.f32.mrf.mxu0
      %v1088 = vadd.f32 %v312, %v1087
      %v1089 = vpop.f32.mrf.mxu0
      %v1090 = vpop.f32.mrf.mxu0
      %v1091 = vadd.f32 %v312, %v1090
      %v1092 = vpop.f32.mrf.mxu0
      %1093 = vmatprep.mubr.bf16.mxu0 0
      %1094 = vmatmul.mubr.bf16.gmra.mxu0 %v728
      %v1095 = vpop.f32.mrf.mxu0
      %v1096 = vadd.f32 %v312, %v1095
      %v1097 = vpop.f32.mrf.mxu0
      %v1098 = vpop.f32.mrf.mxu0
      %v1099 = vadd.f32 %v312, %v1098
      %v1100 = vpop.f32.mrf.mxu0
      %1101 = vmatprep.mubr.bf16.mxu0 0
      %1102 = vmatmul.mubr.bf16.gmra.mxu0 %v731
      %v1103 = vpop.f32.mrf.mxu0
      %v1104 = vadd.f32 %v312, %v1103
      %v1105 = vpop.f32.mrf.mxu0
      %v1106 = vpop.f32.mrf.mxu0
      %v1107 = vadd.f32 %v312, %v1106
      %v1108 = vpop.f32.mrf.mxu0
      %1109 = vmatprep.mubr.bf16.mxu0 0
      %1110 = vmatmul.mubr.bf16.gmra.mxu0 %v734
      %v1111 = vpop.f32.mrf.mxu0
      %v1112 = vadd.f32 %v312, %v1111
      %v1113 = vpop.f32.mrf.mxu0
      %v1114 = vpop.f32.mrf.mxu0
      %v1115 = vadd.f32 %v312, %v1114
      %v1116 = vpop.f32.mrf.mxu0
      %1117 = vmatprep.mubr.bf16.mxu0 0
      %1118 = vmatmul.mubr.bf16.gmra.mxu0 %v737
      %v1119 = vpop.f32.mrf.mxu0
      %v1120 = vadd.f32 %v312, %v1119
      %v1121 = vpop.f32.mrf.mxu0
      %v1122 = vpop.f32.mrf.mxu0
      %v1123 = vadd.f32 %v312, %v1122
      %v1124 = vpop.f32.mrf.mxu0
      %1125 = vmatprep.mubr.bf16.mxu0 0
      %1126 = vmatmul.mubr.bf16.gmra.mxu0 %v740
      %v1127 = vpop.f32.mrf.mxu0
      %v1128 = vadd.f32 %v312, %v1127
      %v1129 = vpop.f32.mrf.mxu0
      %v1130 = vpop.f32.mrf.mxu0
      %v1131 = vadd.f32 %v312, %v1130
      %v1132 = vpop.f32.mrf.mxu0
      %1133 = vmatprep.mubr.bf16.mxu0 0
      %1134 = vmatmul.mubr.bf16.gmra.mxu0 %v743
      %v1135 = vpop.f32.mrf.mxu0
      %v1136 = vadd.f32 %v312, %v1135
      %v1137 = vpop.f32.mrf.mxu0
      %v1138 = vpop.f32.mrf.mxu0
      %v1139 = vadd.f32 %v312, %v1138
      %v1140 = vpop.f32.mrf.mxu0
      %1141 = vmatprep.mubr.bf16.mxu0 0
      %1142 = vmatmul.mubr.bf16.gmra.mxu0 %v746
      %v1143 = vpop.f32.mrf.mxu0
      %v1144 = vadd.f32 %v312, %v1143
      %v1145 = vpop.f32.mrf.mxu0
      %v1146 = vpop.f32.mrf.mxu0
      %v1147 = vadd.f32 %v312, %v1146
      %v1148 = vpop.f32.mrf.mxu0
      %1149 = vmatprep.mubr.bf16.mxu0 0
      %1150 = vmatmul.mubr.bf16.gmra.mxu0 %v749
      %v1151 = vpop.f32.mrf.mxu0
      %v1152 = vadd.f32 %v312, %v1151
      %v1153 = vpop.f32.mrf.mxu0
      %v1154 = vpop.f32.mrf.mxu0
      %v1155 = vadd.f32 %v312, %v1154
      %v1156 = vpop.f32.mrf.mxu0
      %1157 = vmatprep.mubr.bf16.mxu0 0
      %1158 = vmatmul.mubr.bf16.gmra.mxu0 %v752
      %v1159 = vpop.f32.mrf.mxu0
      %v1160 = vadd.f32 %v312, %v1159
      %v1161 = vpop.f32.mrf.mxu0
      %v1162 = vpop.f32.mrf.mxu0
      %v1163 = vadd.f32 %v312, %v1162
      %v1164 = vpop.f32.mrf.mxu0
      %1165 = vmatprep.mubr.bf16.mxu0 0
      %1166 = vmatmul.mubr.bf16.gmra.mxu0 %v755
      %v1167 = vpop.f32.mrf.mxu0
      %v1168 = vadd.f32 %v312, %v1167
      %v1169 = vpop.f32.mrf.mxu0
      %v1170 = vpop.f32.mrf.mxu0
      %v1171 = vadd.f32 %v312, %v1170
      %v1172 = vpop.f32.mrf.mxu0
      %1173 = vmatprep.mubr.bf16.mxu0 0
      %1174 = vmatmul.mubr.bf16.gmra.mxu0 %v758
      %v1175 = vpop.f32.mrf.mxu0
      %v1176 = vadd.f32 %v312, %v1175
      %v1177 = vpop.f32.mrf.mxu0
      %v1178 = vpop.f32.mrf.mxu0
      %v1179 = vadd.f32 %v312, %v1178
      %v1180 = vpop.f32.mrf.mxu0
      %1181 = vmatprep.mubr.bf16.mxu0 0
      %1182 = vmatmul.mubr.bf16.gmra.mxu0 %v761
      %v1183 = vpop.f32.mrf.mxu0
      %v1184 = vadd.f32 %v312, %v1183
      %v1185 = vpop.f32.mrf.mxu0
      %v1186 = vpop.f32.mrf.mxu0
      %v1187 = vadd.f32 %v312, %v1186
      %v1188 = vpop.f32.mrf.mxu0
      %1189 = vmatprep.mubr.bf16.mxu0 0
      %1190 = vmatmul.mubr.bf16.gmra.mxu0 %v764
      %v1191 = vpop.f32.mrf.mxu0
      %v1192 = vadd.f32 %v312, %v1191
      %v1193 = vpop.f32.mrf.mxu0
      %v1194 = vpop.f32.mrf.mxu0
      %v1195 = vadd.f32 %v312, %v1194
      %v1196 = vpop.f32.mrf.mxu0
      %1197 = vmatprep.mubr.bf16.mxu0 0
      %1198 = vmatmul.mubr.bf16.gmra.mxu0 %v767
      %v1199 = vpop.f32.mrf.mxu0
      %v1200 = vadd.f32 %v312, %v1199
      %v1201 = vpop.f32.mrf.mxu0
      %v1202 = vpop.f32.mrf.mxu0
      %v1203 = vadd.f32 %v312, %v1202
      %v1204 = vpop.f32.mrf.mxu0
      %1205 = vmatprep.mubr.bf16.mxu0 0
      %1206 = vmatmul.mubr.bf16.gmra.mxu0 %v770
      %v1207 = vpop.f32.mrf.mxu0
      %v1208 = vadd.f32 %v312, %v1207
      %v1209 = vpop.f32.mrf.mxu0
      %v1210 = vpop.f32.mrf.mxu0
      %v1211 = vadd.f32 %v312, %v1210
      %v1212 = vpop.f32.mrf.mxu0
      %1213 = vmatprep.mubr.bf16.mxu0 0
      %1214 = vmatmul.mubr.bf16.gmra.mxu0 %v773
      %v1215 = vpop.f32.mrf.mxu0
      %v1216 = vadd.f32 %v312, %v1215
      %v1217 = vpop.f32.mrf.mxu0
      %v1218 = vpop.f32.mrf.mxu0
      %v1219 = vadd.f32 %v312, %v1218
      %v1220 = vpop.f32.mrf.mxu0
      %1221 = vmatprep.mubr.bf16.mxu0 0
      %1222 = vmatmul.mubr.bf16.gmra.mxu0 %v776
      %v1223 = vpop.f32.mrf.mxu0
      %v1224 = vadd.f32 %v312, %v1223
      %v1225 = vpop.f32.mrf.mxu0
      %v1226 = vpop.f32.mrf.mxu0
      %v1227 = vadd.f32 %v312, %v1226
      %v1228 = vpop.f32.mrf.mxu0
      %1229 = vmatprep.mubr.bf16.mxu0 0
      %1230 = vmatmul.mubr.bf16.gmra.mxu0 %v779
      %v1231 = vpop.f32.mrf.mxu0
      %v1232 = vadd.f32 %v312, %v1231
      %v1233 = vpop.f32.mrf.mxu0
      %v1234 = vpop.f32.mrf.mxu0
      %v1235 = vadd.f32 %v312, %v1234
      %v1236 = vpop.f32.mrf.mxu0
      %1237 = vmatprep.mubr.bf16.mxu0 0
      %1238 = vmatmul.mubr.bf16.gmra.mxu0 %v782
      %v1239 = vpop.f32.mrf.mxu0
      %v1240 = vadd.f32 %v312, %v1239
      %v1241 = vpop.f32.mrf.mxu0
      %v1242 = vpop.f32.mrf.mxu0
      %v1243 = vadd.f32 %v312, %v1242
      %v1244 = vpop.f32.mrf.mxu0
      %1245 = vmatprep.mubr.bf16.mxu0 0
      %1246 = vmatmul.mubr.bf16.gmra.mxu0 %v785
      %v1247 = vpop.f32.mrf.mxu0
      %v1248 = vadd.f32 %v312, %v1247
      %v1249 = vpop.f32.mrf.mxu0
      %v1250 = vpop.f32.mrf.mxu0
      %v1251 = vadd.f32 %v312, %v1250
      %v1252 = vpop.f32.mrf.mxu0
      %1253 = vmatprep.mubr.bf16.mxu0 0
      %1254 = vmatmul.mubr.bf16.gmra.mxu0 %v788
      %v1255 = vpop.f32.mrf.mxu0
      %v1256 = vadd.f32 %v312, %v1255
      %v1257 = vpop.f32.mrf.mxu0
      %v1258 = vpop.f32.mrf.mxu0
      %v1259 = vadd.f32 %v312, %v1258
      %v1260 = vpop.f32.mrf.mxu0
      %1261 = vmatprep.mubr.bf16.mxu0 0
      %1262 = vmatmul.mubr.bf16.gmra.mxu0 %v791
      %v1263 = vpop.f32.mrf.mxu0
      %v1264 = vadd.f32 %v312, %v1263
      %v1265 = vpop.f32.mrf.mxu0
      %v1266 = vpop.f32.mrf.mxu0
      %v1267 = vadd.f32 %v312, %v1266
      %v1268 = vpop.f32.mrf.mxu0
      %1269 = vmatprep.mubr.bf16.mxu0 0
      %1270 = vmatmul.mubr.bf16.gmra.mxu0 %v794
      %v1271 = vpop.f32.mrf.mxu0
      %v1272 = vadd.f32 %v312, %v1271
      %v1273 = vpop.f32.mrf.mxu0
      %v1274 = vpop.f32.mrf.mxu0
      %v1275 = vadd.f32 %v312, %v1274
      %v1276 = vpop.f32.mrf.mxu0
      %1277 = vmatprep.mubr.bf16.mxu0 0
      %1278 = vmatmul.mubr.bf16.gmra.mxu0 %v797
      %v1279 = vpop.f32.mrf.mxu0
      %v1280 = vadd.f32 %v312, %v1279
      %v1281 = vpop.f32.mrf.mxu0
      %v1282 = vpop.f32.mrf.mxu0
      %v1283 = vadd.f32 %v312, %v1282
      %v1284 = vpop.f32.mrf.mxu0
      %1285 = vmatprep.mubr.bf16.mxu0 0
      %1286 = vmatmul.mubr.bf16.gmra.mxu0 %v800
      %v1287 = vpop.f32.mrf.mxu0
      %v1288 = vadd.f32 %v312, %v1287
      %v1289 = vpop.f32.mrf.mxu0
      %v1290 = vpop.f32.mrf.mxu0
      %v1291 = vadd.f32 %v312, %v1290
      %v1292 = vpop.f32.mrf.mxu0
      %1293 = vmatprep.mubr.bf16.mxu0 0
      %1294 = vmatmul.mubr.bf16.gmra.mxu0 %v803
      %v1295 = vpop.f32.mrf.mxu0
      %v1296 = vadd.f32 %v312, %v1295
      %v1297 = vpop.f32.mrf.mxu0
      %v1298 = vpop.f32.mrf.mxu0
      %v1299 = vadd.f32 %v312, %v1298
      %v1300 = vpop.f32.mrf.mxu0
      %1301 = vmatprep.mubr.bf16.mxu0 0
      %1302 = vmatmul.mubr.bf16.gmra.mxu0 %v806
      %v1303 = vpop.f32.mrf.mxu0
      %v1304 = vadd.f32 %v312, %v1303
      %v1305 = vpop.f32.mrf.mxu0
      %v1306 = vpop.f32.mrf.mxu0
      %v1307 = vadd.f32 %v312, %v1306
      %v1308 = vpop.f32.mrf.mxu0
      %1309 = vmatprep.mubr.bf16.mxu0 0
      %1310 = vmatmul.mubr.bf16.gmra.mxu0 %v809
      %v1311 = vpop.f32.mrf.mxu0
      %v1312 = vadd.f32 %v312, %v1311
      %v1313 = vpop.f32.mrf.mxu0
      %v1314 = vpop.f32.mrf.mxu0
      %v1315 = vadd.f32 %v312, %v1314
      %v1316 = vpop.f32.mrf.mxu0
      %1317 = vmatprep.mubr.bf16.mxu0 0
      %1318 = vmatmul.mubr.bf16.gmra.mxu0 %v812
      %v1319 = vpop.f32.mrf.mxu0
      %v1320 = vadd.f32 %v312, %v1319
      %v1321 = vpop.f32.mrf.mxu0
      %v1322 = vpop.f32.mrf.mxu0
      %v1323 = vadd.f32 %v312, %v1322
      %v1324 = vpop.f32.mrf.mxu0
      %1325 = vmatprep.mubr.bf16.mxu0 0
      %1326 = vmatmul.mubr.bf16.gmra.mxu0 %v815
      %v1327 = vpop.f32.mrf.mxu0
      %v1328 = vadd.f32 %v312, %v1327
      %v1329 = vpop.f32.mrf.mxu0
      %v1330 = vpop.f32.mrf.mxu0
      %v1331 = vadd.f32 %v312, %v1330
      %v1332 = vpop.f32.mrf.mxu0
      %1333 = vmatprep.mubr.bf16.mxu0 0
      %1334 = vmatmul.mubr.bf16.gmra.mxu0 %v818
      %v1335 = vpop.f32.mrf.mxu0
      %v1336 = vadd.f32 %v312, %v1335
      %v1337 = vpop.f32.mrf.mxu0
      %v1338 = vpop.f32.mrf.mxu0
      %v1339 = vadd.f32 %v312, %v1338
      %v1340 = vpop.f32.mrf.mxu0
      %1341 = vmatprep.mubr.bf16.mxu0 0
      %1342 = vmatmul.mubr.bf16.gmra.mxu0 %v821
      %v1343 = vpop.f32.mrf.mxu0
      %v1344 = vadd.f32 %v312, %v1343
      %v1345 = vpop.f32.mrf.mxu0
      %v1346 = vpop.f32.mrf.mxu0
      %v1347 = vadd.f32 %v312, %v1346
      %v1348 = vpop.f32.mrf.mxu0
      %1349 = vmatprep.mubr.bf16.mxu0 0
      %1350 = vmatmul.mubr.bf16.gmra.mxu0 %v824
      %v1351 = vpop.f32.mrf.mxu0
      %v1352 = vadd.f32 %v312, %v1351
      %v1353 = vpop.f32.mrf.mxu0
      %v1354 = vpop.f32.mrf.mxu0
      %v1355 = vadd.f32 %v312, %v1354
      %v1356 = vpop.f32.mrf.mxu0
      %1357 = vmatprep.mubr.bf16.mxu0 0
      %1358 = vmatmul.mubr.bf16.gmra.mxu0 %v827
      %v1359 = vpop.f32.mrf.mxu0
      %v1360 = vadd.f32 %v312, %v1359
      %v1361 = vpop.f32.mrf.mxu0
      %v1362 = vpop.f32.mrf.mxu0
      %v1363 = vadd.f32 %v312, %v1362
      %v1364 = vpop.f32.mrf.mxu0
      %1365 = vmatprep.mubr.bf16.mxu0 0
      %1366 = vmatmul.mubr.bf16.gmra.mxu0 %v830
      %v1367 = vpop.f32.mrf.mxu0
      %v1368 = vadd.f32 %v312, %v1367
      %v1369 = vpop.f32.mrf.mxu0
      %v1370 = vpop.f32.mrf.mxu0
      %v1371 = vadd.f32 %v312, %v1370
      %v1372 = vpop.f32.mrf.mxu0
      %1373 = vmatprep.mubr.bf16.mxu0 0
      %1374 = vmatmul.mubr.bf16.gmra.mxu0 %v833
      %v1375 = vpop.f32.mrf.mxu0
      %v1376 = vadd.f32 %v312, %v1375
      %v1377 = vpop.f32.mrf.mxu0
      %v1378 = vpop.f32.mrf.mxu0
      %v1379 = vadd.f32 %v312, %v1378
      %v1380 = vpop.f32.mrf.mxu0
      %1381 = vmatprep.mubr.bf16.mxu0 0
      %1382 = vmatmul.mubr.bf16.gmra.mxu0 %v836
      %v1383 = vpop.f32.mrf.mxu0
      %v1384 = vadd.f32 %v312, %v1383
      %v1385 = vpop.f32.mrf.mxu0
      %v1386 = vpop.f32.mrf.mxu0
      %v1387 = vadd.f32 %v312, %v1386
      %v1388 = vpop.f32.mrf.mxu0
      %1389 = vdwg.mxu0
      %v1390 = vpack.c.bf16 %v883, %v880
      %v1391 = vpack.c.bf16 %v891, %v888
      %v1392 = vpack.c.bf16 %v899, %v896
      %v1393 = vpack.c.bf16 %v907, %v904
      %v1394 = vpack.c.bf16 %v915, %v912
      %v1395 = vpack.c.bf16 %v923, %v920
      %v1396 = vpack.c.bf16 %v931, %v928
      %v1397 = vpack.c.bf16 %v939, %v936
      %v1398 = vpack.c.bf16 %v947, %v944
      %v1399 = vpack.c.bf16 %v955, %v952
      %v1400 = vpack.c.bf16 %v963, %v960
      %v1401 = vpack.c.bf16 %v971, %v968
      %v1402 = vpack.c.bf16 %v979, %v976
      %v1403 = vpack.c.bf16 %v987, %v984
      %v1404 = vpack.c.bf16 %v995, %v992
      %v1405 = vpack.c.bf16 %v1003, %v1000
      %v1406 = vpack.c.bf16 %v1011, %v1008
      %v1407 = vpack.c.bf16 %v1019, %v1016
      %v1408 = vpack.c.bf16 %v1027, %v1024
      %v1409 = vpack.c.bf16 %v1035, %v1032
      %v1410 = vpack.c.bf16 %v1043, %v1040
      %v1411 = vpack.c.bf16 %v1051, %v1048
      %v1412 = vpack.c.bf16 %v1059, %v1056
      %v1413 = vpack.c.bf16 %v1067, %v1064
      %v1414 = vpack.c.bf16 %v1075, %v1072
      %v1415 = vpack.c.bf16 %v1083, %v1080
      %v1416 = vpack.c.bf16 %v1091, %v1088
      %v1417 = vpack.c.bf16 %v1099, %v1096
      %v1418 = vpack.c.bf16 %v1107, %v1104
      %v1419 = vpack.c.bf16 %v1115, %v1112
      %v1420 = vpack.c.bf16 %v1123, %v1120
      %v1421 = vpack.c.bf16 %v1131, %v1128
      %v1422 = vpack.c.bf16 %v1139, %v1136
      %v1423 = vpack.c.bf16 %v1147, %v1144
      %v1424 = vpack.c.bf16 %v1155, %v1152
      %v1425 = vpack.c.bf16 %v1163, %v1160
      %v1426 = vpack.c.bf16 %v1171, %v1168
      %v1427 = vpack.c.bf16 %v1179, %v1176
      %v1428 = vpack.c.bf16 %v1187, %v1184
      %v1429 = vpack.c.bf16 %v1195, %v1192
      %v1430 = vpack.c.bf16 %v1203, %v1200
      %v1431 = vpack.c.bf16 %v1211, %v1208
      %v1432 = vpack.c.bf16 %v1219, %v1216
      %v1433 = vpack.c.bf16 %v1227, %v1224
      %v1434 = vpack.c.bf16 %v1235, %v1232
      %v1435 = vpack.c.bf16 %v1243, %v1240
      %v1436 = vpack.c.bf16 %v1251, %v1248
      %v1437 = vpack.c.bf16 %v1259, %v1256
      %v1438 = vpack.c.bf16 %v1267, %v1264
      %v1439 = vpack.c.bf16 %v1275, %v1272
      %v1440 = vpack.c.bf16 %v1283, %v1280
      %v1441 = vpack.c.bf16 %v1291, %v1288
      %v1442 = vpack.c.bf16 %v1299, %v1296
      %v1443 = vpack.c.bf16 %v1307, %v1304
      %v1444 = vpack.c.bf16 %v1315, %v1312
      %v1445 = vpack.c.bf16 %v1323, %v1320
      %v1446 = vpack.c.bf16 %v1331, %v1328
      %v1447 = vpack.c.bf16 %v1339, %v1336
      %v1448 = vpack.c.bf16 %v1347, %v1344
      %v1449 = vpack.c.bf16 %v1355, %v1352
      %v1450 = vpack.c.bf16 %v1363, %v1360
      %v1451 = vpack.c.bf16 %v1371, %v1368
      %v1452 = vpack.c.bf16 %v1379, %v1376
      %v1453 = vpack.c.bf16 %v1387, %v1384
      %v1518 = vunpack.c.l.b16 %v1390
      %v1519 = vunpack.c.h.b16 %v1390
      %v1520 = vunpack.c.l.b16 %v1391
      %v1521 = vunpack.c.h.b16 %v1391
      %v1522 = vunpack.c.l.b16 %v1392
      %v1523 = vunpack.c.h.b16 %v1392
      %v1524 = vunpack.c.l.b16 %v1393
      %v1525 = vunpack.c.h.b16 %v1393
      %v1526 = vunpack.c.l.b16 %v1394
      %v1527 = vunpack.c.h.b16 %v1394
      %v1528 = vunpack.c.l.b16 %v1395
      %v1529 = vunpack.c.h.b16 %v1395
      %v1530 = vunpack.c.l.b16 %v1396
      %v1531 = vunpack.c.h.b16 %v1396
      %v1532 = vunpack.c.l.b16 %v1397
      %v1533 = vunpack.c.h.b16 %v1397
      %v1534 = vunpack.c.l.b16 %v1398
      %v1535 = vunpack.c.h.b16 %v1398
      %v1536 = vunpack.c.l.b16 %v1399
      %v1537 = vunpack.c.h.b16 %v1399
      %v1538 = vunpack.c.l.b16 %v1400
      %v1539 = vunpack.c.h.b16 %v1400
      %v1540 = vunpack.c.l.b16 %v1401
      %v1541 = vunpack.c.h.b16 %v1401
      %v1542 = vunpack.c.l.b16 %v1402
      %v1543 = vunpack.c.h.b16 %v1402
      %v1544 = vunpack.c.l.b16 %v1403
      %v1545 = vunpack.c.h.b16 %v1403
      %v1546 = vunpack.c.l.b16 %v1404
      %v1547 = vunpack.c.h.b16 %v1404
      %v1548 = vunpack.c.l.b16 %v1405
      %v1549 = vunpack.c.h.b16 %v1405
      %v1550 = vunpack.c.l.b16 %v1406
      %v1551 = vunpack.c.h.b16 %v1406
      %v1552 = vunpack.c.l.b16 %v1407
      %v1553 = vunpack.c.h.b16 %v1407
      %v1554 = vunpack.c.l.b16 %v1408
      %v1555 = vunpack.c.h.b16 %v1408
      %v1556 = vunpack.c.l.b16 %v1409
      %v1557 = vunpack.c.h.b16 %v1409
      %v1558 = vunpack.c.l.b16 %v1410
      %v1559 = vunpack.c.h.b16 %v1410
      %v1560 = vunpack.c.l.b16 %v1411
      %v1561 = vunpack.c.h.b16 %v1411
      %v1562 = vunpack.c.l.b16 %v1412
      %v1563 = vunpack.c.h.b16 %v1412
      %v1564 = vunpack.c.l.b16 %v1413
      %v1565 = vunpack.c.h.b16 %v1413
      %v1566 = vunpack.c.l.b16 %v1414
      %v1567 = vunpack.c.h.b16 %v1414
      %v1568 = vunpack.c.l.b16 %v1415
      %v1569 = vunpack.c.h.b16 %v1415
      %v1570 = vunpack.c.l.b16 %v1416
      %v1571 = vunpack.c.h.b16 %v1416
      %v1572 = vunpack.c.l.b16 %v1417
      %v1573 = vunpack.c.h.b16 %v1417
      %v1574 = vunpack.c.l.b16 %v1418
      %v1575 = vunpack.c.h.b16 %v1418
      %v1576 = vunpack.c.l.b16 %v1419
      %v1577 = vunpack.c.h.b16 %v1419
      %v1578 = vunpack.c.l.b16 %v1420
      %v1579 = vunpack.c.h.b16 %v1420
      %v1580 = vunpack.c.l.b16 %v1421
      %v1581 = vunpack.c.h.b16 %v1421
      %v1582 = vunpack.c.l.b16 %v1422
      %v1583 = vunpack.c.h.b16 %v1422
      %v1584 = vunpack.c.l.b16 %v1423
      %v1585 = vunpack.c.h.b16 %v1423
      %v1586 = vunpack.c.l.b16 %v1424
      %v1587 = vunpack.c.h.b16 %v1424
      %v1588 = vunpack.c.l.b16 %v1425
      %v1589 = vunpack.c.h.b16 %v1425
      %v1590 = vunpack.c.l.b16 %v1426
      %v1591 = vunpack.c.h.b16 %v1426
      %v1592 = vunpack.c.l.b16 %v1427
      %v1593 = vunpack.c.h.b16 %v1427
      %v1594 = vunpack.c.l.b16 %v1428
      %v1595 = vunpack.c.h.b16 %v1428
      %v1596 = vunpack.c.l.b16 %v1429
      %v1597 = vunpack.c.h.b16 %v1429
      %v1598 = vunpack.c.l.b16 %v1430
      %v1599 = vunpack.c.h.b16 %v1430
      %v1600 = vunpack.c.l.b16 %v1431
      %v1601 = vunpack.c.h.b16 %v1431
      %v1602 = vunpack.c.l.b16 %v1432
      %v1603 = vunpack.c.h.b16 %v1432
      %v1604 = vunpack.c.l.b16 %v1433
      %v1605 = vunpack.c.h.b16 %v1433
      %v1606 = vunpack.c.l.b16 %v1434
      %v1607 = vunpack.c.h.b16 %v1434
      %v1608 = vunpack.c.l.b16 %v1435
      %v1609 = vunpack.c.h.b16 %v1435
      %v1610 = vunpack.c.l.b16 %v1436
      %v1611 = vunpack.c.h.b16 %v1436
      %v1612 = vunpack.c.l.b16 %v1437
      %v1613 = vunpack.c.h.b16 %v1437
      %v1614 = vunpack.c.l.b16 %v1438
      %v1615 = vunpack.c.h.b16 %v1438
      %v1616 = vunpack.c.l.b16 %v1439
      %v1617 = vunpack.c.h.b16 %v1439
      %v1618 = vunpack.c.l.b16 %v1440
      %v1619 = vunpack.c.h.b16 %v1440
      %v1620 = vunpack.c.l.b16 %v1441
      %v1621 = vunpack.c.h.b16 %v1441
      %v1622 = vunpack.c.l.b16 %v1442
      %v1623 = vunpack.c.h.b16 %v1442
      %v1624 = vunpack.c.l.b16 %v1443
      %v1625 = vunpack.c.h.b16 %v1443
      %v1626 = vunpack.c.l.b16 %v1444
      %v1627 = vunpack.c.h.b16 %v1444
      %v1628 = vunpack.c.l.b16 %v1445
      %v1629 = vunpack.c.h.b16 %v1445
      %v1630 = vunpack.c.l.b16 %v1446
      %v1631 = vunpack.c.h.b16 %v1446
      %v1632 = vunpack.c.l.b16 %v1447
      %v1633 = vunpack.c.h.b16 %v1447
      %v1634 = vunpack.c.l.b16 %v1448
      %v1635 = vunpack.c.h.b16 %v1448
      %v1636 = vunpack.c.l.b16 %v1449
      %v1637 = vunpack.c.h.b16 %v1449
      %v1638 = vunpack.c.l.b16 %v1450
      %v1639 = vunpack.c.h.b16 %v1450
      %v1640 = vunpack.c.l.b16 %v1451
      %v1641 = vunpack.c.h.b16 %v1451
      %v1642 = vunpack.c.l.b16 %v1452
      %v1643 = vunpack.c.h.b16 %v1452
      %v1644 = vunpack.c.l.b16 %v1453
      %v1645 = vunpack.c.h.b16 %v1453
      %v1646 = vpack.c.b16 %v1518, %v1518
      %v1647 = vpack.c.b16 %v1519, %v1519
      %v1648 = vpack.c.b16 %v1520, %v1520
      %v1649 = vpack.c.b16 %v1521, %v1521
      %v1650 = vpack.c.b16 %v1522, %v1522
      %v1651 = vpack.c.b16 %v1523, %v1523
      %v1652 = vpack.c.b16 %v1524, %v1524
      %v1653 = vpack.c.b16 %v1525, %v1525
      %v1654 = vpack.c.b16 %v1526, %v1526
      %v1655 = vpack.c.b16 %v1527, %v1527
      %v1656 = vpack.c.b16 %v1528, %v1528
      %v1657 = vpack.c.b16 %v1529, %v1529
      %v1658 = vpack.c.b16 %v1530, %v1530
      %v1659 = vpack.c.b16 %v1531, %v1531
      %v1660 = vpack.c.b16 %v1532, %v1532
      %v1661 = vpack.c.b16 %v1533, %v1533
      %v1662 = vpack.c.b16 %v1534, %v1534
      %v1663 = vpack.c.b16 %v1535, %v1535
      %v1664 = vpack.c.b16 %v1536, %v1536
      %v1665 = vpack.c.b16 %v1537, %v1537
      %v1666 = vpack.c.b16 %v1538, %v1538
      %v1667 = vpack.c.b16 %v1539, %v1539
      %v1668 = vpack.c.b16 %v1540, %v1540
      %v1669 = vpack.c.b16 %v1541, %v1541
      %v1670 = vpack.c.b16 %v1542, %v1542
      %v1671 = vpack.c.b16 %v1543, %v1543
      %v1672 = vpack.c.b16 %v1544, %v1544
      %v1673 = vpack.c.b16 %v1545, %v1545
      %v1674 = vpack.c.b16 %v1546, %v1546
      %v1675 = vpack.c.b16 %v1547, %v1547
      %v1676 = vpack.c.b16 %v1548, %v1548
      %v1677 = vpack.c.b16 %v1549, %v1549
      %v1678 = vpack.c.b16 %v1550, %v1550
      %v1679 = vpack.c.b16 %v1551, %v1551
      %v1680 = vpack.c.b16 %v1552, %v1552
      %v1681 = vpack.c.b16 %v1553, %v1553
      %v1682 = vpack.c.b16 %v1554, %v1554
      %v1683 = vpack.c.b16 %v1555, %v1555
      %v1684 = vpack.c.b16 %v1556, %v1556
      %v1685 = vpack.c.b16 %v1557, %v1557
      %v1686 = vpack.c.b16 %v1558, %v1558
      %v1687 = vpack.c.b16 %v1559, %v1559
      %v1688 = vpack.c.b16 %v1560, %v1560
      %v1689 = vpack.c.b16 %v1561, %v1561
      %v1690 = vpack.c.b16 %v1562, %v1562
      %v1691 = vpack.c.b16 %v1563, %v1563
      %v1692 = vpack.c.b16 %v1564, %v1564
      %v1693 = vpack.c.b16 %v1565, %v1565
      %v1694 = vpack.c.b16 %v1566, %v1566
      %v1695 = vpack.c.b16 %v1567, %v1567
      %v1696 = vpack.c.b16 %v1568, %v1568
      %v1697 = vpack.c.b16 %v1569, %v1569
      %v1698 = vpack.c.b16 %v1570, %v1570
      %v1699 = vpack.c.b16 %v1571, %v1571
      %v1700 = vpack.c.b16 %v1572, %v1572
      %v1701 = vpack.c.b16 %v1573, %v1573
      %v1702 = vpack.c.b16 %v1574, %v1574
      %v1703 = vpack.c.b16 %v1575, %v1575
      %v1704 = vpack.c.b16 %v1576, %v1576
      %v1705 = vpack.c.b16 %v1577, %v1577
      %v1706 = vpack.c.b16 %v1578, %v1578
      %v1707 = vpack.c.b16 %v1579, %v1579
      %v1708 = vpack.c.b16 %v1580, %v1580
      %v1709 = vpack.c.b16 %v1581, %v1581
      %v1710 = vpack.c.b16 %v1582, %v1582
      %v1711 = vpack.c.b16 %v1583, %v1583
      %v1712 = vpack.c.b16 %v1584, %v1584
      %v1713 = vpack.c.b16 %v1585, %v1585
      %v1714 = vpack.c.b16 %v1586, %v1586
      %v1715 = vpack.c.b16 %v1587, %v1587
      %v1716 = vpack.c.b16 %v1588, %v1588
      %v1717 = vpack.c.b16 %v1589, %v1589
      %v1718 = vpack.c.b16 %v1590, %v1590
      %v1719 = vpack.c.b16 %v1591, %v1591
      %v1720 = vpack.c.b16 %v1592, %v1592
      %v1721 = vpack.c.b16 %v1593, %v1593
      %v1722 = vpack.c.b16 %v1594, %v1594
      %v1723 = vpack.c.b16 %v1595, %v1595
      %v1724 = vpack.c.b16 %v1596, %v1596
      %v1725 = vpack.c.b16 %v1597, %v1597
      %v1726 = vpack.c.b16 %v1598, %v1598
      %v1727 = vpack.c.b16 %v1599, %v1599
      %v1728 = vpack.c.b16 %v1600, %v1600
      %v1729 = vpack.c.b16 %v1601, %v1601
      %v1730 = vpack.c.b16 %v1602, %v1602
      %v1731 = vpack.c.b16 %v1603, %v1603
      %v1732 = vpack.c.b16 %v1604, %v1604
      %v1733 = vpack.c.b16 %v1605, %v1605
      %v1734 = vpack.c.b16 %v1606, %v1606
      %v1735 = vpack.c.b16 %v1607, %v1607
      %v1736 = vpack.c.b16 %v1608, %v1608
      %v1737 = vpack.c.b16 %v1609, %v1609
      %v1738 = vpack.c.b16 %v1610, %v1610
      %v1739 = vpack.c.b16 %v1611, %v1611
      %v1740 = vpack.c.b16 %v1612, %v1612
      %v1741 = vpack.c.b16 %v1613, %v1613
      %v1742 = vpack.c.b16 %v1614, %v1614
      %v1743 = vpack.c.b16 %v1615, %v1615
      %v1744 = vpack.c.b16 %v1616, %v1616
      %v1745 = vpack.c.b16 %v1617, %v1617
      %v1746 = vpack.c.b16 %v1618, %v1618
      %v1747 = vpack.c.b16 %v1619, %v1619
      %v1748 = vpack.c.b16 %v1620, %v1620
      %v1749 = vpack.c.b16 %v1621, %v1621
      %v1750 = vpack.c.b16 %v1622, %v1622
      %v1751 = vpack.c.b16 %v1623, %v1623
      %v1752 = vpack.c.b16 %v1624, %v1624
      %v1753 = vpack.c.b16 %v1625, %v1625
      %v1754 = vpack.c.b16 %v1626, %v1626
      %v1755 = vpack.c.b16 %v1627, %v1627
      %v1756 = vpack.c.b16 %v1628, %v1628
      %v1757 = vpack.c.b16 %v1629, %v1629
      %v1758 = vpack.c.b16 %v1630, %v1630
      %v1759 = vpack.c.b16 %v1631, %v1631
      %v1760 = vpack.c.b16 %v1632, %v1632
      %v1761 = vpack.c.b16 %v1633, %v1633
      %v1762 = vpack.c.b16 %v1634, %v1634
      %v1763 = vpack.c.b16 %v1635, %v1635
      %v1764 = vpack.c.b16 %v1636, %v1636
      %v1765 = vpack.c.b16 %v1637, %v1637
      %v1766 = vpack.c.b16 %v1638, %v1638
      %v1767 = vpack.c.b16 %v1639, %v1639
      %v1768 = vpack.c.b16 %v1640, %v1640
      %v1769 = vpack.c.b16 %v1641, %v1641
      %v1770 = vpack.c.b16 %v1642, %v1642
      %v1771 = vpack.c.b16 %v1643, %v1643
      %v1772 = vpack.c.b16 %v1644, %v1644
      %v1773 = vpack.c.b16 %v1645, %v1645
      %1902 = vst [vmem:[%s172] sm:$0xf] %v1646
      %1903 = vst [vmem:[%s172 + $0x4] sm:$0xf] %v1647
      %1904 = vst [vmem:[%s172 + $0x8] sm:$0xf] %v1648
      %1905 = vst [vmem:[%s172 + $0xc] sm:$0xf] %v1649
      %1906 = vst [vmem:[%s172 + $0x10] sm:$0xf] %v1650
      %1907 = vst [vmem:[%s172 + $0x14] sm:$0xf] %v1651
      %1908 = vst [vmem:[%s172 + $0x18] sm:$0xf] %v1652
      %1909 = vst [vmem:[%s172 + $0x1c] sm:$0xf] %v1653
      %1910 = vst [vmem:[%s172 + $0x20] sm:$0xf] %v1654
      %1911 = vst [vmem:[%s172 + $0x24] sm:$0xf] %v1655
      %1912 = vst [vmem:[%s172 + $0x28] sm:$0xf] %v1656
      %1913 = vst [vmem:[%s172 + $0x2c] sm:$0xf] %v1657
      %1914 = vst [vmem:[%s172 + $0x30] sm:$0xf] %v1658
      %1915 = vst [vmem:[%s172 + $0x34] sm:$0xf] %v1659
      %1916 = vst [vmem:[%s172 + $0x38] sm:$0xf] %v1660
      %1917 = vst [vmem:[%s172 + $0x3c] sm:$0xf] %v1661
      %1918 = vst [vmem:[%s172 + $0x40] sm:$0xf] %v1662
      %1919 = vst [vmem:[%s172 + $0x44] sm:$0xf] %v1663
      %1920 = vst [vmem:[%s172 + $0x48] sm:$0xf] %v1664
      %1921 = vst [vmem:[%s172 + $0x4c] sm:$0xf] %v1665
      %1922 = vst [vmem:[%s172 + $0x50] sm:$0xf] %v1666
      %1923 = vst [vmem:[%s172 + $0x54] sm:$0xf] %v1667
      %1924 = vst [vmem:[%s172 + $0x58] sm:$0xf] %v1668
      %1925 = vst [vmem:[%s172 + $0x5c] sm:$0xf] %v1669
      %1926 = vst [vmem:[%s172 + $0x60] sm:$0xf] %v1670
      %1927 = vst [vmem:[%s172 + $0x64] sm:$0xf] %v1671
      %1928 = vst [vmem:[%s172 + $0x68] sm:$0xf] %v1672
      %1929 = vst [vmem:[%s172 + $0x6c] sm:$0xf] %v1673
      %1930 = vst [vmem:[%s172 + $0x70] sm:$0xf] %v1674
      %1931 = vst [vmem:[%s172 + $0x74] sm:$0xf] %v1675
      %1932 = vst [vmem:[%s172 + $0x78] sm:$0xf] %v1676
      %1933 = vst [vmem:[%s172 + $0x7c] sm:$0xf] %v1677
      %1934 = vst [vmem:[%s172 + $0x80] sm:$0xf] %v1678
      %1935 = vst [vmem:[%s172 + $0x84] sm:$0xf] %v1679
      %1936 = vst [vmem:[%s172 + $0x88] sm:$0xf] %v1680
      %1937 = vst [vmem:[%s172 + $0x8c] sm:$0xf] %v1681
      %1938 = vst [vmem:[%s172 + $0x90] sm:$0xf] %v1682
      %1939 = vst [vmem:[%s172 + $0x94] sm:$0xf] %v1683
      %1940 = vst [vmem:[%s172 + $0x98] sm:$0xf] %v1684
      %1941 = vst [vmem:[%s172 + $0x9c] sm:$0xf] %v1685
      %1942 = vst [vmem:[%s172 + $0xa0] sm:$0xf] %v1686
      %1943 = vst [vmem:[%s172 + $0xa4] sm:$0xf] %v1687
      %1944 = vst [vmem:[%s172 + $0xa8] sm:$0xf] %v1688
      %1945 = vst [vmem:[%s172 + $0xac] sm:$0xf] %v1689
      %1946 = vst [vmem:[%s172 + $0xb0] sm:$0xf] %v1690
      %1947 = vst [vmem:[%s172 + $0xb4] sm:$0xf] %v1691
      %1948 = vst [vmem:[%s172 + $0xb8] sm:$0xf] %v1692
      %1949 = vst [vmem:[%s172 + $0xbc] sm:$0xf] %v1693
      %1950 = vst [vmem:[%s172 + $0xc0] sm:$0xf] %v1694
      %1951 = vst [vmem:[%s172 + $0xc4] sm:$0xf] %v1695
      %1952 = vst [vmem:[%s172 + $0xc8] sm:$0xf] %v1696
      %1953 = vst [vmem:[%s172 + $0xcc] sm:$0xf] %v1697
      %1954 = vst [vmem:[%s172 + $0xd0] sm:$0xf] %v1698
      %1955 = vst [vmem:[%s172 + $0xd4] sm:$0xf] %v1699
      %1956 = vst [vmem:[%s172 + $0xd8] sm:$0xf] %v1700
      %1957 = vst [vmem:[%s172 + $0xdc] sm:$0xf] %v1701
      %1958 = vst [vmem:[%s172 + $0xe0] sm:$0xf] %v1702
      %1959 = vst [vmem:[%s172 + $0xe4] sm:$0xf] %v1703
      %1960 = vst [vmem:[%s172 + $0xe8] sm:$0xf] %v1704
      %1961 = vst [vmem:[%s172 + $0xec] sm:$0xf] %v1705
      %1962 = vst [vmem:[%s172 + $0xf0] sm:$0xf] %v1706
      %1963 = vst [vmem:[%s172 + $0xf4] sm:$0xf] %v1707
      %1964 = vst [vmem:[%s172 + $0xf8] sm:$0xf] %v1708
      %1965 = vst [vmem:[%s172 + $0xfc] sm:$0xf] %v1709
      %1966 = vst [vmem:[%s172 + $0x100] sm:$0xf] %v1710
      %1967 = vst [vmem:[%s172 + $0x104] sm:$0xf] %v1711
      %1968 = vst [vmem:[%s172 + $0x108] sm:$0xf] %v1712
      %1969 = vst [vmem:[%s172 + $0x10c] sm:$0xf] %v1713
      %1970 = vst [vmem:[%s172 + $0x110] sm:$0xf] %v1714
      %1971 = vst [vmem:[%s172 + $0x114] sm:$0xf] %v1715
      %1972 = vst [vmem:[%s172 + $0x118] sm:$0xf] %v1716
      %1973 = vst [vmem:[%s172 + $0x11c] sm:$0xf] %v1717
      %1974 = vst [vmem:[%s172 + $0x120] sm:$0xf] %v1718
      %1975 = vst [vmem:[%s172 + $0x124] sm:$0xf] %v1719
      %1976 = vst [vmem:[%s172 + $0x128] sm:$0xf] %v1720
      %1977 = vst [vmem:[%s172 + $0x12c] sm:$0xf] %v1721
      %1978 = vst [vmem:[%s172 + $0x130] sm:$0xf] %v1722
      %1979 = vst [vmem:[%s172 + $0x134] sm:$0xf] %v1723
      %1980 = vst [vmem:[%s172 + $0x138] sm:$0xf] %v1724
      %1981 = vst [vmem:[%s172 + $0x13c] sm:$0xf] %v1725
      %1982 = vst [vmem:[%s172 + $0x140] sm:$0xf] %v1726
      %1983 = vst [vmem:[%s172 + $0x144] sm:$0xf] %v1727
      %1984 = vst [vmem:[%s172 + $0x148] sm:$0xf] %v1728
      %1985 = vst [vmem:[%s172 + $0x14c] sm:$0xf] %v1729
      %1986 = vst [vmem:[%s172 + $0x150] sm:$0xf] %v1730
      %1987 = vst [vmem:[%s172 + $0x154] sm:$0xf] %v1731
      %1988 = vst [vmem:[%s172 + $0x158] sm:$0xf] %v1732
      %1989 = vst [vmem:[%s172 + $0x15c] sm:$0xf] %v1733
      %1990 = vst [vmem:[%s172 + $0x160] sm:$0xf] %v1734
      %1991 = vst [vmem:[%s172 + $0x164] sm:$0xf] %v1735
      %1992 = vst [vmem:[%s172 + $0x168] sm:$0xf] %v1736
      %1993 = vst [vmem:[%s172 + $0x16c] sm:$0xf] %v1737
      %1994 = vst [vmem:[%s172 + $0x170] sm:$0xf] %v1738
      %1995 = vst [vmem:[%s172 + $0x174] sm:$0xf] %v1739
      %1996 = vst [vmem:[%s172 + $0x178] sm:$0xf] %v1740
      %1997 = vst [vmem:[%s172 + $0x17c] sm:$0xf] %v1741
      %1998 = vst [vmem:[%s172 + $0x180] sm:$0xf] %v1742
      %1999 = vst [vmem:[%s172 + $0x184] sm:$0xf] %v1743
      %2000 = vst [vmem:[%s172 + $0x188] sm:$0xf] %v1744
      %2001 = vst [vmem:[%s172 + $0x18c] sm:$0xf] %v1745
      %2002 = vst [vmem:[%s172 + $0x190] sm:$0xf] %v1746
      %2003 = vst [vmem:[%s172 + $0x194] sm:$0xf] %v1747
      %2004 = vst [vmem:[%s172 + $0x198] sm:$0xf] %v1748
      %2005 = vst [vmem:[%s172 + $0x19c] sm:$0xf] %v1749
      %2006 = vst [vmem:[%s172 + $0x1a0] sm:$0xf] %v1750
      %2007 = vst [vmem:[%s172 + $0x1a4] sm:$0xf] %v1751
      %2008 = vst [vmem:[%s172 + $0x1a8] sm:$0xf] %v1752
      %2009 = vst [vmem:[%s172 + $0x1ac] sm:$0xf] %v1753
      %2010 = vst [vmem:[%s172 + $0x1b0] sm:$0xf] %v1754
      %2011 = vst [vmem:[%s172 + $0x1b4] sm:$0xf] %v1755
      %2012 = vst [vmem:[%s172 + $0x1b8] sm:$0xf] %v1756
      %2013 = vst [vmem:[%s172 + $0x1bc] sm:$0xf] %v1757
      %2014 = vst [vmem:[%s172 + $0x1c0] sm:$0xf] %v1758
      %2015 = vst [vmem:[%s172 + $0x1c4] sm:$0xf] %v1759
      %2016 = vst [vmem:[%s172 + $0x1c8] sm:$0xf] %v1760
      %2017 = vst [vmem:[%s172 + $0x1cc] sm:$0xf] %v1761
      %2018 = vst [vmem:[%s172 + $0x1d0] sm:$0xf] %v1762
      %2019 = vst [vmem:[%s172 + $0x1d4] sm:$0xf] %v1763
      %2020 = vst [vmem:[%s172 + $0x1d8] sm:$0xf] %v1764
      %2021 = vst [vmem:[%s172 + $0x1dc] sm:$0xf] %v1765
      %2022 = vst [vmem:[%s172 + $0x1e0] sm:$0xf] %v1766
      %2023 = vst [vmem:[%s172 + $0x1e4] sm:$0xf] %v1767
      %2024 = vst [vmem:[%s172 + $0x1e8] sm:$0xf] %v1768
      %2025 = vst [vmem:[%s172 + $0x1ec] sm:$0xf] %v1769
      %2026 = vst [vmem:[%s172 + $0x1f0] sm:$0xf] %v1770
      %2027 = vst [vmem:[%s172 + $0x1f4] sm:$0xf] %v1771
      %2028 = vst [vmem:[%s172 + $0x1f8] sm:$0xf] %v1772
      %2029 = vst [vmem:[%s172 + $0x1fc] sm:$0xf] %v1773
      %s2030 = smul.u32 128, %s14
      %p2031 = scmp.lt.s32.totalorder %s2030, 255
      %s2032 = scalar_select %p2031, %s2030, 255
      %s2033 = smul.addr %s2032, 4
      %s2034 = scalar_lea.vmem %s3, %s2033
      // Predicated region
      $region33: #{simple_encoder_forward.4} parent=31 // pred_check
        %p2035 = pneg %p100
      $region34: #{simple_encoder_forward.4} parent=31 // pred_check_branch
        %2037 = sbr.rel (%p2035) target = $region36
      $region35: #{simple_encoder_forward.4} parent=31 // pred_region
        %s2038 = smul.u32 128, %s14
      $region36: #{simple_encoder_forward.4} parent=31 // pred_fallthru
        _
    $region32: #{simple_encoder_forward.4} parent=5 // pred_fallthru
      _
    %p2039 = scmp.le.s32.totalorder 2, %s9
    // Predicated region
    $region37: #{simple_encoder_forward.4} parent=5 // pred_check
      %p2040 = pneg %p2039
    $region38: #{simple_encoder_forward.4} parent=5 // pred_check_branch
      %2042 = sbr.rel (%p2040) target = $region40
    $region39: #{simple_encoder_forward.4} parent=5 // pred_region
      %s2043 = ssub.s32 %s9, 2
      // Predicated region
      $region41: #{simple_encoder_forward.4} parent=39 // pred_check
        %p2044 = pneg %p106
      $region42: #{simple_encoder_forward.4} parent=39 // pred_check_branch
        %2046 = sbr.rel (%p2044) target = $region44
      $region43: #{simple_encoder_forward.4} parent=39 // pred_region
        %s2047 = smul.u32 128, %s15
        %p2048 = scmp.lt.s32.totalorder %s2047, 255
        %s2049 = scalar_select %p2048, %s2047, 255
        %s2050 = smul.addr %s2049, 4
        %s2051 = scalar_lea.vmem %s3, %s2050
      $region44: #{simple_encoder_forward.4} parent=39 // pred_fallthru
        _
    $region40: #{simple_encoder_forward.4} parent=5 // pred_fallthru
      _
  $region6: #{simple_encoder_forward.4} parent=0 // loop_footer
    %s13 = sadd.s32 1, %s9
  $region7: #{simple_encoder_forward.4} parent=0 // loop_footer_branch
    %8 = sbr.rel target = $region3
  $region8: #{simple_encoder_forward.4} parent=0 // loop_exit
    _

// kernel: simple_encoder_forward.5
$region0: #{simple_encoder_forward.5}
  #allocation0 [shape = 'u32[]', space=smem, size = 0x4, offset = 0x4, fixed_abs, tag = 'smem constant byte address 0x4 - core index']
  #allocation1 [shape = 'u32[144,128]{1,0:T(1,128)}', space=vmem, size = 0x12000, scoped, tag = 'internal scratch']
  %s0 = inlined_call_operand.vmem [shape: bf16[128,200], index: 0, kind: input, shape index: {}]
  %s1 = inlined_call_operand.vmem [shape: bf16[200,128], index: 1, kind: input, shape index: {}]
  %s2 = inlined_call_operand.vmem [shape: f32[1,128], index: 2, kind: input, shape index: {}]
  %s3 = inlined_call_operand.vmem [shape: bf16[128,128], index: 3, kind: output, shape index: {}]
  %s4 = sld [smem:[#allocation0]]
  $region45: #{simple_encoder_forward.5} parent=0
    _
  %s6 = ssub.s32 1, %s4
  %s7 = scalar_select 0, %s6, %s4
  loop: start=0, step=1, limit=4
  $region2: #{simple_encoder_forward.5} parent=0 // loop_pre_header
    _
  $region3: #{simple_encoder_forward.5} parent=0 // loop_header
    %s9 = sphi 0, %s13
    %p10 = scmp.ge.s32.totalorder %s9, 4
    %s19 = sphi 0, %s21
    %s22 = sphi 0, %s19
    %s23 = sphi 0, %s22
    %s39 = sphi 0, %s23
    %s43 = sphi 0, %s43
    %s45 = sphi 0, %s43
    %s46 = sphi 0, %s45
    %s60 = sphi 0, %s46
    %s64 = sphi 0, %s64
    %s66 = sphi 0, %s64
    %s67 = sphi 0, %s66
    %s81 = sphi 0, %s67
    %s87 = sphi 0, %s89
    %s90 = sphi 0, %s87
    %s91 = sphi 0, %s90
    %s107 = sphi 0, %s91
  $region4: #{simple_encoder_forward.5} parent=0 // loop_header_branch
    %12 = sbr.rel (%p10) target = $region8
  $region5: #{simple_encoder_forward.5} parent=0 // loop_body
    %s14 = ssub.s32 %s9, 1
    %s15 = ssub.s32 %s9, 2
    %s16 = sadd.s32 %s9, 1
    %s17 = ssub.s32 %s9, %s16
    %p18 = scmp.eq.s32.totalorder %s17, 0
    %s20 = sadd.s32 %s19, 1
    %s21 = scalar_select %p18, %s19, %s20
    %p24 = pneg %p18
    %p25 = scmp.eq.s32.totalorder %s9, 1
    %p26 = por %p24, %p25
    %p27 = scmp.ne.s32.totalorder %s19, %s22
    %p28 = scmp.eq.s32.totalorder %s9, 0
    %p29 = por %p27, %p28
    %p30 = scmp.ne.s32.totalorder %s19, %s22
    %p31 = scmp.eq.s32.totalorder %s14, 1
    %p32 = por %p30, %p31
    %p33 = scmp.ne.s32.totalorder %s22, %s23
    %p34 = scmp.eq.s32.totalorder %s14, 0
    %p35 = por %p33, %p34
    %p36 = scmp.ne.s32.totalorder %s22, %s23
    %p37 = scmp.eq.s32.totalorder %s15, 1
    %p38 = por %p36, %p37
    %p40 = scmp.ne.s32.totalorder %s23, %s39
    %p41 = scmp.eq.s32.totalorder %s15, 0
    %p42 = por %p40, %p41
    %s44 = sadd.s32 %s43, 1
    %p47 = scmp.eq.s32.totalorder %s9, 1
    %p48 = scmp.ne.s32.totalorder %s43, %s45
    %p49 = scmp.eq.s32.totalorder %s9, 0
    %p50 = por %p48, %p49
    %p51 = scmp.ne.s32.totalorder %s43, %s45
    %p52 = scmp.eq.s32.totalorder %s14, 1
    %p53 = por %p51, %p52
    %p54 = scmp.ne.s32.totalorder %s45, %s46
    %p55 = scmp.eq.s32.totalorder %s14, 0
    %p56 = por %p54, %p55
    %p57 = scmp.ne.s32.totalorder %s45, %s46
    %p58 = scmp.eq.s32.totalorder %s15, 1
    %p59 = por %p57, %p58
    %p61 = scmp.ne.s32.totalorder %s46, %s60
    %p62 = scmp.eq.s32.totalorder %s15, 0
    %p63 = por %p61, %p62
    %s65 = sadd.s32 %s64, 1
    %p68 = scmp.eq.s32.totalorder %s9, 1
    %p69 = scmp.ne.s32.totalorder %s64, %s66
    %p70 = scmp.eq.s32.totalorder %s9, 0
    %p71 = por %p69, %p70
    %p72 = scmp.ne.s32.totalorder %s64, %s66
    %p73 = scmp.eq.s32.totalorder %s14, 1
    %p74 = por %p72, %p73
    %p75 = scmp.ne.s32.totalorder %s66, %s67
    %p76 = scmp.eq.s32.totalorder %s14, 0
    %p77 = por %p75, %p76
    %p78 = scmp.ne.s32.totalorder %s66, %s67
    %p79 = scmp.eq.s32.totalorder %s15, 1
    %p80 = por %p78, %p79
    %p82 = scmp.ne.s32.totalorder %s67, %s81
    %p83 = scmp.eq.s32.totalorder %s15, 0
    %p84 = por %p82, %p83
    %s85 = ssub.s32 %s9, %s16
    %p86 = scmp.eq.s32.totalorder %s85, 0
    %s88 = sadd.s32 %s87, 1
    %s89 = scalar_select %p86, %s87, %s88
    %p92 = pneg %p86
    %p93 = scmp.eq.s32.totalorder %s9, 1
    %p94 = por %p92, %p93
    %p95 = scmp.ne.s32.totalorder %s87, %s90
    %p96 = scmp.eq.s32.totalorder %s9, 0
    %p97 = por %p95, %p96
    %p98 = scmp.ne.s32.totalorder %s87, %s90
    %p99 = scmp.eq.s32.totalorder %s14, 1
    %p100 = por %p98, %p99
    %p101 = scmp.ne.s32.totalorder %s90, %s91
    %p102 = scmp.eq.s32.totalorder %s14, 0
    %p103 = por %p101, %p102
    %p104 = scmp.ne.s32.totalorder %s90, %s91
    %p105 = scmp.eq.s32.totalorder %s15, 1
    %p106 = por %p104, %p105
    %p108 = scmp.ne.s32.totalorder %s91, %s107
    %p109 = scmp.eq.s32.totalorder %s15, 0
    %p110 = por %p108, %p109
    %p111 = scmp.le.s32.totalorder 1, %s9
    %p112 = scmp.lt.s32.totalorder %s9, 3
    %p113 = pnand %p111, %p112
    %p114 = pneg %p113
    // Predicated region
    $region9: #{simple_encoder_forward.5} parent=5 // pred_check
      _
    $region10: #{simple_encoder_forward.5} parent=5 // pred_check_branch
      %116 = sbr.rel (%p113) target = $region12
    $region11: #{simple_encoder_forward.5} parent=5 // pred_region
      %s117 = ssub.s32 %s9, 1
      // Predicated region
      $region13: #{simple_encoder_forward.5} parent=11 // pred_check
        %p118 = pneg %p56
      $region14: #{simple_encoder_forward.5} parent=11 // pred_check_branch
        %120 = sbr.rel (%p118) target = $region16
      $region15: #{simple_encoder_forward.5} parent=11 // pred_region
        _
      $region16: #{simple_encoder_forward.5} parent=11 // pred_fallthru
        _
      // Predicated region
      $region17: #{simple_encoder_forward.5} parent=11 // pred_check
        %p121 = pneg %p77
      $region18: #{simple_encoder_forward.5} parent=11 // pred_check_branch
        %123 = sbr.rel (%p121) target = $region20
      $region19: #{simple_encoder_forward.5} parent=11 // pred_region
        _
      $region20: #{simple_encoder_forward.5} parent=11 // pred_fallthru
        _
    $region12: #{simple_encoder_forward.5} parent=5 // pred_fallthru
      _
    %p124 = scmp.lt.s32.totalorder %s9, 2
    // Predicated region
    $region21: #{simple_encoder_forward.5} parent=5 // pred_check
      %p125 = pneg %p124
    $region22: #{simple_encoder_forward.5} parent=5 // pred_check_branch
      %127 = sbr.rel (%p125) target = $region24
    $region23: #{simple_encoder_forward.5} parent=5 // pred_region
      // Predicated region
      $region25: #{simple_encoder_forward.5} parent=23 // pred_check
        %p128 = pneg %p29
      $region26: #{simple_encoder_forward.5} parent=23 // pred_check_branch
        %130 = sbr.rel (%p128) target = $region28
      $region27: #{simple_encoder_forward.5} parent=23 // pred_region
        %s131 = smul.u32 8, %s9
        %p132 = scmp.lt.s32.totalorder %s131, 15
        %s133 = scalar_select %p132, %s131, 15
        %s134 = smul.addr %s133, 2
        %s135 = smul.addr %s134, 4
        %s136 = scalar_lea.vmem %s0, %s135
        %s137 = smul.u32 8, %s9
      $region28: #{simple_encoder_forward.5} parent=23 // pred_fallthru
        _
    $region24: #{simple_encoder_forward.5} parent=5 // pred_fallthru
      _
    %p138 = scmp.le.s32.totalorder 1, %s9
    %p139 = scmp.lt.s32.totalorder %s9, 3
    %p140 = pnand %p138, %p139
    %p141 = pneg %p140
    // Predicated region
    $region29: #{simple_encoder_forward.5} parent=5 // pred_check
      _
    $region30: #{simple_encoder_forward.5} parent=5 // pred_check_branch
      %143 = sbr.rel (%p140) target = $region32
    $region31: #{simple_encoder_forward.5} parent=5 // pred_region
      %s144 = ssub.s32 %s9, 1
      %s145 = smul.u32 8, %s14
      %p146 = scmp.lt.s32.totalorder %s145, 15
      %s147 = scalar_select %p146, %s145, 15
      %s148 = smul.addr %s147, 2
      %s149 = smul.addr %s148, 4
      %s150 = scalar_lea.vmem %s0, %s149
      %p151 = pneg %p35
      %p152 = pneg %p32
      %p153 = pneg %p56
      %p154 = pneg %p53
      %p155 = pneg %p77
      %p156 = pneg %p74
      %p157 = pneg %p103
      %p158 = pneg %p100
      %s159 = smul.u32 8, %s14
      %p160 = scmp.lt.s32.totalorder %s159, 15
      %s161 = scalar_select %p160, %s159, 15
      %s162 = smul.addr %s161, 4
      %s163 = scalar_lea.vmem %s3, %s162
      %s164 = smul.u32 8, %s14
      %p165 = scmp.lt.s32.totalorder %s164, 15
      %s166 = scalar_select %p165, %s164, 15
      %s167 = smul.addr %s166, 2
      %s168 = smul.addr %s167, 4
      %s169 = scalar_lea.vmem %s0, %s168
      %s170 = smul.u32 8, %s14
      %s171 = smul.u32 8, %s14
      %p172 = scmp.lt.s32.totalorder %s171, 15
      %s173 = scalar_select %p172, %s171, 15
      %s174 = smul.addr %s173, 4
      %s175 = scalar_lea.vmem %s3, %s174
      %s176 = smul.u32 8, %s14
      %v178 = vld [vmem:[%s169] sm:$0xff]
      %v179 = vld [vmem:[%s169 + $0x8] sm:$0xff]
      %v180 = vld [vmem:[%s169 + $0x10] sm:$0xff]
      %v181 = vld [vmem:[%s169 + $0x18] sm:$0xff]
      %v182 = vld [vmem:[%s169 + $0x20] sm:$0xff]
      %v183 = vld [vmem:[%s169 + $0x28] sm:$0xff]
      %v184 = vld [vmem:[%s169 + $0x30] sm:$0xff]
      %v185 = vld [vmem:[%s169 + $0x38] sm:$0xff]
      %v186 = vld [vmem:[%s1] sm:$0xf]
      %v187 = vld [vmem:[%s1 + $0x4] sm:$0xf]
      %v188 = vld [vmem:[%s1 + $0x8] sm:$0xf]
      %v189 = vld [vmem:[%s1 + $0xc] sm:$0xf]
      %v190 = vld [vmem:[%s1 + $0x10] sm:$0xf]
      %v191 = vld [vmem:[%s1 + $0x14] sm:$0xf]
      %v192 = vld [vmem:[%s1 + $0x18] sm:$0xf]
      %v193 = vld [vmem:[%s1 + $0x1c] sm:$0xf]
      %v194 = vld [vmem:[%s1 + $0x20] sm:$0xf]
      %v195 = vld [vmem:[%s1 + $0x24] sm:$0xf]
      %v196 = vld [vmem:[%s1 + $0x28] sm:$0xf]
      %v197 = vld [vmem:[%s1 + $0x2c] sm:$0xf]
      %v198 = vld [vmem:[%s1 + $0x30] sm:$0xf]
      %v199 = vld [vmem:[%s1 + $0x34] sm:$0xf]
      %v200 = vld [vmem:[%s1 + $0x38] sm:$0xf]
      %v201 = vld [vmem:[%s1 + $0x3c] sm:$0xf]
      %v202 = vld [vmem:[%s1 + $0x40] sm:$0xf]
      %v203 = vld [vmem:[%s1 + $0x44] sm:$0xf]
      %v204 = vld [vmem:[%s1 + $0x48] sm:$0xf]
      %v205 = vld [vmem:[%s1 + $0x4c] sm:$0xf]
      %v206 = vld [vmem:[%s1 + $0x50] sm:$0xf]
      %v207 = vld [vmem:[%s1 + $0x54] sm:$0xf]
      %v208 = vld [vmem:[%s1 + $0x58] sm:$0xf]
      %v209 = vld [vmem:[%s1 + $0x5c] sm:$0xf]
      %v210 = vld [vmem:[%s1 + $0x60] sm:$0xf]
      %v211 = vld [vmem:[%s2] sm:$0x1]
      %v213 = vlaneseq
      %v214 = vshrl.u32 %v213, 7
      %v215 = vsub.s32 0, %v214
      %v216 = vrot.slane %v211, %v215
      %v226 = vunpack.c.l.b16 %v178
      %v227 = vunpack.c.h.b16 %v178
      %v228 = vunpack.c.l.b16 %v179
      %v229 = vunpack.c.h.b16 %v179
      %v230 = vunpack.c.l.b16 %v180
      %v231 = vunpack.c.h.b16 %v180
      %v232 = vunpack.c.l.b16 %v181
      %v233 = vunpack.c.h.b16 %v181
      %v234 = vunpack.c.l.b16 %v182
      %v235 = vunpack.c.h.b16 %v182
      %v236 = vunpack.c.l.b16 %v183
      %v237 = vunpack.c.h.b16 %v183
      %v238 = vunpack.c.l.b16 %v184
      %v239 = vunpack.c.h.b16 %v184
      %v240 = vunpack.c.l.b16 %v185
      %v241 = vunpack.c.h.b16 %v185
      %v242 = vpack.c.b16 %v228, %v226
      %v243 = vpack.c.b16 %v229, %v227
      %v244 = vpack.c.b16 %v232, %v230
      %v245 = vpack.c.b16 %v233, %v231
      %v246 = vpack.c.b16 %v236, %v234
      %v247 = vpack.c.b16 %v237, %v235
      %v248 = vpack.c.b16 %v240, %v238
      %v249 = vpack.c.b16 %v241, %v239
      %v279 = vunpack.c.l.b16 %v186
      %v280 = vunpack.c.l.b16 %v187
      %v281 = vunpack.c.l.b16 %v188
      %v282 = vunpack.c.l.b16 %v189
      %v283 = vunpack.c.l.b16 %v190
      %v284 = vunpack.c.l.b16 %v191
      %v285 = vunpack.c.l.b16 %v192
      %v286 = vunpack.c.l.b16 %v193
      %v287 = vunpack.c.l.b16 %v194
      %v288 = vunpack.c.l.b16 %v195
      %v289 = vunpack.c.l.b16 %v196
      %v290 = vunpack.c.l.b16 %v197
      %v291 = vunpack.c.l.b16 %v198
      %v292 = vunpack.c.l.b16 %v199
      %v293 = vunpack.c.l.b16 %v200
      %v294 = vunpack.c.l.b16 %v201
      %v295 = vunpack.c.l.b16 %v202
      %v296 = vunpack.c.l.b16 %v203
      %v297 = vunpack.c.l.b16 %v204
      %v298 = vunpack.c.l.b16 %v205
      %v299 = vunpack.c.l.b16 %v206
      %v300 = vunpack.c.l.b16 %v207
      %v301 = vunpack.c.l.b16 %v208
      %v302 = vunpack.c.l.b16 %v209
      %v303 = vunpack.c.l.b16 %v210
      %v304 = vpack.c.b16 %v280, %v279
      %v305 = vpack.c.b16 %v282, %v281
      %v306 = vpack.c.b16 %v284, %v283
      %v307 = vpack.c.b16 %v286, %v285
      %v308 = vpack.c.b16 %v288, %v287
      %v309 = vpack.c.b16 %v290, %v289
      %v310 = vpack.c.b16 %v292, %v291
      %v311 = vpack.c.b16 %v294, %v293
      %v312 = vpack.c.b16 %v296, %v295
      %v313 = vpack.c.b16 %v298, %v297
      %v314 = vpack.c.b16 %v300, %v299
      %v315 = vpack.c.b16 %v302, %v301
      %v316 = vpack.c.b16 %v303, %v303
      %vm329 = vcmask 588800
      %v331 = vsel %vm329, %v243, 0
      %v334 = vsel %vm329, %v245, 0
      %v337 = vsel %vm329, %v247, 0
      %v340 = vsel %vm329, %v249, 0
      %vm342 = vcmask 1043456
      %v344 = vsel %vm342, %v316, 0
      %346 = vmatprep.subr.bf16.mxu0 0
      %347 = vmatpush1.bf16.msra.mxu0 %v311
      %348 = vmatprep.subr.bf16.mxu0 0
      %349 = vmatpush1.bf16.msra.mxu0 %v310
      %350 = vmatprep.subr.bf16.mxu0 0
      %351 = vmatpush1.bf16.msra.mxu0 %v309
      %352 = vmatprep.subr.bf16.mxu0 0
      %353 = vmatpush1.bf16.msra.mxu0 %v308
      %354 = vmatprep.subr.bf16.mxu0 0
      %355 = vmatpush1.bf16.msra.mxu0 %v307
      %356 = vmatprep.subr.bf16.mxu0 0
      %357 = vmatpush1.bf16.msra.mxu0 %v306
      %358 = vmatprep.subr.bf16.mxu0 0
      %359 = vmatpush1.bf16.msra.mxu0 %v305
      %360 = vmatprep.subr.bf16.mxu0 0
      %361 = vmatpush1.bf16.msra.mxu0 %v304
      %362 = vmatprep.subr.bf16.mxu0 0
      %363 = vmatpush2.bf16.msra.mxu0 0
      %364 = vmatprep.subr.bf16.mxu0 0
      %365 = vmatpush2.bf16.msra.mxu0 0
      %366 = vmatprep.subr.bf16.mxu0 0
      %367 = vmatpush2.bf16.msra.mxu0 0
      %368 = vmatprep.subr.bf16.mxu0 0
      %369 = vmatpush2.bf16.msra.mxu0 %v344
      %370 = vmatprep.subr.bf16.mxu0 0
      %371 = vmatpush2.bf16.msra.mxu0 %v315
      %372 = vmatprep.subr.bf16.mxu0 0
      %373 = vmatpush2.bf16.msra.mxu0 %v314
      %374 = vmatprep.subr.bf16.mxu0 0
      %375 = vmatpush2.bf16.msra.mxu0 %v313
      %376 = vmatprep.subr.bf16.mxu0 0
      %377 = vmatpush2.bf16.msra.mxu0 %v312
      %378 = vmatprep.mubr.bf16.mxu0 %v331
      %379 = vmatmul.mubr.bf16.gmra.mxu0 %v242
      %v380 = vpop.f32.mrf.mxu0
      %v381 = vadd.f32 %v216, %v380
      %v382 = vpop.f32.mrf.mxu0
      %v383 = vpop.f32.mrf.mxu0
      %v384 = vadd.f32 %v216, %v383
      %v385 = vpop.f32.mrf.mxu0
      %386 = vmatprep.mubr.bf16.mxu0 %v334
      %387 = vmatmul.mubr.bf16.gmra.mxu0 %v244
      %v388 = vpop.f32.mrf.mxu0
      %v389 = vadd.f32 %v216, %v388
      %v390 = vpop.f32.mrf.mxu0
      %v391 = vpop.f32.mrf.mxu0
      %v392 = vadd.f32 %v216, %v391
      %v393 = vpop.f32.mrf.mxu0
      %394 = vmatprep.mubr.bf16.mxu0 %v337
      %395 = vmatmul.mubr.bf16.gmra.mxu0 %v246
      %v396 = vpop.f32.mrf.mxu0
      %v397 = vadd.f32 %v216, %v396
      %v398 = vpop.f32.mrf.mxu0
      %v399 = vpop.f32.mrf.mxu0
      %v400 = vadd.f32 %v216, %v399
      %v401 = vpop.f32.mrf.mxu0
      %402 = vmatprep.mubr.bf16.mxu0 %v340
      %403 = vmatmul.mubr.bf16.gmra.mxu0 %v248
      %v404 = vpop.f32.mrf.mxu0
      %v405 = vadd.f32 %v216, %v404
      %v406 = vpop.f32.mrf.mxu0
      %v407 = vpop.f32.mrf.mxu0
      %v408 = vadd.f32 %v216, %v407
      %v409 = vpop.f32.mrf.mxu0
      %410 = vdwg.mxu0
      %v411 = vpack.c.bf16 %v384, %v381
      %v412 = vpack.c.bf16 %v392, %v389
      %v413 = vpack.c.bf16 %v400, %v397
      %v414 = vpack.c.bf16 %v408, %v405
      %v419 = vunpack.c.l.b16 %v411
      %v420 = vunpack.c.h.b16 %v411
      %v421 = vunpack.c.l.b16 %v412
      %v422 = vunpack.c.h.b16 %v412
      %v423 = vunpack.c.l.b16 %v413
      %v424 = vunpack.c.h.b16 %v413
      %v425 = vunpack.c.l.b16 %v414
      %v426 = vunpack.c.h.b16 %v414
      %v427 = vpack.c.b16 %v419, %v419
      %v428 = vpack.c.b16 %v420, %v420
      %v429 = vpack.c.b16 %v421, %v421
      %v430 = vpack.c.b16 %v422, %v422
      %v431 = vpack.c.b16 %v423, %v423
      %v432 = vpack.c.b16 %v424, %v424
      %v433 = vpack.c.b16 %v425, %v425
      %v434 = vpack.c.b16 %v426, %v426
      %443 = vst [vmem:[%s175] sm:$0xf] %v427
      %444 = vst [vmem:[%s175 + $0x4] sm:$0xf] %v428
      %445 = vst [vmem:[%s175 + $0x8] sm:$0xf] %v429
      %446 = vst [vmem:[%s175 + $0xc] sm:$0xf] %v430
      %447 = vst [vmem:[%s175 + $0x10] sm:$0xf] %v431
      %448 = vst [vmem:[%s175 + $0x14] sm:$0xf] %v432
      %449 = vst [vmem:[%s175 + $0x18] sm:$0xf] %v433
      %450 = vst [vmem:[%s175 + $0x1c] sm:$0xf] %v434
      %s451 = smul.u32 8, %s14
      %p452 = scmp.lt.s32.totalorder %s451, 15
      %s453 = scalar_select %p452, %s451, 15
      %s454 = smul.addr %s453, 4
      %s455 = scalar_lea.vmem %s3, %s454
      // Predicated region
      $region33: #{simple_encoder_forward.5} parent=31 // pred_check
        %p456 = pneg %p100
      $region34: #{simple_encoder_forward.5} parent=31 // pred_check_branch
        %458 = sbr.rel (%p456) target = $region36
      $region35: #{simple_encoder_forward.5} parent=31 // pred_region
        %s459 = smul.u32 8, %s14
      $region36: #{simple_encoder_forward.5} parent=31 // pred_fallthru
        _
    $region32: #{simple_encoder_forward.5} parent=5 // pred_fallthru
      _
    %p460 = scmp.le.s32.totalorder 2, %s9
    // Predicated region
    $region37: #{simple_encoder_forward.5} parent=5 // pred_check
      %p461 = pneg %p460
    $region38: #{simple_encoder_forward.5} parent=5 // pred_check_branch
      %463 = sbr.rel (%p461) target = $region40
    $region39: #{simple_encoder_forward.5} parent=5 // pred_region
      %s464 = ssub.s32 %s9, 2
      // Predicated region
      $region41: #{simple_encoder_forward.5} parent=39 // pred_check
        %p465 = pneg %p106
      $region42: #{simple_encoder_forward.5} parent=39 // pred_check_branch
        %467 = sbr.rel (%p465) target = $region44
      $region43: #{simple_encoder_forward.5} parent=39 // pred_region
        %s468 = smul.u32 8, %s15
        %p469 = scmp.lt.s32.totalorder %s468, 15
        %s470 = scalar_select %p469, %s468, 15
        %s471 = smul.addr %s470, 4
        %s472 = scalar_lea.vmem %s3, %s471
      $region44: #{simple_encoder_forward.5} parent=39 // pred_fallthru
        _
    $region40: #{simple_encoder_forward.5} parent=5 // pred_fallthru
      _
  $region6: #{simple_encoder_forward.5} parent=0 // loop_footer
    %s13 = sadd.s32 1, %s9
  $region7: #{simple_encoder_forward.5} parent=0 // loop_footer_branch
    %8 = sbr.rel target = $region3
  $region8: #{simple_encoder_forward.5} parent=0 // loop_exit
    _

// kernel: simple_encoder_forward.6
$region0: #{simple_encoder_forward.6}
  #allocation0 [shape = 'u32[]', space=smem, size = 0x4, offset = 0x4, fixed_abs, tag = 'smem constant byte address 0x4 - core index']
  #allocation1 [shape = 'u32[144,128]{1,0:T(1,128)}', space=vmem, size = 0x12000, scoped, tag = 'internal scratch']
  %s0 = inlined_call_operand.vmem [shape: bf16[32,144], index: 0, kind: input, shape index: {}]
  %s1 = inlined_call_operand.vmem [shape: bf16[144,128], index: 1, kind: input, shape index: {}]
  %s2 = inlined_call_operand.vmem [shape: f32[1,128], index: 2, kind: input, shape index: {}]
  %s3 = inlined_call_operand.vmem [shape: bf16[32,128], index: 3, kind: output, shape index: {}]
  %s4 = sld [smem:[#allocation0]]
  $region45: #{simple_encoder_forward.6} parent=0
    _
  %s6 = ssub.s32 1, %s4
  %s7 = scalar_select 0, %s6, %s4
  loop: start=0, step=1, limit=4
  $region2: #{simple_encoder_forward.6} parent=0 // loop_pre_header
    _
  $region3: #{simple_encoder_forward.6} parent=0 // loop_header
    %s9 = sphi 0, %s13
    %p10 = scmp.ge.s32.totalorder %s9, 4
    %s19 = sphi 0, %s21
    %s22 = sphi 0, %s19
    %s23 = sphi 0, %s22
    %s39 = sphi 0, %s23
    %s43 = sphi 0, %s43
    %s45 = sphi 0, %s43
    %s46 = sphi 0, %s45
    %s60 = sphi 0, %s46
    %s64 = sphi 0, %s64
    %s66 = sphi 0, %s64
    %s67 = sphi 0, %s66
    %s81 = sphi 0, %s67
    %s87 = sphi 0, %s89
    %s90 = sphi 0, %s87
    %s91 = sphi 0, %s90
    %s107 = sphi 0, %s91
  $region4: #{simple_encoder_forward.6} parent=0 // loop_header_branch
    %12 = sbr.rel (%p10) target = $region8
  $region5: #{simple_encoder_forward.6} parent=0 // loop_body
    %s14 = ssub.s32 %s9, 1
    %s15 = ssub.s32 %s9, 2
    %s16 = sadd.s32 %s9, 1
    %s17 = ssub.s32 %s9, %s16
    %p18 = scmp.eq.s32.totalorder %s17, 0
    %s20 = sadd.s32 %s19, 1
    %s21 = scalar_select %p18, %s19, %s20
    %p24 = pneg %p18
    %p25 = scmp.eq.s32.totalorder %s9, 1
    %p26 = por %p24, %p25
    %p27 = scmp.ne.s32.totalorder %s19, %s22
    %p28 = scmp.eq.s32.totalorder %s9, 0
    %p29 = por %p27, %p28
    %p30 = scmp.ne.s32.totalorder %s19, %s22
    %p31 = scmp.eq.s32.totalorder %s14, 1
    %p32 = por %p30, %p31
    %p33 = scmp.ne.s32.totalorder %s22, %s23
    %p34 = scmp.eq.s32.totalorder %s14, 0
    %p35 = por %p33, %p34
    %p36 = scmp.ne.s32.totalorder %s22, %s23
    %p37 = scmp.eq.s32.totalorder %s15, 1
    %p38 = por %p36, %p37
    %p40 = scmp.ne.s32.totalorder %s23, %s39
    %p41 = scmp.eq.s32.totalorder %s15, 0
    %p42 = por %p40, %p41
    %s44 = sadd.s32 %s43, 1
    %p47 = scmp.eq.s32.totalorder %s9, 1
    %p48 = scmp.ne.s32.totalorder %s43, %s45
    %p49 = scmp.eq.s32.totalorder %s9, 0
    %p50 = por %p48, %p49
    %p51 = scmp.ne.s32.totalorder %s43, %s45
    %p52 = scmp.eq.s32.totalorder %s14, 1
    %p53 = por %p51, %p52
    %p54 = scmp.ne.s32.totalorder %s45, %s46
    %p55 = scmp.eq.s32.totalorder %s14, 0
    %p56 = por %p54, %p55
    %p57 = scmp.ne.s32.totalorder %s45, %s46
    %p58 = scmp.eq.s32.totalorder %s15, 1
    %p59 = por %p57, %p58
    %p61 = scmp.ne.s32.totalorder %s46, %s60
    %p62 = scmp.eq.s32.totalorder %s15, 0
    %p63 = por %p61, %p62
    %s65 = sadd.s32 %s64, 1
    %p68 = scmp.eq.s32.totalorder %s9, 1
    %p69 = scmp.ne.s32.totalorder %s64, %s66
    %p70 = scmp.eq.s32.totalorder %s9, 0
    %p71 = por %p69, %p70
    %p72 = scmp.ne.s32.totalorder %s64, %s66
    %p73 = scmp.eq.s32.totalorder %s14, 1
    %p74 = por %p72, %p73
    %p75 = scmp.ne.s32.totalorder %s66, %s67
    %p76 = scmp.eq.s32.totalorder %s14, 0
    %p77 = por %p75, %p76
    %p78 = scmp.ne.s32.totalorder %s66, %s67
    %p79 = scmp.eq.s32.totalorder %s15, 1
    %p80 = por %p78, %p79
    %p82 = scmp.ne.s32.totalorder %s67, %s81
    %p83 = scmp.eq.s32.totalorder %s15, 0
    %p84 = por %p82, %p83
    %s85 = ssub.s32 %s9, %s16
    %p86 = scmp.eq.s32.totalorder %s85, 0
    %s88 = sadd.s32 %s87, 1
    %s89 = scalar_select %p86, %s87, %s88
    %p92 = pneg %p86
    %p93 = scmp.eq.s32.totalorder %s9, 1
    %p94 = por %p92, %p93
    %p95 = scmp.ne.s32.totalorder %s87, %s90
    %p96 = scmp.eq.s32.totalorder %s9, 0
    %p97 = por %p95, %p96
    %p98 = scmp.ne.s32.totalorder %s87, %s90
    %p99 = scmp.eq.s32.totalorder %s14, 1
    %p100 = por %p98, %p99
    %p101 = scmp.ne.s32.totalorder %s90, %s91
    %p102 = scmp.eq.s32.totalorder %s14, 0
    %p103 = por %p101, %p102
    %p104 = scmp.ne.s32.totalorder %s90, %s91
    %p105 = scmp.eq.s32.totalorder %s15, 1
    %p106 = por %p104, %p105
    %p108 = scmp.ne.s32.totalorder %s91, %s107
    %p109 = scmp.eq.s32.totalorder %s15, 0
    %p110 = por %p108, %p109
    %p111 = scmp.le.s32.totalorder 1, %s9
    %p112 = scmp.lt.s32.totalorder %s9, 3
    %p113 = pnand %p111, %p112
    %p114 = pneg %p113
    // Predicated region
    $region9: #{simple_encoder_forward.6} parent=5 // pred_check
      _
    $region10: #{simple_encoder_forward.6} parent=5 // pred_check_branch
      %116 = sbr.rel (%p113) target = $region12
    $region11: #{simple_encoder_forward.6} parent=5 // pred_region
      %s117 = ssub.s32 %s9, 1
      // Predicated region
      $region13: #{simple_encoder_forward.6} parent=11 // pred_check
        %p118 = pneg %p56
      $region14: #{simple_encoder_forward.6} parent=11 // pred_check_branch
        %120 = sbr.rel (%p118) target = $region16
      $region15: #{simple_encoder_forward.6} parent=11 // pred_region
        _
      $region16: #{simple_encoder_forward.6} parent=11 // pred_fallthru
        _
      // Predicated region
      $region17: #{simple_encoder_forward.6} parent=11 // pred_check
        %p121 = pneg %p77
      $region18: #{simple_encoder_forward.6} parent=11 // pred_check_branch
        %123 = sbr.rel (%p121) target = $region20
      $region19: #{simple_encoder_forward.6} parent=11 // pred_region
        _
      $region20: #{simple_encoder_forward.6} parent=11 // pred_fallthru
        _
    $region12: #{simple_encoder_forward.6} parent=5 // pred_fallthru
      _
    %p124 = scmp.lt.s32.totalorder %s9, 2
    // Predicated region
    $region21: #{simple_encoder_forward.6} parent=5 // pred_check
      %p125 = pneg %p124
    $region22: #{simple_encoder_forward.6} parent=5 // pred_check_branch
      %127 = sbr.rel (%p125) target = $region24
    $region23: #{simple_encoder_forward.6} parent=5 // pred_region
      // Predicated region
      $region25: #{simple_encoder_forward.6} parent=23 // pred_check
        %p128 = pneg %p29
      $region26: #{simple_encoder_forward.6} parent=23 // pred_check_branch
        %130 = sbr.rel (%p128) target = $region28
      $region27: #{simple_encoder_forward.6} parent=23 // pred_region
        %s131 = smul.u32 2, %s9
        %p132 = scmp.lt.s32.totalorder %s131, 3
        %s133 = scalar_select %p132, %s131, 3
        %s134 = smul.addr %s133, 2
        %s135 = smul.addr %s134, 4
        %s136 = scalar_lea.vmem %s0, %s135
        %s137 = smul.u32 2, %s9
      $region28: #{simple_encoder_forward.6} parent=23 // pred_fallthru
        _
    $region24: #{simple_encoder_forward.6} parent=5 // pred_fallthru
      _
    %p138 = scmp.le.s32.totalorder 1, %s9
    %p139 = scmp.lt.s32.totalorder %s9, 3
    %p140 = pnand %p138, %p139
    %p141 = pneg %p140
    // Predicated region
    $region29: #{simple_encoder_forward.6} parent=5 // pred_check
      _
    $region30: #{simple_encoder_forward.6} parent=5 // pred_check_branch
      %143 = sbr.rel (%p140) target = $region32
    $region31: #{simple_encoder_forward.6} parent=5 // pred_region
      %s144 = ssub.s32 %s9, 1
      %s145 = smul.u32 2, %s14
      %p146 = scmp.lt.s32.totalorder %s145, 3
      %s147 = scalar_select %p146, %s145, 3
      %s148 = smul.addr %s147, 2
      %s149 = smul.addr %s148, 4
      %s150 = scalar_lea.vmem %s0, %s149
      %p151 = pneg %p35
      %p152 = pneg %p32
      %p153 = pneg %p56
      %p154 = pneg %p53
      %p155 = pneg %p77
      %p156 = pneg %p74
      %p157 = pneg %p103
      %p158 = pneg %p100
      %s159 = smul.u32 2, %s14
      %p160 = scmp.lt.s32.totalorder %s159, 3
      %s161 = scalar_select %p160, %s159, 3
      %s162 = smul.addr %s161, 4
      %s163 = scalar_lea.vmem %s3, %s162
      %s164 = smul.u32 2, %s14
      %p165 = scmp.lt.s32.totalorder %s164, 3
      %s166 = scalar_select %p165, %s164, 3
      %s167 = smul.addr %s166, 2
      %s168 = smul.addr %s167, 4
      %s169 = scalar_lea.vmem %s0, %s168
      %s170 = smul.u32 2, %s14
      %s171 = smul.u32 2, %s14
      %p172 = scmp.lt.s32.totalorder %s171, 3
      %s173 = scalar_select %p172, %s171, 3
      %s174 = smul.addr %s173, 4
      %s175 = scalar_lea.vmem %s3, %s174
      %s176 = smul.u32 2, %s14
      %v178 = vld [vmem:[%s169] sm:$0xff]
      %v179 = vld [vmem:[%s169 + $0x8] sm:$0xff]
      %v180 = vld [vmem:[%s1] sm:$0xf]
      %v181 = vld [vmem:[%s1 + $0x4] sm:$0xf]
      %v182 = vld [vmem:[%s1 + $0x8] sm:$0xf]
      %v183 = vld [vmem:[%s1 + $0xc] sm:$0xf]
      %v184 = vld [vmem:[%s1 + $0x10] sm:$0xf]
      %v185 = vld [vmem:[%s1 + $0x14] sm:$0xf]
      %v186 = vld [vmem:[%s1 + $0x18] sm:$0xf]
      %v187 = vld [vmem:[%s1 + $0x1c] sm:$0xf]
      %v188 = vld [vmem:[%s1 + $0x20] sm:$0xf]
      %v189 = vld [vmem:[%s1 + $0x24] sm:$0xf]
      %v190 = vld [vmem:[%s1 + $0x28] sm:$0xf]
      %v191 = vld [vmem:[%s1 + $0x2c] sm:$0xf]
      %v192 = vld [vmem:[%s1 + $0x30] sm:$0xf]
      %v193 = vld [vmem:[%s1 + $0x34] sm:$0xf]
      %v194 = vld [vmem:[%s1 + $0x38] sm:$0xf]
      %v195 = vld [vmem:[%s1 + $0x3c] sm:$0xf]
      %v196 = vld [vmem:[%s1 + $0x40] sm:$0xf]
      %v197 = vld [vmem:[%s1 + $0x44] sm:$0xf]
      %v198 = vld [vmem:[%s2] sm:$0x1]
      %v200 = vlaneseq
      %v201 = vshrl.u32 %v200, 7
      %v202 = vsub.s32 0, %v201
      %v203 = vrot.slane %v198, %v202
      %v207 = vunpack.c.l.b16 %v178
      %v208 = vunpack.c.h.b16 %v178
      %v209 = vunpack.c.l.b16 %v179
      %v210 = vunpack.c.h.b16 %v179
      %v211 = vpack.c.b16 %v209, %v207
      %v212 = vpack.c.b16 %v210, %v208
      %v232 = vunpack.c.l.b16 %v180
      %v233 = vunpack.c.l.b16 %v181
      %v234 = vunpack.c.l.b16 %v182
      %v235 = vunpack.c.l.b16 %v183
      %v236 = vunpack.c.l.b16 %v184
      %v237 = vunpack.c.l.b16 %v185
      %v238 = vunpack.c.l.b16 %v186
      %v239 = vunpack.c.l.b16 %v187
      %v240 = vunpack.c.l.b16 %v188
      %v241 = vunpack.c.l.b16 %v189
      %v242 = vunpack.c.l.b16 %v190
      %v243 = vunpack.c.l.b16 %v191
      %v244 = vunpack.c.l.b16 %v192
      %v245 = vunpack.c.l.b16 %v193
      %v246 = vunpack.c.l.b16 %v194
      %v247 = vunpack.c.l.b16 %v195
      %v248 = vunpack.c.l.b16 %v196
      %v249 = vunpack.c.l.b16 %v197
      %v250 = vpack.c.b16 %v233, %v232
      %v251 = vpack.c.b16 %v235, %v234
      %v252 = vpack.c.b16 %v237, %v236
      %v253 = vpack.c.b16 %v239, %v238
      %v254 = vpack.c.b16 %v241, %v240
      %v255 = vpack.c.b16 %v243, %v242
      %v256 = vpack.c.b16 %v245, %v244
      %v257 = vpack.c.b16 %v247, %v246
      %v258 = vpack.c.b16 %v249, %v248
      %vm268 = vcmask 130048
      %v270 = vsel %vm268, %v212, 0
      %272 = vmatprep.subr.bf16.mxu0 0
      %273 = vmatpush1.bf16.msra.mxu0 %v257
      %274 = vmatprep.subr.bf16.mxu0 0
      %275 = vmatpush1.bf16.msra.mxu0 %v256
      %276 = vmatprep.subr.bf16.mxu0 0
      %277 = vmatpush1.bf16.msra.mxu0 %v255
      %278 = vmatprep.subr.bf16.mxu0 0
      %279 = vmatpush1.bf16.msra.mxu0 %v254
      %280 = vmatprep.subr.bf16.mxu0 0
      %281 = vmatpush1.bf16.msra.mxu0 %v253
      %282 = vmatprep.subr.bf16.mxu0 0
      %283 = vmatpush1.bf16.msra.mxu0 %v252
      %284 = vmatprep.subr.bf16.mxu0 0
      %285 = vmatpush1.bf16.msra.mxu0 %v251
      %286 = vmatprep.subr.bf16.mxu0 0
      %287 = vmatpush1.bf16.msra.mxu0 %v250
      %288 = vmatprep.subr.bf16.mxu0 0
      %289 = vmatpush2.bf16.msra.mxu0 0
      %290 = vmatprep.subr.bf16.mxu0 0
      %291 = vmatpush2.bf16.msra.mxu0 0
      %292 = vmatprep.subr.bf16.mxu0 0
      %293 = vmatpush2.bf16.msra.mxu0 0
      %294 = vmatprep.subr.bf16.mxu0 0
      %295 = vmatpush2.bf16.msra.mxu0 0
      %296 = vmatprep.subr.bf16.mxu0 0
      %297 = vmatpush2.bf16.msra.mxu0 0
      %298 = vmatprep.subr.bf16.mxu0 0
      %299 = vmatpush2.bf16.msra.mxu0 0
      %300 = vmatprep.subr.bf16.mxu0 0
      %301 = vmatpush2.bf16.msra.mxu0 0
      %302 = vmatprep.subr.bf16.mxu0 0
      %303 = vmatpush2.bf16.msra.mxu0 %v258
      %304 = vmatprep.mubr.bf16.mxu0 %v270
      %305 = vmatmul.mubr.bf16.gmra.mxu0 %v211
      %v306 = vpop.f32.mrf.mxu0
      %v307 = vadd.f32 %v203, %v306
      %v308 = vpop.f32.mrf.mxu0
      %v309 = vpop.f32.mrf.mxu0
      %v310 = vadd.f32 %v203, %v309
      %v311 = vpop.f32.mrf.mxu0
      %312 = vdwg.mxu0
      %v313 = vpack.c.bf16 %v310, %v307
      %v315 = vunpack.c.l.b16 %v313
      %v316 = vunpack.c.h.b16 %v313
      %v317 = vpack.c.b16 %v315, %v315
      %v318 = vpack.c.b16 %v316, %v316
      %321 = vst [vmem:[%s175] sm:$0xf] %v317
      %322 = vst [vmem:[%s175 + $0x4] sm:$0xf] %v318
      %s323 = smul.u32 2, %s14
      %p324 = scmp.lt.s32.totalorder %s323, 3
      %s325 = scalar_select %p324, %s323, 3
      %s326 = smul.addr %s325, 4
      %s327 = scalar_lea.vmem %s3, %s326
      // Predicated region
      $region33: #{simple_encoder_forward.6} parent=31 // pred_check
        %p328 = pneg %p100
      $region34: #{simple_encoder_forward.6} parent=31 // pred_check_branch
        %330 = sbr.rel (%p328) target = $region36
      $region35: #{simple_encoder_forward.6} parent=31 // pred_region
        %s331 = smul.u32 2, %s14
      $region36: #{simple_encoder_forward.6} parent=31 // pred_fallthru
        _
    $region32: #{simple_encoder_forward.6} parent=5 // pred_fallthru
      _
    %p332 = scmp.le.s32.totalorder 2, %s9
    // Predicated region
    $region37: #{simple_encoder_forward.6} parent=5 // pred_check
      %p333 = pneg %p332
    $region38: #{simple_encoder_forward.6} parent=5 // pred_check_branch
      %335 = sbr.rel (%p333) target = $region40
    $region39: #{simple_encoder_forward.6} parent=5 // pred_region
      %s336 = ssub.s32 %s9, 2
      // Predicated region
      $region41: #{simple_encoder_forward.6} parent=39 // pred_check
        %p337 = pneg %p106
      $region42: #{simple_encoder_forward.6} parent=39 // pred_check_branch
        %339 = sbr.rel (%p337) target = $region44
      $region43: #{simple_encoder_forward.6} parent=39 // pred_region
        %s340 = smul.u32 2, %s15
        %p341 = scmp.lt.s32.totalorder %s340, 3
        %s342 = scalar_select %p341, %s340, 3
        %s343 = smul.addr %s342, 4
        %s344 = scalar_lea.vmem %s3, %s343
      $region44: #{simple_encoder_forward.6} parent=39 // pred_fallthru
        _
    $region40: #{simple_encoder_forward.6} parent=5 // pred_fallthru
      _
  $region6: #{simple_encoder_forward.6} parent=0 // loop_footer
    %s13 = sadd.s32 1, %s9
  $region7: #{simple_encoder_forward.6} parent=0 // loop_footer_branch
    %8 = sbr.rel target = $region3
  $region8: #{simple_encoder_forward.6} parent=0 // loop_exit
    _

// kernel: simple_encoder_forward.7
$region0: #{simple_encoder_forward.7}
  #allocation0 [shape = 'u32[]', space=smem, size = 0x4, offset = 0x4, fixed_abs, tag = 'smem constant byte address 0x4 - core index']
  #allocation1 [shape = 'u32[144,128]{1,0:T(1,128)}', space=vmem, size = 0x12000, scoped, tag = 'internal scratch']
  %s0 = inlined_call_operand.vmem [shape: f32[8,288], index: 0, kind: input, shape index: {}]
  %s1 = inlined_call_operand.vmem [shape: f32[288,64], index: 1, kind: input, shape index: {}]
  %s2 = inlined_call_operand.vmem [shape: f32[1,64], index: 2, kind: input, shape index: {}]
  %s3 = inlined_call_operand.vmem [shape: f32[256,64], index: 3, kind: input, shape index: {}]
  %s4 = inlined_call_operand.vmem [shape: f32[1,64], index: 4, kind: input, shape index: {}]
  %s5 = inlined_call_operand.vmem [shape: f32[64,64], index: 5, kind: input, shape index: {}]
  %s6 = inlined_call_operand.vmem [shape: f32[1,64], index: 6, kind: input, shape index: {}]
  %s7 = inlined_call_operand.vmem [shape: f32[64,64], index: 7, kind: input, shape index: {}]
  %s8 = inlined_call_operand.vmem [shape: f32[1,64], index: 8, kind: input, shape index: {}]
  %s9 = inlined_call_operand.vmem [shape: f32[8,64], index: 9, kind: output, shape index: {0}]
  %s10 = inlined_call_operand.hbm [shape: f32[2,64], index: 10, kind: output, shape index: {1}]
  %s11 = inlined_call_operand.hbm [shape: f32[2,64], index: 11, kind: output, shape index: {2}]
  %s12 = inlined_call_operand.vmem [shape: f32[2,64], index: 12, kind: output, shape index: {3}]
  %13 = xla_tuple %s9, %s10, %s11, %s12
  %s14 = sld [smem:[#allocation0]]
  $region70: #{simple_encoder_forward.7} parent=0
    _
  %s16 = ssub.s32 1, %s14
  %s17 = scalar_select 0, %s16, %s14
  $region1: #{simple_encoder_forward.7} parent=0
    #allocation2 [shape = 'u8[1024]{0}', space=vmem, size = 0x400, scoped, tag = 'output window, operand 1, single buffered']
    #allocation3 [shape = 's32[1]{0}', space=sflag, size = 0x4, scoped, tag = 'scoped memory for simple_encoder_forward.7']
    #allocation4 [shape = 'u8[1024]{0}', space=vmem, size = 0x400, scoped, tag = 'output window, operand 2, single buffered']
    #allocation5 [shape = 's32[1]{0}', space=sflag, size = 0x4, scoped, tag = 'scoped memory for simple_encoder_forward.7']
    %18 = vsyncpa [#allocation3], 0
    %19 = vsyncpa [#allocation5], 0
    // Predicated region
    $region2: #{simple_encoder_forward.7} parent=1 // pred_check
      _
    $region3: #{simple_encoder_forward.7} parent=1 // pred_check_branch
      %21 = sbr.rel (0) target = $region5
    $region4: #{simple_encoder_forward.7} parent=1 // pred_region
      _
    $region5: #{simple_encoder_forward.7} parent=1 // pred_fallthru
      _
    // Predicated region
    $region6: #{simple_encoder_forward.7} parent=1 // pred_check
      _
    $region7: #{simple_encoder_forward.7} parent=1 // pred_check_branch
      %23 = sbr.rel (0) target = $region9
    $region8: #{simple_encoder_forward.7} parent=1 // pred_region
      _
    $region9: #{simple_encoder_forward.7} parent=1 // pred_fallthru
      _
    // Predicated region
    $region10: #{simple_encoder_forward.7} parent=1 // pred_check
      _
    $region11: #{simple_encoder_forward.7} parent=1 // pred_check_branch
      %25 = sbr.rel (0) target = $region13
    $region12: #{simple_encoder_forward.7} parent=1 // pred_region
      _
    $region13: #{simple_encoder_forward.7} parent=1 // pred_fallthru
      _
    // Predicated region
    $region14: #{simple_encoder_forward.7} parent=1 // pred_check
      _
    $region15: #{simple_encoder_forward.7} parent=1 // pred_check_branch
      %27 = sbr.rel (0) target = $region17
    $region16: #{simple_encoder_forward.7} parent=1 // pred_region
      _
    $region17: #{simple_encoder_forward.7} parent=1 // pred_fallthru
      _
    // Predicated region
    $region18: #{simple_encoder_forward.7} parent=1 // pred_check
      _
    $region19: #{simple_encoder_forward.7} parent=1 // pred_check_branch
      %29 = sbr.rel (0) target = $region21
    $region20: #{simple_encoder_forward.7} parent=1 // pred_region
      _
    $region21: #{simple_encoder_forward.7} parent=1 // pred_fallthru
      _
    // Predicated region
    $region22: #{simple_encoder_forward.7} parent=1 // pred_check
      _
    $region23: #{simple_encoder_forward.7} parent=1 // pred_check_branch
      %31 = sbr.rel (0) target = $region25
    $region24: #{simple_encoder_forward.7} parent=1 // pred_region
      _
    $region25: #{simple_encoder_forward.7} parent=1 // pred_fallthru
      _
    // Predicated region
    $region26: #{simple_encoder_forward.7} parent=1 // pred_check
      _
    $region27: #{simple_encoder_forward.7} parent=1 // pred_check_branch
      %33 = sbr.rel (0) target = $region29
    $region28: #{simple_encoder_forward.7} parent=1 // pred_region
      _
    $region29: #{simple_encoder_forward.7} parent=1 // pred_fallthru
      _
    // Predicated region
    $region30: #{simple_encoder_forward.7} parent=1 // pred_check
      _
    $region31: #{simple_encoder_forward.7} parent=1 // pred_check_branch
      %35 = sbr.rel (0) target = $region33
    $region32: #{simple_encoder_forward.7} parent=1 // pred_region
      _
    $region33: #{simple_encoder_forward.7} parent=1 // pred_fallthru
      _
    // Predicated region
    $region34: #{simple_encoder_forward.7} parent=1 // pred_check
      _
    $region35: #{simple_encoder_forward.7} parent=1 // pred_check_branch
      %37 = sbr.rel (0) target = $region37
    $region36: #{simple_encoder_forward.7} parent=1 // pred_region
      _
    $region37: #{simple_encoder_forward.7} parent=1 // pred_fallthru
      _
    %v38 = vld [vmem:[%s0] sm:$0xff]
    %v39 = vld [vmem:[%s0 + $0x8] sm:$0xff]
    %v40 = vld [vmem:[%s0 + $0x10] sm:$0xff]
    %v41 = vld [vmem:[%s1] sm:$0xff]
    %v42 = vld [vmem:[%s1 + $0x8] sm:$0xff]
    %v43 = vld [vmem:[%s1 + $0x10] sm:$0xff]
    %v44 = vld [vmem:[%s1 + $0x18] sm:$0xff]
    %v45 = vld [vmem:[%s1 + $0x20] sm:$0xff]
    %v46 = vld [vmem:[%s1 + $0x28] sm:$0xff]
    %v47 = vld [vmem:[%s1 + $0x30] sm:$0xff]
    %v48 = vld [vmem:[%s1 + $0x38] sm:$0xff]
    %v49 = vld [vmem:[%s1 + $0x40] sm:$0xff]
    %v50 = vld [vmem:[%s1 + $0x48] sm:$0xff]
    %v51 = vld [vmem:[%s1 + $0x50] sm:$0xff]
    %v52 = vld [vmem:[%s1 + $0x58] sm:$0xff]
    %v53 = vld [vmem:[%s1 + $0x60] sm:$0xff]
    %v54 = vld [vmem:[%s1 + $0x68] sm:$0xff]
    %v55 = vld [vmem:[%s1 + $0x70] sm:$0xff]
    %v56 = vld [vmem:[%s1 + $0x78] sm:$0xff]
    %v57 = vld [vmem:[%s1 + $0x80] sm:$0xff]
    %v58 = vld [vmem:[%s1 + $0x88] sm:$0xff]
    %v59 = vld [vmem:[%s1 + $0x90] sm:$0xff]
    %v60 = vld [vmem:[%s1 + $0x98] sm:$0xff]
    %v61 = vld [vmem:[%s1 + $0xa0] sm:$0xff]
    %v62 = vld [vmem:[%s1 + $0xa8] sm:$0xff]
    %v63 = vld [vmem:[%s1 + $0xb0] sm:$0xff]
    %v64 = vld [vmem:[%s1 + $0xb8] sm:$0xff]
    %v65 = vld [vmem:[%s1 + $0xc0] sm:$0xff]
    %v66 = vld [vmem:[%s1 + $0xc8] sm:$0xff]
    %v67 = vld [vmem:[%s1 + $0xd0] sm:$0xff]
    %v68 = vld [vmem:[%s1 + $0xd8] sm:$0xff]
    %v69 = vld [vmem:[%s1 + $0xe0] sm:$0xff]
    %v70 = vld [vmem:[%s1 + $0xe8] sm:$0xff]
    %v71 = vld [vmem:[%s1 + $0xf0] sm:$0xff]
    %v72 = vld [vmem:[%s1 + $0xf8] sm:$0xff]
    %v73 = vld [vmem:[%s1 + $0x100] sm:$0xff]
    %v74 = vld [vmem:[%s1 + $0x108] sm:$0xff]
    %v75 = vld [vmem:[%s1 + $0x110] sm:$0xff]
    %v76 = vld [vmem:[%s1 + $0x118] sm:$0xff]
    %v77 = vld [vmem:[%s2] sm:$0x1]
    %v79 = vlaneseq
    %v80 = vshrl.u32 %v79, 7
    %v81 = vsub.s32 0, %v80
    %v82 = vrot.slane %v77, %v81
    %vm84 = vcmask 261120
    %v86 = vsel %vm84, %v40, 0
    %88 = vmatprep.subr.mxu0 0.0
    %89 = vmatpush1.msra.mxu0 %v56
    %90 = vmatprep.subr.mxu0 0.0
    %91 = vmatpush1.msra.mxu0 %v55
    %92 = vmatprep.subr.mxu0 0.0
    %93 = vmatpush1.msra.mxu0 %v54
    %94 = vmatprep.subr.mxu0 0.0
    %95 = vmatpush1.msra.mxu0 %v53
    %96 = vmatprep.subr.mxu0 0.0
    %97 = vmatpush1.msra.mxu0 %v52
    %98 = vmatprep.subr.mxu0 0.0
    %99 = vmatpush1.msra.mxu0 %v51
    %100 = vmatprep.subr.mxu0 0.0
    %101 = vmatpush1.msra.mxu0 %v50
    %102 = vmatprep.subr.mxu0 0.0
    %103 = vmatpush1.msra.mxu0 %v49
    %104 = vmatprep.subr.mxu0 0.0
    %105 = vmatpush1.msra.mxu0 %v48
    %106 = vmatprep.subr.mxu0 0.0
    %107 = vmatpush1.msra.mxu0 %v47
    %108 = vmatprep.subr.mxu0 0.0
    %109 = vmatpush1.msra.mxu0 %v46
    %110 = vmatprep.subr.mxu0 0.0
    %111 = vmatpush1.msra.mxu0 %v45
    %112 = vmatprep.subr.mxu0 0.0
    %113 = vmatpush1.msra.mxu0 %v44
    %114 = vmatprep.subr.mxu0 0.0
    %115 = vmatpush1.msra.mxu0 %v43
    %116 = vmatprep.subr.mxu0 0.0
    %117 = vmatpush1.msra.mxu0 %v42
    %118 = vmatprep.subr.mxu0 0.0
    %119 = vmatpush1.msra.mxu0 %v41
    %120 = vmatprep.subr.mxu0 0.0
    %121 = vmatpush2.msra.mxu0 %v72
    %122 = vmatprep.subr.mxu0 0.0
    %123 = vmatpush2.msra.mxu0 %v71
    %124 = vmatprep.subr.mxu0 0.0
    %125 = vmatpush2.msra.mxu0 %v70
    %126 = vmatprep.subr.mxu0 0.0
    %127 = vmatpush2.msra.mxu0 %v69
    %128 = vmatprep.subr.mxu0 0.0
    %129 = vmatpush2.msra.mxu0 %v68
    %130 = vmatprep.subr.mxu0 0.0
    %131 = vmatpush2.msra.mxu0 %v67
    %132 = vmatprep.subr.mxu0 0.0
    %133 = vmatpush2.msra.mxu0 %v66
    %134 = vmatprep.subr.mxu0 0.0
    %135 = vmatpush2.msra.mxu0 %v65
    %136 = vmatprep.subr.mxu0 0.0
    %137 = vmatpush2.msra.mxu0 %v64
    %138 = vmatprep.subr.mxu0 0.0
    %139 = vmatpush2.msra.mxu0 %v63
    %140 = vmatprep.subr.mxu0 0.0
    %141 = vmatpush2.msra.mxu0 %v62
    %142 = vmatprep.subr.mxu0 0.0
    %143 = vmatpush2.msra.mxu0 %v61
    %144 = vmatprep.subr.mxu0 0.0
    %145 = vmatpush2.msra.mxu0 %v60
    %146 = vmatprep.subr.mxu0 0.0
    %147 = vmatpush2.msra.mxu0 %v59
    %148 = vmatprep.subr.mxu0 0.0
    %149 = vmatpush2.msra.mxu0 %v58
    %150 = vmatprep.subr.mxu0 0.0
    %151 = vmatpush2.msra.mxu0 %v57
    %152 = vmatprep.mubr.f32.mxu0 %v39
    %153 = vmatmul.mubr.f32.gmra.mxu0 %v38
    %v154 = vpop.f32.mrf.mxu0
    %v155 = vadd.f32 %v82, %v154
    %v156 = vpop.f32.mrf.mxu0
    %157 = vdwg.mxu0
    %158 = vmatprep.subr.mxu0 0.0
    %159 = vmatpush1.msra.mxu0 0.0
    %160 = vmatprep.subr.mxu0 0.0
    %161 = vmatpush1.msra.mxu0 0.0
    %162 = vmatprep.subr.mxu0 0.0
    %163 = vmatpush1.msra.mxu0 0.0
    %164 = vmatprep.subr.mxu0 0.0
    %165 = vmatpush1.msra.mxu0 0.0
    %166 = vmatprep.subr.mxu0 0.0
    %167 = vmatpush1.msra.mxu0 0.0
    %168 = vmatprep.subr.mxu0 0.0
    %169 = vmatpush1.msra.mxu0 0.0
    %170 = vmatprep.subr.mxu0 0.0
    %171 = vmatpush1.msra.mxu0 0.0
    %172 = vmatprep.subr.mxu0 0.0
    %173 = vmatpush1.msra.mxu0 0.0
    %174 = vmatprep.subr.mxu0 0.0
    %175 = vmatpush1.msra.mxu0 0.0
    %176 = vmatprep.subr.mxu0 0.0
    %177 = vmatpush1.msra.mxu0 0.0
    %178 = vmatprep.subr.mxu0 0.0
    %179 = vmatpush1.msra.mxu0 0.0
    %180 = vmatprep.subr.mxu0 0.0
    %181 = vmatpush1.msra.mxu0 0.0
    %182 = vmatprep.subr.mxu0 0.0
    %183 = vmatpush1.msra.mxu0 %v76
    %184 = vmatprep.subr.mxu0 0.0
    %185 = vmatpush1.msra.mxu0 %v75
    %186 = vmatprep.subr.mxu0 0.0
    %187 = vmatpush1.msra.mxu0 %v74
    %188 = vmatprep.subr.mxu0 0.0
    %189 = vmatpush1.msra.mxu0 %v73
    %190 = vmatprep.subr.mxu0 0.0
    %191 = vmatpush2.msra.mxu0 0.0
    %192 = vmatprep.subr.mxu0 0.0
    %193 = vmatpush2.msra.mxu0 0.0
    %194 = vmatprep.subr.mxu0 0.0
    %195 = vmatpush2.msra.mxu0 0.0
    %196 = vmatprep.subr.mxu0 0.0
    %197 = vmatpush2.msra.mxu0 0.0
    %198 = vmatprep.subr.mxu0 0.0
    %199 = vmatpush2.msra.mxu0 0.0
    %200 = vmatprep.subr.mxu0 0.0
    %201 = vmatpush2.msra.mxu0 0.0
    %202 = vmatprep.subr.mxu0 0.0
    %203 = vmatpush2.msra.mxu0 0.0
    %204 = vmatprep.subr.mxu0 0.0
    %205 = vmatpush2.msra.mxu0 0.0
    %206 = vmatprep.subr.mxu0 0.0
    %207 = vmatpush2.msra.mxu0 0.0
    %208 = vmatprep.subr.mxu0 0.0
    %209 = vmatpush2.msra.mxu0 0.0
    %210 = vmatprep.subr.mxu0 0.0
    %211 = vmatpush2.msra.mxu0 0.0
    %212 = vmatprep.subr.mxu0 0.0
    %213 = vmatpush2.msra.mxu0 0.0
    %214 = vmatprep.subr.mxu0 0.0
    %215 = vmatpush2.msra.mxu0 0.0
    %216 = vmatprep.subr.mxu0 0.0
    %217 = vmatpush2.msra.mxu0 0.0
    %218 = vmatprep.subr.mxu0 0.0
    %219 = vmatpush2.msra.mxu0 0.0
    %220 = vmatprep.subr.mxu0 0.0
    %221 = vmatpush2.msra.mxu0 0.0
    %222 = vmatprep.mubr.f32.mxu0 0.0
    %223 = vmatmul.mubr.f32.gmra.mxu0 %v86
    %v224 = vpop.f32.mrf.mxu0
    %v225 = vadd.f32 %v155, %v224
    %v226 = vpop.f32.mrf.mxu0
    %227 = vdwg.mxu0
    %vm228 = vcmask 523264
    %229 = vst.msk [vmem:[%s9] sm:$0xff] %vm228, %v225
    %vm230 = vcmp.ge.f32.partialorder %v225, 0.0
    %v231 = vmul.f32 %v225, 0.2
    %v232 = vsel %vm230, %v225, %v231
    %v233 = vld [vmem:[%s3] sm:$0xff]
    %v234 = vld [vmem:[%s3 + $0x8] sm:$0xff]
    %v235 = vld [vmem:[%s3 + $0x10] sm:$0xff]
    %v236 = vld [vmem:[%s3 + $0x18] sm:$0xff]
    %v237 = vld [vmem:[%s3 + $0x20] sm:$0xff]
    %v238 = vld [vmem:[%s3 + $0x28] sm:$0xff]
    %v239 = vld [vmem:[%s3 + $0x30] sm:$0xff]
    %v240 = vld [vmem:[%s3 + $0x38] sm:$0xff]
    %v241 = vld [vmem:[%s3 + $0x40] sm:$0xff]
    %v242 = vld [vmem:[%s3 + $0x48] sm:$0xff]
    %v243 = vld [vmem:[%s3 + $0x50] sm:$0xff]
    %v244 = vld [vmem:[%s3 + $0x58] sm:$0xff]
    %v245 = vld [vmem:[%s3 + $0x60] sm:$0xff]
    %v246 = vld [vmem:[%s3 + $0x68] sm:$0xff]
    %v247 = vld [vmem:[%s3 + $0x70] sm:$0xff]
    %v248 = vld [vmem:[%s3 + $0x78] sm:$0xff]
    %v250 = vrot.slane %v232, 2
    %v251 = vsel %vm228, %v250, 0
    %253 = vmatprep.subr.mxu0 0.0
    %254 = vmatpush1.msra.mxu0 0.0
    %255 = vmatprep.subr.mxu0 0.0
    %256 = vmatpush1.msra.mxu0 0.0
    %257 = vmatprep.subr.mxu0 0.0
    %258 = vmatpush1.msra.mxu0 0.0
    %259 = vmatprep.subr.mxu0 0.0
    %260 = vmatpush1.msra.mxu0 0.0
    %261 = vmatprep.subr.mxu0 0.0
    %262 = vmatpush1.msra.mxu0 0.0
    %263 = vmatprep.subr.mxu0 0.0
    %264 = vmatpush1.msra.mxu0 0.0
    %265 = vmatprep.subr.mxu0 0.0
    %266 = vmatpush1.msra.mxu0 0.0
    %267 = vmatprep.subr.mxu0 0.0
    %268 = vmatpush1.msra.mxu0 0.0
    %269 = vmatprep.subr.mxu0 0.0
    %270 = vmatpush1.msra.mxu0 %v248
    %271 = vmatprep.subr.mxu0 0.0
    %272 = vmatpush1.msra.mxu0 %v247
    %273 = vmatprep.subr.mxu0 0.0
    %274 = vmatpush1.msra.mxu0 %v246
    %275 = vmatprep.subr.mxu0 0.0
    %276 = vmatpush1.msra.mxu0 %v245
    %277 = vmatprep.subr.mxu0 0.0
    %278 = vmatpush1.msra.mxu0 %v244
    %279 = vmatprep.subr.mxu0 0.0
    %280 = vmatpush1.msra.mxu0 %v243
    %281 = vmatprep.subr.mxu0 0.0
    %282 = vmatpush1.msra.mxu0 %v242
    %283 = vmatprep.subr.mxu0 0.0
    %284 = vmatpush1.msra.mxu0 %v241
    %285 = vmatprep.subr.mxu0 0.0
    %286 = vmatpush2.msra.mxu0 0.0
    %287 = vmatprep.subr.mxu0 0.0
    %288 = vmatpush2.msra.mxu0 0.0
    %289 = vmatprep.subr.mxu0 0.0
    %290 = vmatpush2.msra.mxu0 0.0
    %291 = vmatprep.subr.mxu0 0.0
    %292 = vmatpush2.msra.mxu0 0.0
    %293 = vmatprep.subr.mxu0 0.0
    %294 = vmatpush2.msra.mxu0 0.0
    %295 = vmatprep.subr.mxu0 0.0
    %296 = vmatpush2.msra.mxu0 0.0
    %297 = vmatprep.subr.mxu0 0.0
    %298 = vmatpush2.msra.mxu0 0.0
    %299 = vmatprep.subr.mxu0 0.0
    %300 = vmatpush2.msra.mxu0 0.0
    %301 = vmatprep.subr.mxu0 0.0
    %302 = vmatpush2.msra.mxu0 0.0
    %303 = vmatprep.subr.mxu0 0.0
    %304 = vmatpush2.msra.mxu0 0.0
    %305 = vmatprep.subr.mxu0 0.0
    %306 = vmatpush2.msra.mxu0 0.0
    %307 = vmatprep.subr.mxu0 0.0
    %308 = vmatpush2.msra.mxu0 0.0
    %309 = vmatprep.subr.mxu0 0.0
    %310 = vmatpush2.msra.mxu0 0.0
    %311 = vmatprep.subr.mxu0 0.0
    %312 = vmatpush2.msra.mxu0 0.0
    %313 = vmatprep.subr.mxu0 0.0
    %314 = vmatpush2.msra.mxu0 0.0
    %315 = vmatprep.subr.mxu0 0.0
    %316 = vmatpush2.msra.mxu0 0.0
    %317 = vmatprep.mubr.f32.mxu0 0.0
    %318 = vmatmul.mubr.f32.gmra.mxu0 %v251
    %v319 = vpop.f32.mrf.mxu0
    %v320 = vadd.f32 0.0, %v319
    %v321 = vpop.f32.mrf.mxu0
    %322 = vdwg.mxu0
    %v323 = vsel %vm228, %v232, 0
    %325 = vmatprep.subr.mxu0 0.0
    %326 = vmatpush1.msra.mxu0 0.0
    %327 = vmatprep.subr.mxu0 0.0
    %328 = vmatpush1.msra.mxu0 0.0
    %329 = vmatprep.subr.mxu0 0.0
    %330 = vmatpush1.msra.mxu0 0.0
    %331 = vmatprep.subr.mxu0 0.0
    %332 = vmatpush1.msra.mxu0 0.0
    %333 = vmatprep.subr.mxu0 0.0
    %334 = vmatpush1.msra.mxu0 0.0
    %335 = vmatprep.subr.mxu0 0.0
    %336 = vmatpush1.msra.mxu0 0.0
    %337 = vmatprep.subr.mxu0 0.0
    %338 = vmatpush1.msra.mxu0 0.0
    %339 = vmatprep.subr.mxu0 0.0
    %340 = vmatpush1.msra.mxu0 0.0
    %341 = vmatprep.subr.mxu0 0.0
    %342 = vmatpush1.msra.mxu0 %v240
    %343 = vmatprep.subr.mxu0 0.0
    %344 = vmatpush1.msra.mxu0 %v239
    %345 = vmatprep.subr.mxu0 0.0
    %346 = vmatpush1.msra.mxu0 %v238
    %347 = vmatprep.subr.mxu0 0.0
    %348 = vmatpush1.msra.mxu0 %v237
    %349 = vmatprep.subr.mxu0 0.0
    %350 = vmatpush1.msra.mxu0 %v236
    %351 = vmatprep.subr.mxu0 0.0
    %352 = vmatpush1.msra.mxu0 %v235
    %353 = vmatprep.subr.mxu0 0.0
    %354 = vmatpush1.msra.mxu0 %v234
    %355 = vmatprep.subr.mxu0 0.0
    %356 = vmatpush1.msra.mxu0 %v233
    %357 = vmatprep.subr.mxu0 0.0
    %358 = vmatpush2.msra.mxu0 0.0
    %359 = vmatprep.subr.mxu0 0.0
    %360 = vmatpush2.msra.mxu0 0.0
    %361 = vmatprep.subr.mxu0 0.0
    %362 = vmatpush2.msra.mxu0 0.0
    %363 = vmatprep.subr.mxu0 0.0
    %364 = vmatpush2.msra.mxu0 0.0
    %365 = vmatprep.subr.mxu0 0.0
    %366 = vmatpush2.msra.mxu0 0.0
    %367 = vmatprep.subr.mxu0 0.0
    %368 = vmatpush2.msra.mxu0 0.0
    %369 = vmatprep.subr.mxu0 0.0
    %370 = vmatpush2.msra.mxu0 0.0
    %371 = vmatprep.subr.mxu0 0.0
    %372 = vmatpush2.msra.mxu0 0.0
    %373 = vmatprep.subr.mxu0 0.0
    %374 = vmatpush2.msra.mxu0 0.0
    %375 = vmatprep.subr.mxu0 0.0
    %376 = vmatpush2.msra.mxu0 0.0
    %377 = vmatprep.subr.mxu0 0.0
    %378 = vmatpush2.msra.mxu0 0.0
    %379 = vmatprep.subr.mxu0 0.0
    %380 = vmatpush2.msra.mxu0 0.0
    %381 = vmatprep.subr.mxu0 0.0
    %382 = vmatpush2.msra.mxu0 0.0
    %383 = vmatprep.subr.mxu0 0.0
    %384 = vmatpush2.msra.mxu0 0.0
    %385 = vmatprep.subr.mxu0 0.0
    %386 = vmatpush2.msra.mxu0 0.0
    %387 = vmatprep.subr.mxu0 0.0
    %388 = vmatpush2.msra.mxu0 0.0
    %389 = vmatprep.mubr.f32.mxu0 0.0
    %390 = vmatmul.mubr.f32.gmra.mxu0 %v323
    %v391 = vpop.f32.mrf.mxu0
    %v392 = vadd.f32 %v320, %v391
    %v393 = vpop.f32.mrf.mxu0
    %394 = vdwg.mxu0
    %v395 = vld [vmem:[%s3 + $0x80] sm:$0xff]
    %v396 = vld [vmem:[%s3 + $0x88] sm:$0xff]
    %v397 = vld [vmem:[%s3 + $0x90] sm:$0xff]
    %v398 = vld [vmem:[%s3 + $0x98] sm:$0xff]
    %v399 = vld [vmem:[%s3 + $0xa0] sm:$0xff]
    %v400 = vld [vmem:[%s3 + $0xa8] sm:$0xff]
    %v401 = vld [vmem:[%s3 + $0xb0] sm:$0xff]
    %v402 = vld [vmem:[%s3 + $0xb8] sm:$0xff]
    %v403 = vrot.slane %v232, 4
    %v404 = vsel %vm228, %v403, 0
    %406 = vmatprep.subr.mxu0 0.0
    %407 = vmatpush1.msra.mxu0 0.0
    %408 = vmatprep.subr.mxu0 0.0
    %409 = vmatpush1.msra.mxu0 0.0
    %410 = vmatprep.subr.mxu0 0.0
    %411 = vmatpush1.msra.mxu0 0.0
    %412 = vmatprep.subr.mxu0 0.0
    %413 = vmatpush1.msra.mxu0 0.0
    %414 = vmatprep.subr.mxu0 0.0
    %415 = vmatpush1.msra.mxu0 0.0
    %416 = vmatprep.subr.mxu0 0.0
    %417 = vmatpush1.msra.mxu0 0.0
    %418 = vmatprep.subr.mxu0 0.0
    %419 = vmatpush1.msra.mxu0 0.0
    %420 = vmatprep.subr.mxu0 0.0
    %421 = vmatpush1.msra.mxu0 0.0
    %422 = vmatprep.subr.mxu0 0.0
    %423 = vmatpush1.msra.mxu0 %v402
    %424 = vmatprep.subr.mxu0 0.0
    %425 = vmatpush1.msra.mxu0 %v401
    %426 = vmatprep.subr.mxu0 0.0
    %427 = vmatpush1.msra.mxu0 %v400
    %428 = vmatprep.subr.mxu0 0.0
    %429 = vmatpush1.msra.mxu0 %v399
    %430 = vmatprep.subr.mxu0 0.0
    %431 = vmatpush1.msra.mxu0 %v398
    %432 = vmatprep.subr.mxu0 0.0
    %433 = vmatpush1.msra.mxu0 %v397
    %434 = vmatprep.subr.mxu0 0.0
    %435 = vmatpush1.msra.mxu0 %v396
    %436 = vmatprep.subr.mxu0 0.0
    %437 = vmatpush1.msra.mxu0 %v395
    %438 = vmatprep.subr.mxu0 0.0
    %439 = vmatpush2.msra.mxu0 0.0
    %440 = vmatprep.subr.mxu0 0.0
    %441 = vmatpush2.msra.mxu0 0.0
    %442 = vmatprep.subr.mxu0 0.0
    %443 = vmatpush2.msra.mxu0 0.0
    %444 = vmatprep.subr.mxu0 0.0
    %445 = vmatpush2.msra.mxu0 0.0
    %446 = vmatprep.subr.mxu0 0.0
    %447 = vmatpush2.msra.mxu0 0.0
    %448 = vmatprep.subr.mxu0 0.0
    %449 = vmatpush2.msra.mxu0 0.0
    %450 = vmatprep.subr.mxu0 0.0
    %451 = vmatpush2.msra.mxu0 0.0
    %452 = vmatprep.subr.mxu0 0.0
    %453 = vmatpush2.msra.mxu0 0.0
    %454 = vmatprep.subr.mxu0 0.0
    %455 = vmatpush2.msra.mxu0 0.0
    %456 = vmatprep.subr.mxu0 0.0
    %457 = vmatpush2.msra.mxu0 0.0
    %458 = vmatprep.subr.mxu0 0.0
    %459 = vmatpush2.msra.mxu0 0.0
    %460 = vmatprep.subr.mxu0 0.0
    %461 = vmatpush2.msra.mxu0 0.0
    %462 = vmatprep.subr.mxu0 0.0
    %463 = vmatpush2.msra.mxu0 0.0
    %464 = vmatprep.subr.mxu0 0.0
    %465 = vmatpush2.msra.mxu0 0.0
    %466 = vmatprep.subr.mxu0 0.0
    %467 = vmatpush2.msra.mxu0 0.0
    %468 = vmatprep.subr.mxu0 0.0
    %469 = vmatpush2.msra.mxu0 0.0
    %470 = vmatprep.mubr.f32.mxu0 0.0
    %471 = vmatmul.mubr.f32.gmra.mxu0 %v404
    %v472 = vpop.f32.mrf.mxu0
    %v473 = vadd.f32 0.0, %v472
    %v474 = vpop.f32.mrf.mxu0
    %475 = vdwg.mxu0
    %v476 = vadd.f32 %v392, %v473
    %v477 = vld [vmem:[%s3 + $0xc0] sm:$0xff]
    %v478 = vld [vmem:[%s3 + $0xc8] sm:$0xff]
    %v479 = vld [vmem:[%s3 + $0xd0] sm:$0xff]
    %v480 = vld [vmem:[%s3 + $0xd8] sm:$0xff]
    %v481 = vld [vmem:[%s3 + $0xe0] sm:$0xff]
    %v482 = vld [vmem:[%s3 + $0xe8] sm:$0xff]
    %v483 = vld [vmem:[%s3 + $0xf0] sm:$0xff]
    %v484 = vld [vmem:[%s3 + $0xf8] sm:$0xff]
    %v485 = vrot.slane %v232, 6
    %v486 = vsel %vm228, %v485, 0
    %488 = vmatprep.subr.mxu0 0.0
    %489 = vmatpush1.msra.mxu0 0.0
    %490 = vmatprep.subr.mxu0 0.0
    %491 = vmatpush1.msra.mxu0 0.0
    %492 = vmatprep.subr.mxu0 0.0
    %493 = vmatpush1.msra.mxu0 0.0
    %494 = vmatprep.subr.mxu0 0.0
    %495 = vmatpush1.msra.mxu0 0.0
    %496 = vmatprep.subr.mxu0 0.0
    %497 = vmatpush1.msra.mxu0 0.0
    %498 = vmatprep.subr.mxu0 0.0
    %499 = vmatpush1.msra.mxu0 0.0
    %500 = vmatprep.subr.mxu0 0.0
    %501 = vmatpush1.msra.mxu0 0.0
    %502 = vmatprep.subr.mxu0 0.0
    %503 = vmatpush1.msra.mxu0 0.0
    %504 = vmatprep.subr.mxu0 0.0
    %505 = vmatpush1.msra.mxu0 %v484
    %506 = vmatprep.subr.mxu0 0.0
    %507 = vmatpush1.msra.mxu0 %v483
    %508 = vmatprep.subr.mxu0 0.0
    %509 = vmatpush1.msra.mxu0 %v482
    %510 = vmatprep.subr.mxu0 0.0
    %511 = vmatpush1.msra.mxu0 %v481
    %512 = vmatprep.subr.mxu0 0.0
    %513 = vmatpush1.msra.mxu0 %v480
    %514 = vmatprep.subr.mxu0 0.0
    %515 = vmatpush1.msra.mxu0 %v479
    %516 = vmatprep.subr.mxu0 0.0
    %517 = vmatpush1.msra.mxu0 %v478
    %518 = vmatprep.subr.mxu0 0.0
    %519 = vmatpush1.msra.mxu0 %v477
    %520 = vmatprep.subr.mxu0 0.0
    %521 = vmatpush2.msra.mxu0 0.0
    %522 = vmatprep.subr.mxu0 0.0
    %523 = vmatpush2.msra.mxu0 0.0
    %524 = vmatprep.subr.mxu0 0.0
    %525 = vmatpush2.msra.mxu0 0.0
    %526 = vmatprep.subr.mxu0 0.0
    %527 = vmatpush2.msra.mxu0 0.0
    %528 = vmatprep.subr.mxu0 0.0
    %529 = vmatpush2.msra.mxu0 0.0
    %530 = vmatprep.subr.mxu0 0.0
    %531 = vmatpush2.msra.mxu0 0.0
    %532 = vmatprep.subr.mxu0 0.0
    %533 = vmatpush2.msra.mxu0 0.0
    %534 = vmatprep.subr.mxu0 0.0
    %535 = vmatpush2.msra.mxu0 0.0
    %536 = vmatprep.subr.mxu0 0.0
    %537 = vmatpush2.msra.mxu0 0.0
    %538 = vmatprep.subr.mxu0 0.0
    %539 = vmatpush2.msra.mxu0 0.0
    %540 = vmatprep.subr.mxu0 0.0
    %541 = vmatpush2.msra.mxu0 0.0
    %542 = vmatprep.subr.mxu0 0.0
    %543 = vmatpush2.msra.mxu0 0.0
    %544 = vmatprep.subr.mxu0 0.0
    %545 = vmatpush2.msra.mxu0 0.0
    %546 = vmatprep.subr.mxu0 0.0
    %547 = vmatpush2.msra.mxu0 0.0
    %548 = vmatprep.subr.mxu0 0.0
    %549 = vmatpush2.msra.mxu0 0.0
    %550 = vmatprep.subr.mxu0 0.0
    %551 = vmatpush2.msra.mxu0 0.0
    %552 = vmatprep.mubr.f32.mxu0 0.0
    %553 = vmatmul.mubr.f32.gmra.mxu0 %v486
    %v554 = vpop.f32.mrf.mxu0
    %v555 = vadd.f32 0.0, %v554
    %v556 = vpop.f32.mrf.mxu0
    %557 = vdwg.mxu0
    %v558 = vadd.f32 %v476, %v555
    %v559 = vld [vmem:[%s4] sm:$0x1]
    %v561 = vlaneseq
    %v562 = vshrl.u32 %v561, 7
    %v563 = vsub.s32 0, %v562
    %v564 = vrot.slane %v559, %v563
    %v566 = vadd.f32 %v558, %v564
    %vm567 = vcmask 517120
    %568 = vst.msk [vmem:[#allocation2] sm:$0x3] %vm567, %v566
    %vm569 = vcmp.ge.f32.partialorder %v566, 0.0
    %v570 = vmul.f32 %v566, 0.2
    %v571 = vsel %vm569, %v566, %v570
    %v572 = vld [vmem:[%s5] sm:$0xff]
    %v573 = vld [vmem:[%s5 + $0x8] sm:$0xff]
    %v574 = vld [vmem:[%s5 + $0x10] sm:$0xff]
    %v575 = vld [vmem:[%s5 + $0x18] sm:$0xff]
    %v576 = vld [vmem:[%s5 + $0x20] sm:$0xff]
    %v577 = vld [vmem:[%s5 + $0x28] sm:$0xff]
    %v578 = vld [vmem:[%s5 + $0x30] sm:$0xff]
    %v579 = vld [vmem:[%s5 + $0x38] sm:$0xff]
    %v580 = vld [vmem:[%s6] sm:$0x1]
    %v582 = vlaneseq
    %v583 = vshrl.u32 %v582, 7
    %v584 = vsub.s32 0, %v583
    %v585 = vrot.slane %v580, %v584
    %v588 = vsel %vm228, %v571, 0
    %590 = vmatprep.subr.mxu0 0.0
    %591 = vmatpush1.msra.mxu0 0.0
    %592 = vmatprep.subr.mxu0 0.0
    %593 = vmatpush1.msra.mxu0 0.0
    %594 = vmatprep.subr.mxu0 0.0
    %595 = vmatpush1.msra.mxu0 0.0
    %596 = vmatprep.subr.mxu0 0.0
    %597 = vmatpush1.msra.mxu0 0.0
    %598 = vmatprep.subr.mxu0 0.0
    %599 = vmatpush1.msra.mxu0 0.0
    %600 = vmatprep.subr.mxu0 0.0
    %601 = vmatpush1.msra.mxu0 0.0
    %602 = vmatprep.subr.mxu0 0.0
    %603 = vmatpush1.msra.mxu0 0.0
    %604 = vmatprep.subr.mxu0 0.0
    %605 = vmatpush1.msra.mxu0 0.0
    %606 = vmatprep.subr.mxu0 0.0
    %607 = vmatpush1.msra.mxu0 %v579
    %608 = vmatprep.subr.mxu0 0.0
    %609 = vmatpush1.msra.mxu0 %v578
    %610 = vmatprep.subr.mxu0 0.0
    %611 = vmatpush1.msra.mxu0 %v577
    %612 = vmatprep.subr.mxu0 0.0
    %613 = vmatpush1.msra.mxu0 %v576
    %614 = vmatprep.subr.mxu0 0.0
    %615 = vmatpush1.msra.mxu0 %v575
    %616 = vmatprep.subr.mxu0 0.0
    %617 = vmatpush1.msra.mxu0 %v574
    %618 = vmatprep.subr.mxu0 0.0
    %619 = vmatpush1.msra.mxu0 %v573
    %620 = vmatprep.subr.mxu0 0.0
    %621 = vmatpush1.msra.mxu0 %v572
    %622 = vmatprep.subr.mxu0 0.0
    %623 = vmatpush2.msra.mxu0 0.0
    %624 = vmatprep.subr.mxu0 0.0
    %625 = vmatpush2.msra.mxu0 0.0
    %626 = vmatprep.subr.mxu0 0.0
    %627 = vmatpush2.msra.mxu0 0.0
    %628 = vmatprep.subr.mxu0 0.0
    %629 = vmatpush2.msra.mxu0 0.0
    %630 = vmatprep.subr.mxu0 0.0
    %631 = vmatpush2.msra.mxu0 0.0
    %632 = vmatprep.subr.mxu0 0.0
    %633 = vmatpush2.msra.mxu0 0.0
    %634 = vmatprep.subr.mxu0 0.0
    %635 = vmatpush2.msra.mxu0 0.0
    %636 = vmatprep.subr.mxu0 0.0
    %637 = vmatpush2.msra.mxu0 0.0
    %638 = vmatprep.subr.mxu0 0.0
    %639 = vmatpush2.msra.mxu0 0.0
    %640 = vmatprep.subr.mxu0 0.0
    %641 = vmatpush2.msra.mxu0 0.0
    %642 = vmatprep.subr.mxu0 0.0
    %643 = vmatpush2.msra.mxu0 0.0
    %644 = vmatprep.subr.mxu0 0.0
    %645 = vmatpush2.msra.mxu0 0.0
    %646 = vmatprep.subr.mxu0 0.0
    %647 = vmatpush2.msra.mxu0 0.0
    %648 = vmatprep.subr.mxu0 0.0
    %649 = vmatpush2.msra.mxu0 0.0
    %650 = vmatprep.subr.mxu0 0.0
    %651 = vmatpush2.msra.mxu0 0.0
    %652 = vmatprep.subr.mxu0 0.0
    %653 = vmatpush2.msra.mxu0 0.0
    %654 = vmatprep.mubr.f32.mxu0 0.0
    %655 = vmatmul.mubr.f32.gmra.mxu0 %v588
    %v656 = vpop.f32.mrf.mxu0
    %v657 = vadd.f32 %v585, %v656
    %v658 = vpop.f32.mrf.mxu0
    %659 = vdwg.mxu0
    %660 = vst.msk [vmem:[#allocation4] sm:$0x3] %vm567, %v657
    %vm661 = vcmp.ge.f32.partialorder %v657, 0.0
    %v662 = vmul.f32 %v657, 0.2
    %v663 = vsel %vm661, %v657, %v662
    %v664 = vld [vmem:[%s7] sm:$0xff]
    %v665 = vld [vmem:[%s7 + $0x8] sm:$0xff]
    %v666 = vld [vmem:[%s7 + $0x10] sm:$0xff]
    %v667 = vld [vmem:[%s7 + $0x18] sm:$0xff]
    %v668 = vld [vmem:[%s7 + $0x20] sm:$0xff]
    %v669 = vld [vmem:[%s7 + $0x28] sm:$0xff]
    %v670 = vld [vmem:[%s7 + $0x30] sm:$0xff]
    %v671 = vld [vmem:[%s7 + $0x38] sm:$0xff]
    %v672 = vld [vmem:[%s8] sm:$0x1]
    %v674 = vlaneseq
    %v675 = vshrl.u32 %v674, 7
    %v676 = vsub.s32 0, %v675
    %v677 = vrot.slane %v672, %v676
    %v680 = vsel %vm228, %v663, 0
    %682 = vmatprep.subr.mxu0 0.0
    %683 = vmatpush1.msra.mxu0 0.0
    %684 = vmatprep.subr.mxu0 0.0
    %685 = vmatpush1.msra.mxu0 0.0
    %686 = vmatprep.subr.mxu0 0.0
    %687 = vmatpush1.msra.mxu0 0.0
    %688 = vmatprep.subr.mxu0 0.0
    %689 = vmatpush1.msra.mxu0 0.0
    %690 = vmatprep.subr.mxu0 0.0
    %691 = vmatpush1.msra.mxu0 0.0
    %692 = vmatprep.subr.mxu0 0.0
    %693 = vmatpush1.msra.mxu0 0.0
    %694 = vmatprep.subr.mxu0 0.0
    %695 = vmatpush1.msra.mxu0 0.0
    %696 = vmatprep.subr.mxu0 0.0
    %697 = vmatpush1.msra.mxu0 0.0
    %698 = vmatprep.subr.mxu0 0.0
    %699 = vmatpush1.msra.mxu0 %v671
    %700 = vmatprep.subr.mxu0 0.0
    %701 = vmatpush1.msra.mxu0 %v670
    %702 = vmatprep.subr.mxu0 0.0
    %703 = vmatpush1.msra.mxu0 %v669
    %704 = vmatprep.subr.mxu0 0.0
    %705 = vmatpush1.msra.mxu0 %v668
    %706 = vmatprep.subr.mxu0 0.0
    %707 = vmatpush1.msra.mxu0 %v667
    %708 = vmatprep.subr.mxu0 0.0
    %709 = vmatpush1.msra.mxu0 %v666
    %710 = vmatprep.subr.mxu0 0.0
    %711 = vmatpush1.msra.mxu0 %v665
    %712 = vmatprep.subr.mxu0 0.0
    %713 = vmatpush1.msra.mxu0 %v664
    %714 = vmatprep.subr.mxu0 0.0
    %715 = vmatpush2.msra.mxu0 0.0
    %716 = vmatprep.subr.mxu0 0.0
    %717 = vmatpush2.msra.mxu0 0.0
    %718 = vmatprep.subr.mxu0 0.0
    %719 = vmatpush2.msra.mxu0 0.0
    %720 = vmatprep.subr.mxu0 0.0
    %721 = vmatpush2.msra.mxu0 0.0
    %722 = vmatprep.subr.mxu0 0.0
    %723 = vmatpush2.msra.mxu0 0.0
    %724 = vmatprep.subr.mxu0 0.0
    %725 = vmatpush2.msra.mxu0 0.0
    %726 = vmatprep.subr.mxu0 0.0
    %727 = vmatpush2.msra.mxu0 0.0
    %728 = vmatprep.subr.mxu0 0.0
    %729 = vmatpush2.msra.mxu0 0.0
    %730 = vmatprep.subr.mxu0 0.0
    %731 = vmatpush2.msra.mxu0 0.0
    %732 = vmatprep.subr.mxu0 0.0
    %733 = vmatpush2.msra.mxu0 0.0
    %734 = vmatprep.subr.mxu0 0.0
    %735 = vmatpush2.msra.mxu0 0.0
    %736 = vmatprep.subr.mxu0 0.0
    %737 = vmatpush2.msra.mxu0 0.0
    %738 = vmatprep.subr.mxu0 0.0
    %739 = vmatpush2.msra.mxu0 0.0
    %740 = vmatprep.subr.mxu0 0.0
    %741 = vmatpush2.msra.mxu0 0.0
    %742 = vmatprep.subr.mxu0 0.0
    %743 = vmatpush2.msra.mxu0 0.0
    %744 = vmatprep.subr.mxu0 0.0
    %745 = vmatpush2.msra.mxu0 0.0
    %746 = vmatprep.mubr.f32.mxu0 0.0
    %747 = vmatmul.mubr.f32.gmra.mxu0 %v680
    %v748 = vpop.f32.mrf.mxu0
    %v749 = vadd.f32 %v677, %v748
    %v750 = vpop.f32.mrf.mxu0
    %751 = vdwg.mxu0
    %752 = vst.msk [vmem:[%s12] sm:$0x3] %vm567, %v749
    // Predicated region
    $region38: #{simple_encoder_forward.7} parent=1 // pred_check
      _
    $region39: #{simple_encoder_forward.7} parent=1 // pred_check_branch
      %754 = sbr.rel (0) target = $region41
    $region40: #{simple_encoder_forward.7} parent=1 // pred_region
      _
    $region41: #{simple_encoder_forward.7} parent=1 // pred_fallthru
      _
    // Predicated region
    $region42: #{simple_encoder_forward.7} parent=1 // pred_check
      _
    $region43: #{simple_encoder_forward.7} parent=1 // pred_check_branch
      %756 = sbr.rel (0) target = $region45
    $region44: #{simple_encoder_forward.7} parent=1 // pred_region
      %s758 = ssub.s32 32, 32
      %759 = vsyncadd [#allocation3], %s758
      %s761 = sshll.u32 [#allocation2], 4
      %s762 = int_to_ptr.vmem [resolvable:$true] %s761
      %764 = dma.vmem_to_hbm [thread:$0]  %s762, 32, %s10, [#allocation3]
    $region45: #{simple_encoder_forward.7} parent=1 // pred_fallthru
      _
    // Predicated region
    $region46: #{simple_encoder_forward.7} parent=1 // pred_check
      _
    $region47: #{simple_encoder_forward.7} parent=1 // pred_check_branch
      %766 = sbr.rel (0) target = $region49
    $region48: #{simple_encoder_forward.7} parent=1 // pred_region
      %s768 = ssub.s32 32, 32
      %769 = vsyncadd [#allocation5], %s768
      %s771 = sshll.u32 [#allocation4], 4
      %s772 = int_to_ptr.vmem [resolvable:$true] %s771
      %774 = dma.vmem_to_hbm [thread:$0]  %s772, 32, %s11, [#allocation5]
    $region49: #{simple_encoder_forward.7} parent=1 // pred_fallthru
      _
    // Predicated region
    $region50: #{simple_encoder_forward.7} parent=1 // pred_check
      _
    $region51: #{simple_encoder_forward.7} parent=1 // pred_check_branch
      %776 = sbr.rel (0) target = $region53
    $region52: #{simple_encoder_forward.7} parent=1 // pred_region
      _
    $region53: #{simple_encoder_forward.7} parent=1 // pred_fallthru
      _
    // Predicated region
    $region54: #{simple_encoder_forward.7} parent=1 // pred_check
      _
    $region55: #{simple_encoder_forward.7} parent=1 // pred_check_branch
      %778 = sbr.rel (0) target = $region57
    $region56: #{simple_encoder_forward.7} parent=1 // pred_region
      _
    $region57: #{simple_encoder_forward.7} parent=1 // pred_fallthru
      _
    // Predicated region
    $region58: #{simple_encoder_forward.7} parent=1 // pred_check
      _
    $region59: #{simple_encoder_forward.7} parent=1 // pred_check_branch
      %780 = sbr.rel (0) target = $region61
    $region60: #{simple_encoder_forward.7} parent=1 // pred_region
      %781 = dma.done [#allocation3], 32
    $region61: #{simple_encoder_forward.7} parent=1 // pred_fallthru
      _
    // Predicated region
    $region62: #{simple_encoder_forward.7} parent=1 // pred_check
      _
    $region63: #{simple_encoder_forward.7} parent=1 // pred_check_branch
      %783 = sbr.rel (0) target = $region65
    $region64: #{simple_encoder_forward.7} parent=1 // pred_region
      %784 = dma.done [#allocation5], 32
    $region65: #{simple_encoder_forward.7} parent=1 // pred_fallthru
      _
    // Predicated region
    $region66: #{simple_encoder_forward.7} parent=1 // pred_check
      _
    $region67: #{simple_encoder_forward.7} parent=1 // pred_check_branch
      %786 = sbr.rel (0) target = $region69
    $region68: #{simple_encoder_forward.7} parent=1 // pred_region
      _
    $region69: #{simple_encoder_forward.7} parent=1 // pred_fallthru
      _
    %787 = vsyncpa [#allocation3], 1
    %788 = vsyncpa [#allocation5], 1

</llo_original>
